<compile_context>
chip_gen: v5e
topology: v5e:2x2
jax: 0.10.0
libtpu: 0.0.40
codegen_flags: <defaults>
</compile_context>

<pallas_src>
import functools

import jax
import jax.numpy as jnp
import numpy as np
from jax.experimental import pallas as pl
from jax.experimental.pallas import tpu as pltpu

EPS = 1e-5  # nn.InstanceNorm2d default eps


def make_conv_block_kernel(H, W, C_out):
    Wp = W + 2          # padded row width; kernel computes Wp cols/row (2 are scratch)
    M = H * Wp          # rows of the per-sample compute slab
    inv_n = 1.0 / float(H * W)

    def kernel(x_ref, w_ref, mask_ref, o_ref, acc_ref):
        # x_ref   : (P, C_in)  bf16, P = (H+3)*Wp zero-padded row-flattened sample
        # w_ref   : (9, C_in, C_out) bf16, tap-major conv weights (C_out on lanes)
        # mask_ref: (M, 1) f32, 1.0 on valid columns, 0.0 on the 2 scratch cols per row
        # o_ref   : (M, C_out) f32 output slab for this sample
        # acc_ref : (M, C_out) f32 VMEM accumulator scratch

        # 3x3 conv (pad=1) == 9 row-shifted (M, C_in) @ (C_in, C_out) MXU matmuls.
        acc_ref[...] = jnp.zeros_like(acc_ref)
        for t in range(9):
            kh, kw = divmod(t, 3)
            start = kh * Wp + kw                       # pure sublane offset, static
            acc_ref[...] += jnp.dot(
                x_ref[start:start + M, :],             # (M, C_in) bf16
                w_ref[t],                              # (C_in, C_out) bf16
                preferred_element_type=jnp.float32)

        acc = acc_ref[...]                             # (M, C_out) f32
        mask = mask_ref[...]                           # (M, 1)

        # InstanceNorm2d (affine=False): per-channel mean / biased var over the H*W
        # valid positions only (scratch columns masked out of the statistics).
        mean = jnp.sum(acc * mask, axis=0, keepdims=True) * inv_n        # (1, C_out)
        centered = acc - mean
        var = jnp.sum(centered * centered * mask, axis=0, keepdims=True) * inv_n
        y = centered * jax.lax.rsqrt(var + EPS)

        # ReLU; Dropout2d is identity in inference mode.
        o_ref[...] = jnp.maximum(y, 0.0).astype(o_ref.dtype)

    return kernel


@jax.jit
def conv_block_forward(x, weight, bias=None):
    """ConvBlock forward.  x: (N, C_in, H, W) f32, weight: (C_out, C_in, 3, 3),
    bias: (C_out,) -- unused: it is exactly cancelled by the affine-less InstanceNorm."""
    del bias
    N, C_in, H, W = x.shape
    C_out = weight.shape[0]
    Wp = W + 2
    P = (H + 3) * Wp        # 1 top + H data + 2 bottom padded rows, each Wp wide
    M = H * Wp

    # Wrapper-side layout plumbing (fuses into one XLA transpose+pad, no extra round trip):
    # NCHW -> NHWC (channels on lanes), zero-pad H by (1,2) / W by (1,1), flatten rows, bf16.
    x_nhwc = jnp.transpose(x, (0, 2, 3, 1))
    x_pad = jnp.pad(x_nhwc, ((0, 0), (1, 2), (1, 1), (0, 0)))
    x_flat = x_pad.reshape(N, P, C_in).astype(jnp.bfloat16)

    # OIHW -> tap-major (9, C_in, C_out): each tap a contiguous (C_in, C_out) matmul RHS.
    w_taps = jnp.transpose(weight, (2, 3, 1, 0)).reshape(9, C_in, C_out).astype(jnp.bfloat16)

    # Static validity mask over the M rows (last 2 columns of every Wp-wide row-group are
    # scratch columns produced by the row-flattened shift trick).
    valid = jnp.asarray((np.arange(M) % Wp < W).astype(np.float32).reshape(M, 1))

    out_flat = pl.pallas_call(
        make_conv_block_kernel(H, W, C_out),
        out_shape=jax.ShapeDtypeStruct((N, M, C_out), jnp.float32),
        grid_spec=pltpu.PrefetchScalarGridSpec(
            num_scalar_prefetch=0,
            grid=(N,),                                   # one sample per grid step
            in_specs=[
                pl.BlockSpec((None, P, C_in), lambda n: (n, 0, 0)),
                pl.BlockSpec((9, C_in, C_out), lambda n: (0, 0, 0)),
                pl.BlockSpec((M, 1), lambda n: (0, 0)),
            ],
            out_specs=pl.BlockSpec((None, M, C_out), lambda n: (n, 0, 0)),
            scratch_shapes=[pltpu.VMEM((M, C_out), jnp.float32)],
        ),
        compiler_params=pltpu.CompilerParams(
            dimension_semantics=("parallel",)),
    )(x_flat, w_taps, valid)

    # Drop scratch columns and go back to NCHW (wrapper-side, outside the hot loop).
    out = out_flat.reshape(N, H, Wp, C_out)[:, :, :W, :]
    return jnp.transpose(out, (0, 3, 1, 2))


def conv_block_reference(x, weight, bias):
    """Pure-JAX reference (bf16 conv inputs / f32 accumulate, matching the kernel)."""
    y = jax.lax.conv_general_dilated(
        x.astype(jnp.bfloat16), weight.astype(jnp.bfloat16),
        window_strides=(1, 1), padding=((1, 1), (1, 1)),
        dimension_numbers=("NCHW", "OIHW", "NCHW"),
        preferred_element_type=jnp.float32)
    y = y + bias.reshape(1, -1, 1, 1)
    mean = jnp.mean(y, axis=(2, 3), keepdims=True)
    var = jnp.mean((y - mean) ** 2, axis=(2, 3), keepdims=True)
    y = (y - mean) * jax.lax.rsqrt(var + EPS)
    return jnp.maximum(y, 0.0)


if __name__ == "__main__":
    key = jax.random.PRNGKey(0)
    k_x, k_w, k_b = jax.random.split(key, 3)

    N, C_in, C_out, H, W = 2, 4, 8, 16, 16
    drop_prob = 0.0  # module hyperparameter; dropout is identity here

    x = jax.random.normal(k_x, (N, C_in, H, W), dtype=jnp.float32)
    fan_in = C_in * 3 * 3
    weight = jax.random.normal(k_w, (C_out, C_in, 3, 3), dtype=jnp.float32) / jnp.sqrt(fan_in)
    bias = jax.random.normal(k_b, (C_out,), dtype=jnp.float32) * 0.1

    out = jax.block_until_ready(conv_block_forward(x, weight, bias))
    ref = conv_block_reference(x, weight, bias)

    assert out.shape == (N, C_out, H, W)
    assert jnp.allclose(out, ref, atol=1e-3, rtol=1e-3), "mismatch vs JAX reference"

    print("KERNEL_OK")
</pallas_src>

<mosaic_0001>
module attributes {stable_mosaic.version = 11 : i64} {
  func.func @kernel(%arg0: i32, %arg1: memref<1x342x4xbf16, #tpu.memory_space<vmem>>, %arg2: memref<9x4x8xbf16, #tpu.memory_space<vmem>>, %arg3: memref<288x1xf32, #tpu.memory_space<vmem>>, %arg4: memref<1x288x8xf32, #tpu.memory_space<vmem>>, %arg5: memref<288x8xf32, #tpu.memory_space<vmem>>) attributes {dimension_semantics = [#tpu.dimension_semantics<parallel>], iteration_bounds = array<i64: 2>, scalar_prefetch = 0 : i64, scratch_operands = 1 : i64, tpu.core_type = #tpu.core_type<tc>, window_params = [{transform_indices = @transform_0, window_bounds = array<i64: 1, 342, 4>}, {pipeline_mode = #tpu.pipeline_mode<synchronous>, transform_indices = @transform_1, window_bounds = array<i64: 9, 4, 8>}, {pipeline_mode = #tpu.pipeline_mode<synchronous>, transform_indices = @transform_2, window_bounds = array<i64: 288, 1>}, {transform_indices = @transform_3, window_bounds = array<i64: 1, 288, 8>}]} {
    %cst = arith.constant 0.000000e+00 : f32
    %0 = vector.broadcast %cst : f32 to vector<288x8xf32>
    %c0 = arith.constant 0 : index
    %c0_0 = arith.constant 0 : index
    %1 = vector.load %arg5[%c0, %c0_0] : memref<288x8xf32, #tpu.memory_space<vmem>>, vector<288x8xf32>
    tpu.vector_store %arg5[%c0, %c0_0], %0 {strides = array<i32>} : memref<288x8xf32, #tpu.memory_space<vmem>>, vector<288x8xf32>,
    %c0_1 = arith.constant 0 : index
    %c0_2 = arith.constant 0 : index
    %2 = vector.load %arg5[%c0_1, %c0_2] : memref<288x8xf32, #tpu.memory_space<vmem>>, vector<288x8xf32>
    %c0_3 = arith.constant 0 : index
    %c0_4 = arith.constant 0 : index
    %c0_5 = arith.constant 0 : index
    %3 = vector.load %arg1[%c0_3, %c0_4, %c0_5] : memref<1x342x4xbf16, #tpu.memory_space<vmem>>, vector<1x288x4xbf16>
    %4 = vector.shape_cast %3 : vector<1x288x4xbf16> to vector<288x4xbf16>
    %c0_6 = arith.constant 0 : index
    %c0_7 = arith.constant 0 : index
    %c0_8 = arith.constant 0 : index
    %5 = vector.load %arg2[%c0_6, %c0_7, %c0_8] : memref<9x4x8xbf16, #tpu.memory_space<vmem>>, vector<1x4x8xbf16>
    %6 = vector.shape_cast %5 : vector<1x4x8xbf16> to vector<4x8xbf16>
    %cst_9 = arith.constant dense<0.000000e+00> : vector<288x8xf32>
    %7 = tpu.matmul %4, %6, %cst_9 {dimension_numbers = #tpu.dot_dimension_numbers<[1], [0], [0], [1], [0, 0, 1, 1], [], []>} : vector<288x4xbf16>, vector<4x8xbf16>, vector<288x8xf32> -> vector<288x8xf32>
    %8 = arith.addf %2, %7 : vector<288x8xf32>
    %c0_10 = arith.constant 0 : index
    %c0_11 = arith.constant 0 : index
    %9 = vector.load %arg5[%c0_10, %c0_11] : memref<288x8xf32, #tpu.memory_space<vmem>>, vector<288x8xf32>
    tpu.vector_store %arg5[%c0_10, %c0_11], %8 {strides = array<i32>} : memref<288x8xf32, #tpu.memory_space<vmem>>, vector<288x8xf32>,
    %c0_12 = arith.constant 0 : index
    %c0_13 = arith.constant 0 : index
    %10 = vector.load %arg5[%c0_12, %c0_13] : memref<288x8xf32, #tpu.memory_space<vmem>>, vector<288x8xf32>
    %c0_14 = arith.constant 0 : index
    %c1 = arith.constant 1 : index
    %c0_15 = arith.constant 0 : index
    %11 = vector.load %arg1[%c0_14, %c1, %c0_15] : memref<1x342x4xbf16, #tpu.memory_space<vmem>>, vector<1x288x4xbf16>
    %12 = vector.shape_cast %11 : vector<1x288x4xbf16> to vector<288x4xbf16>
    %c1_16 = arith.constant 1 : index
    %c0_17 = arith.constant 0 : index
    %c0_18 = arith.constant 0 : index
    %13 = vector.load %arg2[%c1_16, %c0_17, %c0_18] : memref<9x4x8xbf16, #tpu.memory_space<vmem>>, vector<1x4x8xbf16>
    %14 = vector.shape_cast %13 : vector<1x4x8xbf16> to vector<4x8xbf16>
    %cst_19 = arith.constant dense<0.000000e+00> : vector<288x8xf32>
    %15 = tpu.matmul %12, %14, %cst_19 {dimension_numbers = #tpu.dot_dimension_numbers<[1], [0], [0], [1], [0, 0, 1, 1], [], []>} : vector<288x4xbf16>, vector<4x8xbf16>, vector<288x8xf32> -> vector<288x8xf32>
    %16 = arith.addf %10, %15 : vector<288x8xf32>
    %c0_20 = arith.constant 0 : index
    %c0_21 = arith.constant 0 : index
    %17 = vector.load %arg5[%c0_20, %c0_21] : memref<288x8xf32, #tpu.memory_space<vmem>>, vector<288x8xf32>
    tpu.vector_store %arg5[%c0_20, %c0_21], %16 {strides = array<i32>} : memref<288x8xf32, #tpu.memory_space<vmem>>, vector<288x8xf32>,
    %c0_22 = arith.constant 0 : index
    %c0_23 = arith.constant 0 : index
    %18 = vector.load %arg5[%c0_22, %c0_23] : memref<288x8xf32, #tpu.memory_space<vmem>>, vector<288x8xf32>
    %c0_24 = arith.constant 0 : index
    %c2 = arith.constant 2 : index
    %c0_25 = arith.constant 0 : index
    %19 = vector.load %arg1[%c0_24, %c2, %c0_25] : memref<1x342x4xbf16, #tpu.memory_space<vmem>>, vector<1x288x4xbf16>
    %20 = vector.shape_cast %19 : vector<1x288x4xbf16> to vector<288x4xbf16>
    %c2_26 = arith.constant 2 : index
    %c0_27 = arith.constant 0 : index
    %c0_28 = arith.constant 0 : index
    %21 = vector.load %arg2[%c2_26, %c0_27, %c0_28] : memref<9x4x8xbf16, #tpu.memory_space<vmem>>, vector<1x4x8xbf16>
    %22 = vector.shape_cast %21 : vector<1x4x8xbf16> to vector<4x8xbf16>
    %cst_29 = arith.constant dense<0.000000e+00> : vector<288x8xf32>
    %23 = tpu.matmul %20, %22, %cst_29 {dimension_numbers = #tpu.dot_dimension_numbers<[1], [0], [0], [1], [0, 0, 1, 1], [], []>} : vector<288x4xbf16>, vector<4x8xbf16>, vector<288x8xf32> -> vector<288x8xf32>
    %24 = arith.addf %18, %23 : vector<288x8xf32>
    %c0_30 = arith.constant 0 : index
    %c0_31 = arith.constant 0 : index
    %25 = vector.load %arg5[%c0_30, %c0_31] : memref<288x8xf32, #tpu.memory_space<vmem>>, vector<288x8xf32>
    tpu.vector_store %arg5[%c0_30, %c0_31], %24 {strides = array<i32>} : memref<288x8xf32, #tpu.memory_space<vmem>>, vector<288x8xf32>,
    %c0_32 = arith.constant 0 : index
    %c0_33 = arith.constant 0 : index
    %26 = vector.load %arg5[%c0_32, %c0_33] : memref<288x8xf32, #tpu.memory_space<vmem>>, vector<288x8xf32>
    %c0_34 = arith.constant 0 : index
    %c18 = arith.constant 18 : index
    %c0_35 = arith.constant 0 : index
    %27 = vector.load %arg1[%c0_34, %c18, %c0_35] : memref<1x342x4xbf16, #tpu.memory_space<vmem>>, vector<1x288x4xbf16>
    %28 = vector.shape_cast %27 : vector<1x288x4xbf16> to vector<288x4xbf16>
    %c3 = arith.constant 3 : index
    %c0_36 = arith.constant 0 : index
    %c0_37 = arith.constant 0 : index
    %29 = vector.load %arg2[%c3, %c0_36, %c0_37] : memref<9x4x8xbf16, #tpu.memory_space<vmem>>, vector<1x4x8xbf16>
    %30 = vector.shape_cast %29 : vector<1x4x8xbf16> to vector<4x8xbf16>
    %cst_38 = arith.constant dense<0.000000e+00> : vector<288x8xf32>
    %31 = tpu.matmul %28, %30, %cst_38 {dimension_numbers = #tpu.dot_dimension_numbers<[1], [0], [0], [1], [0, 0, 1, 1], [], []>} : vector<288x4xbf16>, vector<4x8xbf16>, vector<288x8xf32> -> vector<288x8xf32>
    %32 = arith.addf %26, %31 : vector<288x8xf32>
    %c0_39 = arith.constant 0 : index
    %c0_40 = arith.constant 0 : index
    %33 = vector.load %arg5[%c0_39, %c0_40] : memref<288x8xf32, #tpu.memory_space<vmem>>, vector<288x8xf32>
    tpu.vector_store %arg5[%c0_39, %c0_40], %32 {strides = array<i32>} : memref<288x8xf32, #tpu.memory_space<vmem>>, vector<288x8xf32>,
    %c0_41 = arith.constant 0 : index
    %c0_42 = arith.constant 0 : index
    %34 = vector.load %arg5[%c0_41, %c0_42] : memref<288x8xf32, #tpu.memory_space<vmem>>, vector<288x8xf32>
    %c0_43 = arith.constant 0 : index
    %c19 = arith.constant 19 : index
    %c0_44 = arith.constant 0 : index
    %35 = vector.load %arg1[%c0_43, %c19, %c0_44] : memref<1x342x4xbf16, #tpu.memory_space<vmem>>, vector<1x288x4xbf16>
    %36 = vector.shape_cast %35 : vector<1x288x4xbf16> to vector<288x4xbf16>
    %c4 = arith.constant 4 : index
    %c0_45 = arith.constant 0 : index
    %c0_46 = arith.constant 0 : index
    %37 = vector.load %arg2[%c4, %c0_45, %c0_46] : memref<9x4x8xbf16, #tpu.memory_space<vmem>>, vector<1x4x8xbf16>
    %38 = vector.shape_cast %37 : vector<1x4x8xbf16> to vector<4x8xbf16>
    %cst_47 = arith.constant dense<0.000000e+00> : vector<288x8xf32>
    %39 = tpu.matmul %36, %38, %cst_47 {dimension_numbers = #tpu.dot_dimension_numbers<[1], [0], [0], [1], [0, 0, 1, 1], [], []>} : vector<288x4xbf16>, vector<4x8xbf16>, vector<288x8xf32> -> vector<288x8xf32>
    %40 = arith.addf %34, %39 : vector<288x8xf32>
    %c0_48 = arith.constant 0 : index
    %c0_49 = arith.constant 0 : index
    %41 = vector.load %arg5[%c0_48, %c0_49] : memref<288x8xf32, #tpu.memory_space<vmem>>, vector<288x8xf32>
    tpu.vector_store %arg5[%c0_48, %c0_49], %40 {strides = array<i32>} : memref<288x8xf32, #tpu.memory_space<vmem>>, vector<288x8xf32>,
    %c0_50 = arith.constant 0 : index
    %c0_51 = arith.constant 0 : index
    %42 = vector.load %arg5[%c0_50, %c0_51] : memref<288x8xf32, #tpu.memory_space<vmem>>, vector<288x8xf32>
    %c0_52 = arith.constant 0 : index
    %c20 = arith.constant 20 : index
    %c0_53 = arith.constant 0 : index
    %43 = vector.load %arg1[%c0_52, %c20, %c0_53] : memref<1x342x4xbf16, #tpu.memory_space<vmem>>, vector<1x288x4xbf16>
    %44 = vector.shape_cast %43 : vector<1x288x4xbf16> to vector<288x4xbf16>
    %c5 = arith.constant 5 : index
    %c0_54 = arith.constant 0 : index
    %c0_55 = arith.constant 0 : index
    %45 = vector.load %arg2[%c5, %c0_54, %c0_55] : memref<9x4x8xbf16, #tpu.memory_space<vmem>>, vector<1x4x8xbf16>
    %46 = vector.shape_cast %45 : vector<1x4x8xbf16> to vector<4x8xbf16>
    %cst_56 = arith.constant dense<0.000000e+00> : vector<288x8xf32>
    %47 = tpu.matmul %44, %46, %cst_56 {dimension_numbers = #tpu.dot_dimension_numbers<[1], [0], [0], [1], [0, 0, 1, 1], [], []>} : vector<288x4xbf16>, vector<4x8xbf16>, vector<288x8xf32> -> vector<288x8xf32>
    %48 = arith.addf %42, %47 : vector<288x8xf32>
    %c0_57 = arith.constant 0 : index
    %c0_58 = arith.constant 0 : index
    %49 = vector.load %arg5[%c0_57, %c0_58] : memref<288x8xf32, #tpu.memory_space<vmem>>, vector<288x8xf32>
    tpu.vector_store %arg5[%c0_57, %c0_58], %48 {strides = array<i32>} : memref<288x8xf32, #tpu.memory_space<vmem>>, vector<288x8xf32>,
    %c0_59 = arith.constant 0 : index
    %c0_60 = arith.constant 0 : index
    %50 = vector.load %arg5[%c0_59, %c0_60] : memref<288x8xf32, #tpu.memory_space<vmem>>, vector<288x8xf32>
    %c0_61 = arith.constant 0 : index
    %c36 = arith.constant 36 : index
    %c0_62 = arith.constant 0 : index
    %51 = vector.load %arg1[%c0_61, %c36, %c0_62] : memref<1x342x4xbf16, #tpu.memory_space<vmem>>, vector<1x288x4xbf16>
    %52 = vector.shape_cast %51 : vector<1x288x4xbf16> to vector<288x4xbf16>
    %c6 = arith.constant 6 : index
    %c0_63 = arith.constant 0 : index
    %c0_64 = arith.constant 0 : index
    %53 = vector.load %arg2[%c6, %c0_63, %c0_64] : memref<9x4x8xbf16, #tpu.memory_space<vmem>>, vector<1x4x8xbf16>
    %54 = vector.shape_cast %53 : vector<1x4x8xbf16> to vector<4x8xbf16>
    %cst_65 = arith.constant dense<0.000000e+00> : vector<288x8xf32>
    %55 = tpu.matmul %52, %54, %cst_65 {dimension_numbers = #tpu.dot_dimension_numbers<[1], [0], [0], [1], [0, 0, 1, 1], [], []>} : vector<288x4xbf16>, vector<4x8xbf16>, vector<288x8xf32> -> vector<288x8xf32>
    %56 = arith.addf %50, %55 : vector<288x8xf32>
    %c0_66 = arith.constant 0 : index
    %c0_67 = arith.constant 0 : index
    %57 = vector.load %arg5[%c0_66, %c0_67] : memref<288x8xf32, #tpu.memory_space<vmem>>, vector<288x8xf32>
    tpu.vector_store %arg5[%c0_66, %c0_67], %56 {strides = array<i32>} : memref<288x8xf32, #tpu.memory_space<vmem>>, vector<288x8xf32>,
    %c0_68 = arith.constant 0 : index
    %c0_69 = arith.constant 0 : index
    %58 = vector.load %arg5[%c0_68, %c0_69] : memref<288x8xf32, #tpu.memory_space<vmem>>, vector<288x8xf32>
    %c0_70 = arith.constant 0 : index
    %c37 = arith.constant 37 : index
    %c0_71 = arith.constant 0 : index
    %59 = vector.load %arg1[%c0_70, %c37, %c0_71] : memref<1x342x4xbf16, #tpu.memory_space<vmem>>, vector<1x288x4xbf16>
    %60 = vector.shape_cast %59 : vector<1x288x4xbf16> to vector<288x4xbf16>
    %c7 = arith.constant 7 : index
    %c0_72 = arith.constant 0 : index
    %c0_73 = arith.constant 0 : index
    %61 = vector.load %arg2[%c7, %c0_72, %c0_73] : memref<9x4x8xbf16, #tpu.memory_space<vmem>>, vector<1x4x8xbf16>
    %62 = vector.shape_cast %61 : vector<1x4x8xbf16> to vector<4x8xbf16>
    %cst_74 = arith.constant dense<0.000000e+00> : vector<288x8xf32>
    %63 = tpu.matmul %60, %62, %cst_74 {dimension_numbers = #tpu.dot_dimension_numbers<[1], [0], [0], [1], [0, 0, 1, 1], [], []>} : vector<288x4xbf16>, vector<4x8xbf16>, vector<288x8xf32> -> vector<288x8xf32>
    %64 = arith.addf %58, %63 : vector<288x8xf32>
    %c0_75 = arith.constant 0 : index
    %c0_76 = arith.constant 0 : index
    %65 = vector.load %arg5[%c0_75, %c0_76] : memref<288x8xf32, #tpu.memory_space<vmem>>, vector<288x8xf32>
    tpu.vector_store %arg5[%c0_75, %c0_76], %64 {strides = array<i32>} : memref<288x8xf32, #tpu.memory_space<vmem>>, vector<288x8xf32>,
    %c0_77 = arith.constant 0 : index
    %c0_78 = arith.constant 0 : index
    %66 = vector.load %arg5[%c0_77, %c0_78] : memref<288x8xf32, #tpu.memory_space<vmem>>, vector<288x8xf32>
    %c0_79 = arith.constant 0 : index
    %c38 = arith.constant 38 : index
    %c0_80 = arith.constant 0 : index
    %67 = vector.load %arg1[%c0_79, %c38, %c0_80] : memref<1x342x4xbf16, #tpu.memory_space<vmem>>, vector<1x288x4xbf16>
    %68 = vector.shape_cast %67 : vector<1x288x4xbf16> to vector<288x4xbf16>
    %c8 = arith.constant 8 : index
    %c0_81 = arith.constant 0 : index
    %c0_82 = arith.constant 0 : index
    %69 = vector.load %arg2[%c8, %c0_81, %c0_82] : memref<9x4x8xbf16, #tpu.memory_space<vmem>>, vector<1x4x8xbf16>
    %70 = vector.shape_cast %69 : vector<1x4x8xbf16> to vector<4x8xbf16>
    %cst_83 = arith.constant dense<0.000000e+00> : vector<288x8xf32>
    %71 = tpu.matmul %68, %70, %cst_83 {dimension_numbers = #tpu.dot_dimension_numbers<[1], [0], [0], [1], [0, 0, 1, 1], [], []>} : vector<288x4xbf16>, vector<4x8xbf16>, vector<288x8xf32> -> vector<288x8xf32>
    %72 = arith.addf %66, %71 : vector<288x8xf32>
    %c0_84 = arith.constant 0 : index
    %c0_85 = arith.constant 0 : index
    %73 = vector.load %arg5[%c0_84, %c0_85] : memref<288x8xf32, #tpu.memory_space<vmem>>, vector<288x8xf32>
    tpu.vector_store %arg5[%c0_84, %c0_85], %72 {strides = array<i32>} : memref<288x8xf32, #tpu.memory_space<vmem>>, vector<288x8xf32>,
    %c0_86 = arith.constant 0 : index
    %c0_87 = arith.constant 0 : index
    %74 = vector.load %arg5[%c0_86, %c0_87] : memref<288x8xf32, #tpu.memory_space<vmem>>, vector<288x8xf32>
    %c0_88 = arith.constant 0 : index
    %c0_89 = arith.constant 0 : index
    %75 = vector.load %arg3[%c0_88, %c0_89] : memref<288x1xf32, #tpu.memory_space<vmem>>, vector<288x1xf32>
    %76 = vector.broadcast %75 : vector<288x1xf32> to vector<288x8xf32>
    %77 = arith.mulf %74, %76 : vector<288x8xf32>
    %cst_90 = arith.constant dense<0.000000e+00> : vector<8xf32>
    %78 = vector.multi_reduction <add>, %77, %cst_90 [0] : vector<288x8xf32> to vector<8xf32>
    %79 = vector.shape_cast %78 : vector<8xf32> to vector<1x8xf32>
    %cst_91 = arith.constant 3.906250e-03 : f32
    %80 = vector.broadcast %cst_91 : f32 to vector<1x8xf32>
    %81 = arith.mulf %79, %80 : vector<1x8xf32>
    %82 = vector.broadcast %81 : vector<1x8xf32> to vector<288x8xf32>
    %83 = arith.subf %74, %82 : vector<288x8xf32>
    %84 = arith.mulf %83, %83 : vector<288x8xf32>
    %85 = vector.broadcast %75 : vector<288x1xf32> to vector<288x8xf32>
    %86 = arith.mulf %84, %85 : vector<288x8xf32>
    %cst_92 = arith.constant dense<0.000000e+00> : vector<8xf32>
    %87 = vector.multi_reduction <add>, %86, %cst_92 [0] : vector<288x8xf32> to vector<8xf32>
    %88 = vector.shape_cast %87 : vector<8xf32> to vector<1x8xf32>
    %cst_93 = arith.constant 3.906250e-03 : f32
    %89 = vector.broadcast %cst_93 : f32 to vector<1x8xf32>
    %90 = arith.mulf %88, %89 : vector<1x8xf32>
    %cst_94 = arith.constant 9.99999974E-6 : f32
    %91 = vector.broadcast %cst_94 : f32 to vector<1x8xf32>
    %92 = arith.addf %90, %91 : vector<1x8xf32>
    %93 = math.rsqrt %92 : vector<1x8xf32>
    %94 = vector.broadcast %93 : vector<1x8xf32> to vector<288x8xf32>
    %95 = arith.mulf %83, %94 : vector<288x8xf32>
    %cst_95 = arith.constant 0.000000e+00 : f32
    %96 = vector.broadcast %cst_95 : f32 to vector<288x8xf32>
    %97 = arith.maximumf %95, %96 : vector<288x8xf32>
    %c0_96 = arith.constant 0 : index
    %c0_97 = arith.constant 0 : index
    %c0_98 = arith.constant 0 : index
    %98 = vector.load %arg4[%c0_96, %c0_97, %c0_98] : memref<1x288x8xf32, #tpu.memory_space<vmem>>, vector<1x288x8xf32>
    %99 = vector.shape_cast %98 : vector<1x288x8xf32> to vector<288x8xf32>
    %100 = vector.shape_cast %97 : vector<288x8xf32> to vector<1x288x8xf32>
    tpu.vector_store %arg4[%c0_96, %c0_97, %c0_98], %100 {strides = array<i32>} : memref<1x288x8xf32, #tpu.memory_space<vmem>>, vector<1x288x8xf32>,
    return
  }
  func.func @transform_0(%arg0: i32) -> (i32, i32, i32) {
    %c0_i32 = arith.constant 0 : i32
    %c0_i32_0 = arith.constant 0 : i32
    %c0_i32_1 = arith.constant 0 : i32
    return %arg0, %c0_i32, %c0_i32_0 : i32, i32, i32
  }
  func.func @transform_1(%arg0: i32) -> (i32, i32, i32) {
    %c0_i32 = arith.constant 0 : i32
    %c0_i32_0 = arith.constant 0 : i32
    %c0_i32_1 = arith.constant 0 : i32
    %c0_i32_2 = arith.constant 0 : i32
    return %c0_i32, %c0_i32_0, %c0_i32_1 : i32, i32, i32
  }
  func.func @transform_2(%arg0: i32) -> (i32, i32) {
    %c0_i32 = arith.constant 0 : i32
    %c0_i32_0 = arith.constant 0 : i32
    %c0_i32_1 = arith.constant 0 : i32
    return %c0_i32, %c0_i32_0 : i32, i32
  }
  func.func @transform_3(%arg0: i32) -> (i32, i32, i32) {
    %c0_i32 = arith.constant 0 : i32
    %c0_i32_0 = arith.constant 0 : i32
    %c0_i32_1 = arith.constant 0 : i32
    return %arg0, %c0_i32, %c0_i32_0 : i32, i32, i32
  }
}

</mosaic_0001>

<llo_original>
// kernel: conv_block_forward.1
$region0: #{conv_block_forward.1}
  #allocation0 [shape = 'u32[]', space=smem, size = 0x4, offset = 0x4, fixed_abs, tag = 'smem constant byte address 0x4 - core index']
  #allocation1 [shape = 'u32[72,128]{1,0:T(1,128)}', space=vmem, size = 0x9000, scoped, tag = 'internal scratch']
  #allocation2 [shape = 'f32[288,8]{1,0:T(8,128)}', space=vmem, size = 0x24000, scoped, tag = 'scratch operand']
  %s0 = inlined_call_operand.vmem [shape: bf16[2,342,4], index: 0, kind: input, shape index: {}]
  %s1 = inlined_call_operand.vmem [shape: bf16[9,4,8], index: 1, kind: input, shape index: {}]
  %s2 = inlined_call_operand.vmem [shape: f32[288,1], index: 2, kind: input, shape index: {}]
  %s3 = inlined_call_operand.vmem [shape: f32[2,288,8], index: 3, kind: output, shape index: {}]
  %s4 = sld [smem:[#allocation0]]
  $region45: #{conv_block_forward.1} parent=0
    _
  %s6 = ssub.s32 1, %s4
  %s7 = scalar_select 0, %s6, %s4
  loop: start=0, step=1, limit=4
  $region2: #{conv_block_forward.1} parent=0 // loop_pre_header
    _
  $region3: #{conv_block_forward.1} parent=0 // loop_header
    %s9 = sphi 0, %s13
    %p10 = scmp.ge.s32.totalorder %s9, 4
    %s19 = sphi 0, %s21
    %s22 = sphi 0, %s19
    %s23 = sphi 0, %s22
    %s39 = sphi 0, %s23
    %s43 = sphi 0, %s43
    %s45 = sphi 0, %s43
    %s46 = sphi 0, %s45
    %s60 = sphi 0, %s46
    %s64 = sphi 0, %s64
    %s66 = sphi 0, %s64
    %s67 = sphi 0, %s66
    %s81 = sphi 0, %s67
    %s87 = sphi 0, %s89
    %s90 = sphi 0, %s87
    %s91 = sphi 0, %s90
    %s107 = sphi 0, %s91
  $region4: #{conv_block_forward.1} parent=0 // loop_header_branch
    %12 = sbr.rel (%p10) target = $region8
  $region5: #{conv_block_forward.1} parent=0 // loop_body
    %s14 = ssub.s32 %s9, 1
    %s15 = ssub.s32 %s9, 2
    %s16 = sadd.s32 %s9, 1
    %s17 = ssub.s32 %s9, %s16
    %p18 = scmp.eq.s32.totalorder %s17, 0
    %s20 = sadd.s32 %s19, 1
    %s21 = scalar_select %p18, %s19, %s20
    %p24 = pneg %p18
    %p25 = scmp.eq.s32.totalorder %s9, 1
    %p26 = por %p24, %p25
    %p27 = scmp.ne.s32.totalorder %s19, %s22
    %p28 = scmp.eq.s32.totalorder %s9, 0
    %p29 = por %p27, %p28
    %p30 = scmp.ne.s32.totalorder %s19, %s22
    %p31 = scmp.eq.s32.totalorder %s14, 1
    %p32 = por %p30, %p31
    %p33 = scmp.ne.s32.totalorder %s22, %s23
    %p34 = scmp.eq.s32.totalorder %s14, 0
    %p35 = por %p33, %p34
    %p36 = scmp.ne.s32.totalorder %s22, %s23
    %p37 = scmp.eq.s32.totalorder %s15, 1
    %p38 = por %p36, %p37
    %p40 = scmp.ne.s32.totalorder %s23, %s39
    %p41 = scmp.eq.s32.totalorder %s15, 0
    %p42 = por %p40, %p41
    %s44 = sadd.s32 %s43, 1
    %p47 = scmp.eq.s32.totalorder %s9, 1
    %p48 = scmp.ne.s32.totalorder %s43, %s45
    %p49 = scmp.eq.s32.totalorder %s9, 0
    %p50 = por %p48, %p49
    %p51 = scmp.ne.s32.totalorder %s43, %s45
    %p52 = scmp.eq.s32.totalorder %s14, 1
    %p53 = por %p51, %p52
    %p54 = scmp.ne.s32.totalorder %s45, %s46
    %p55 = scmp.eq.s32.totalorder %s14, 0
    %p56 = por %p54, %p55
    %p57 = scmp.ne.s32.totalorder %s45, %s46
    %p58 = scmp.eq.s32.totalorder %s15, 1
    %p59 = por %p57, %p58
    %p61 = scmp.ne.s32.totalorder %s46, %s60
    %p62 = scmp.eq.s32.totalorder %s15, 0
    %p63 = por %p61, %p62
    %s65 = sadd.s32 %s64, 1
    %p68 = scmp.eq.s32.totalorder %s9, 1
    %p69 = scmp.ne.s32.totalorder %s64, %s66
    %p70 = scmp.eq.s32.totalorder %s9, 0
    %p71 = por %p69, %p70
    %p72 = scmp.ne.s32.totalorder %s64, %s66
    %p73 = scmp.eq.s32.totalorder %s14, 1
    %p74 = por %p72, %p73
    %p75 = scmp.ne.s32.totalorder %s66, %s67
    %p76 = scmp.eq.s32.totalorder %s14, 0
    %p77 = por %p75, %p76
    %p78 = scmp.ne.s32.totalorder %s66, %s67
    %p79 = scmp.eq.s32.totalorder %s15, 1
    %p80 = por %p78, %p79
    %p82 = scmp.ne.s32.totalorder %s67, %s81
    %p83 = scmp.eq.s32.totalorder %s15, 0
    %p84 = por %p82, %p83
    %s85 = ssub.s32 %s9, %s16
    %p86 = scmp.eq.s32.totalorder %s85, 0
    %s88 = sadd.s32 %s87, 1
    %s89 = scalar_select %p86, %s87, %s88
    %p92 = pneg %p86
    %p93 = scmp.eq.s32.totalorder %s9, 1
    %p94 = por %p92, %p93
    %p95 = scmp.ne.s32.totalorder %s87, %s90
    %p96 = scmp.eq.s32.totalorder %s9, 0
    %p97 = por %p95, %p96
    %p98 = scmp.ne.s32.totalorder %s87, %s90
    %p99 = scmp.eq.s32.totalorder %s14, 1
    %p100 = por %p98, %p99
    %p101 = scmp.ne.s32.totalorder %s90, %s91
    %p102 = scmp.eq.s32.totalorder %s14, 0
    %p103 = por %p101, %p102
    %p104 = scmp.ne.s32.totalorder %s90, %s91
    %p105 = scmp.eq.s32.totalorder %s15, 1
    %p106 = por %p104, %p105
    %p108 = scmp.ne.s32.totalorder %s91, %s107
    %p109 = scmp.eq.s32.totalorder %s15, 0
    %p110 = por %p108, %p109
    %p111 = scmp.le.s32.totalorder 1, %s9
    %p112 = scmp.lt.s32.totalorder %s9, 3
    %p113 = pnand %p111, %p112
    %p114 = pneg %p113
    // Predicated region
    $region9: #{conv_block_forward.1} parent=5 // pred_check
      _
    $region10: #{conv_block_forward.1} parent=5 // pred_check_branch
      %116 = sbr.rel (%p113) target = $region12
    $region11: #{conv_block_forward.1} parent=5 // pred_region
      %s117 = ssub.s32 %s9, 1
      // Predicated region
      $region13: #{conv_block_forward.1} parent=11 // pred_check
        %p118 = pneg %p56
      $region14: #{conv_block_forward.1} parent=11 // pred_check_branch
        %120 = sbr.rel (%p118) target = $region16
      $region15: #{conv_block_forward.1} parent=11 // pred_region
        _
      $region16: #{conv_block_forward.1} parent=11 // pred_fallthru
        _
      // Predicated region
      $region17: #{conv_block_forward.1} parent=11 // pred_check
        %p121 = pneg %p77
      $region18: #{conv_block_forward.1} parent=11 // pred_check_branch
        %123 = sbr.rel (%p121) target = $region20
      $region19: #{conv_block_forward.1} parent=11 // pred_region
        _
      $region20: #{conv_block_forward.1} parent=11 // pred_fallthru
        _
    $region12: #{conv_block_forward.1} parent=5 // pred_fallthru
      _
    %p124 = scmp.lt.s32.totalorder %s9, 2
    // Predicated region
    $region21: #{conv_block_forward.1} parent=5 // pred_check
      %p125 = pneg %p124
    $region22: #{conv_block_forward.1} parent=5 // pred_check_branch
      %127 = sbr.rel (%p125) target = $region24
    $region23: #{conv_block_forward.1} parent=5 // pred_region
      // Predicated region
      $region25: #{conv_block_forward.1} parent=23 // pred_check
        %p128 = pneg %p29
      $region26: #{conv_block_forward.1} parent=23 // pred_check_branch
        %130 = sbr.rel (%p128) target = $region28
      $region27: #{conv_block_forward.1} parent=23 // pred_region
        %p131 = scmp.lt.s32.totalorder %s9, 1
        %s132 = scalar_select %p131, %s9, 1
        %s133 = smul.addr %s132, 43
        %s134 = smul.addr %s133, 4
        %s135 = scalar_lea.vmem %s0, %s134
      $region28: #{conv_block_forward.1} parent=23 // pred_fallthru
        _
    $region24: #{conv_block_forward.1} parent=5 // pred_fallthru
      _
    %p136 = scmp.le.s32.totalorder 1, %s9
    %p137 = scmp.lt.s32.totalorder %s9, 3
    %p138 = pnand %p136, %p137
    %p139 = pneg %p138
    // Predicated region
    $region29: #{conv_block_forward.1} parent=5 // pred_check
      _
    $region30: #{conv_block_forward.1} parent=5 // pred_check_branch
      %141 = sbr.rel (%p138) target = $region32
    $region31: #{conv_block_forward.1} parent=5 // pred_region
      %s142 = ssub.s32 %s9, 1
      %p143 = scmp.lt.s32.totalorder %s14, 1
      %s144 = scalar_select %p143, %s14, 1
      %s145 = smul.addr %s144, 43
      %s146 = smul.addr %s145, 4
      %s147 = scalar_lea.vmem %s0, %s146
      %p148 = pneg %p35
      %p149 = pneg %p32
      %p150 = pneg %p56
      %p151 = pneg %p53
      %p152 = pneg %p77
      %p153 = pneg %p74
      %p154 = pneg %p103
      %p155 = pneg %p100
      %p156 = scmp.lt.s32.totalorder %s14, 1
      %s157 = scalar_select %p156, %s14, 1
      %s158 = smul.addr %s157, 36
      %s159 = smul.addr %s158, 8
      %s160 = scalar_lea.vmem %s3, %s159
      %p161 = scmp.lt.s32.totalorder %s14, 1
      %s162 = scalar_select %p161, %s14, 1
      %s163 = smul.addr %s162, 43
      %s164 = smul.addr %s163, 4
      %s165 = scalar_lea.vmem %s0, %s164
      %p166 = scmp.lt.s32.totalorder %s14, 1
      %s167 = scalar_select %p166, %s14, 1
      %s168 = smul.addr %s167, 36
      %s169 = smul.addr %s168, 8
      %s170 = scalar_lea.vmem %s3, %s169
      %vm172 = vcmask 64512
      %173 = vst.msk [vmem:[#allocation2] sm:$0xff] %vm172, 0.0
      %174 = vst.msk [vmem:[#allocation2 + $0x8] sm:$0xff] %vm172, 0.0
      %175 = vst.msk [vmem:[#allocation2 + $0x10] sm:$0xff] %vm172, 0.0
      %176 = vst.msk [vmem:[#allocation2 + $0x18] sm:$0xff] %vm172, 0.0
      %177 = vst.msk [vmem:[#allocation2 + $0x20] sm:$0xff] %vm172, 0.0
      %178 = vst.msk [vmem:[#allocation2 + $0x28] sm:$0xff] %vm172, 0.0
      %179 = vst.msk [vmem:[#allocation2 + $0x30] sm:$0xff] %vm172, 0.0
      %180 = vst.msk [vmem:[#allocation2 + $0x38] sm:$0xff] %vm172, 0.0
      %181 = vst.msk [vmem:[#allocation2 + $0x40] sm:$0xff] %vm172, 0.0
      %182 = vst.msk [vmem:[#allocation2 + $0x48] sm:$0xff] %vm172, 0.0
      %183 = vst.msk [vmem:[#allocation2 + $0x50] sm:$0xff] %vm172, 0.0
      %184 = vst.msk [vmem:[#allocation2 + $0x58] sm:$0xff] %vm172, 0.0
      %185 = vst.msk [vmem:[#allocation2 + $0x60] sm:$0xff] %vm172, 0.0
      %186 = vst.msk [vmem:[#allocation2 + $0x68] sm:$0xff] %vm172, 0.0
      %187 = vst.msk [vmem:[#allocation2 + $0x70] sm:$0xff] %vm172, 0.0
      %188 = vst.msk [vmem:[#allocation2 + $0x78] sm:$0xff] %vm172, 0.0
      %189 = vst.msk [vmem:[#allocation2 + $0x80] sm:$0xff] %vm172, 0.0
      %190 = vst.msk [vmem:[#allocation2 + $0x88] sm:$0xff] %vm172, 0.0
      %191 = vst.msk [vmem:[#allocation2 + $0x90] sm:$0xff] %vm172, 0.0
      %192 = vst.msk [vmem:[#allocation2 + $0x98] sm:$0xff] %vm172, 0.0
      %193 = vst.msk [vmem:[#allocation2 + $0xa0] sm:$0xff] %vm172, 0.0
      %194 = vst.msk [vmem:[#allocation2 + $0xa8] sm:$0xff] %vm172, 0.0
      %195 = vst.msk [vmem:[#allocation2 + $0xb0] sm:$0xff] %vm172, 0.0
      %196 = vst.msk [vmem:[#allocation2 + $0xb8] sm:$0xff] %vm172, 0.0
      %197 = vst.msk [vmem:[#allocation2 + $0xc0] sm:$0xff] %vm172, 0.0
      %198 = vst.msk [vmem:[#allocation2 + $0xc8] sm:$0xff] %vm172, 0.0
      %199 = vst.msk [vmem:[#allocation2 + $0xd0] sm:$0xff] %vm172, 0.0
      %200 = vst.msk [vmem:[#allocation2 + $0xd8] sm:$0xff] %vm172, 0.0
      %201 = vst.msk [vmem:[#allocation2 + $0xe0] sm:$0xff] %vm172, 0.0
      %202 = vst.msk [vmem:[#allocation2 + $0xe8] sm:$0xff] %vm172, 0.0
      %203 = vst.msk [vmem:[#allocation2 + $0xf0] sm:$0xff] %vm172, 0.0
      %204 = vst.msk [vmem:[#allocation2 + $0xf8] sm:$0xff] %vm172, 0.0
      %205 = vst.msk [vmem:[#allocation2 + $0x100] sm:$0xff] %vm172, 0.0
      %206 = vst.msk [vmem:[#allocation2 + $0x108] sm:$0xff] %vm172, 0.0
      %207 = vst.msk [vmem:[#allocation2 + $0x110] sm:$0xff] %vm172, 0.0
      %208 = vst.msk [vmem:[#allocation2 + $0x118] sm:$0xff] %vm172, 0.0
      %v209 = vld [vmem:[#allocation2] sm:$0xff]
      %v210 = vld [vmem:[#allocation2 + $0x8] sm:$0xff]
      %v211 = vld [vmem:[#allocation2 + $0x10] sm:$0xff]
      %v212 = vld [vmem:[#allocation2 + $0x18] sm:$0xff]
      %v213 = vld [vmem:[#allocation2 + $0x20] sm:$0xff]
      %v214 = vld [vmem:[#allocation2 + $0x28] sm:$0xff]
      %v215 = vld [vmem:[#allocation2 + $0x30] sm:$0xff]
      %v216 = vld [vmem:[#allocation2 + $0x38] sm:$0xff]
      %v217 = vld [vmem:[#allocation2 + $0x40] sm:$0xff]
      %v218 = vld [vmem:[#allocation2 + $0x48] sm:$0xff]
      %v219 = vld [vmem:[#allocation2 + $0x50] sm:$0xff]
      %v220 = vld [vmem:[#allocation2 + $0x58] sm:$0xff]
      %v221 = vld [vmem:[#allocation2 + $0x60] sm:$0xff]
      %v222 = vld [vmem:[#allocation2 + $0x68] sm:$0xff]
      %v223 = vld [vmem:[#allocation2 + $0x70] sm:$0xff]
      %v224 = vld [vmem:[#allocation2 + $0x78] sm:$0xff]
      %v225 = vld [vmem:[#allocation2 + $0x80] sm:$0xff]
      %v226 = vld [vmem:[#allocation2 + $0x88] sm:$0xff]
      %v227 = vld [vmem:[#allocation2 + $0x90] sm:$0xff]
      %v228 = vld [vmem:[#allocation2 + $0x98] sm:$0xff]
      %v229 = vld [vmem:[#allocation2 + $0xa0] sm:$0xff]
      %v230 = vld [vmem:[#allocation2 + $0xa8] sm:$0xff]
      %v231 = vld [vmem:[#allocation2 + $0xb0] sm:$0xff]
      %v232 = vld [vmem:[#allocation2 + $0xb8] sm:$0xff]
      %v233 = vld [vmem:[#allocation2 + $0xc0] sm:$0xff]
      %v234 = vld [vmem:[#allocation2 + $0xc8] sm:$0xff]
      %v235 = vld [vmem:[#allocation2 + $0xd0] sm:$0xff]
      %v236 = vld [vmem:[#allocation2 + $0xd8] sm:$0xff]
      %v237 = vld [vmem:[#allocation2 + $0xe0] sm:$0xff]
      %v238 = vld [vmem:[#allocation2 + $0xe8] sm:$0xff]
      %v239 = vld [vmem:[#allocation2 + $0xf0] sm:$0xff]
      %v240 = vld [vmem:[#allocation2 + $0xf8] sm:$0xff]
      %v241 = vld [vmem:[#allocation2 + $0x100] sm:$0xff]
      %v242 = vld [vmem:[#allocation2 + $0x108] sm:$0xff]
      %v243 = vld [vmem:[#allocation2 + $0x110] sm:$0xff]
      %v244 = vld [vmem:[#allocation2 + $0x118] sm:$0xff]
      %v245 = vld [vmem:[%s165] sm:$0xf]
      %v246 = vld [vmem:[%s165 + $0x4] sm:$0xf]
      %v247 = vld [vmem:[%s165 + $0x8] sm:$0xf]
      %v248 = vld [vmem:[%s165 + $0xc] sm:$0xf]
      %v249 = vld [vmem:[%s165 + $0x10] sm:$0xf]
      %v250 = vld [vmem:[%s165 + $0x14] sm:$0xf]
      %v251 = vld [vmem:[%s165 + $0x18] sm:$0xf]
      %v252 = vld [vmem:[%s165 + $0x1c] sm:$0xf]
      %v253 = vld [vmem:[%s165 + $0x20] sm:$0xf]
      %v254 = vld [vmem:[%s165 + $0x24] sm:$0xf]
      %v255 = vld [vmem:[%s165 + $0x28] sm:$0xf]
      %v256 = vld [vmem:[%s165 + $0x2c] sm:$0xf]
      %v257 = vld [vmem:[%s165 + $0x30] sm:$0xf]
      %v258 = vld [vmem:[%s165 + $0x34] sm:$0xf]
      %v259 = vld [vmem:[%s165 + $0x38] sm:$0xf]
      %v260 = vld [vmem:[%s165 + $0x3c] sm:$0xf]
      %v261 = vld [vmem:[%s165 + $0x40] sm:$0xf]
      %v262 = vld [vmem:[%s165 + $0x44] sm:$0xf]
      %v263 = vld [vmem:[%s165 + $0x48] sm:$0xf]
      %v264 = vld [vmem:[%s165 + $0x4c] sm:$0xf]
      %v265 = vld [vmem:[%s165 + $0x50] sm:$0xf]
      %v266 = vld [vmem:[%s165 + $0x54] sm:$0xf]
      %v267 = vld [vmem:[%s165 + $0x58] sm:$0xf]
      %v268 = vld [vmem:[%s165 + $0x5c] sm:$0xf]
      %v269 = vld [vmem:[%s165 + $0x60] sm:$0xf]
      %v270 = vld [vmem:[%s165 + $0x64] sm:$0xf]
      %v271 = vld [vmem:[%s165 + $0x68] sm:$0xf]
      %v272 = vld [vmem:[%s165 + $0x6c] sm:$0xf]
      %v273 = vld [vmem:[%s165 + $0x70] sm:$0xf]
      %v274 = vld [vmem:[%s165 + $0x74] sm:$0xf]
      %v275 = vld [vmem:[%s165 + $0x78] sm:$0xf]
      %v276 = vld [vmem:[%s165 + $0x7c] sm:$0xf]
      %v277 = vld [vmem:[%s165 + $0x80] sm:$0xf]
      %v278 = vld [vmem:[%s165 + $0x84] sm:$0xf]
      %v279 = vld [vmem:[%s165 + $0x88] sm:$0xf]
      %v280 = vld [vmem:[%s165 + $0x8c] sm:$0xf]
      %v281 = vld [vmem:[%s1] sm:$0x3]
      %v318 = vunpack.c.l.b16 %v245
      %v319 = vunpack.c.l.b16 %v246
      %v320 = vunpack.c.l.b16 %v247
      %v321 = vunpack.c.l.b16 %v248
      %v322 = vunpack.c.l.b16 %v249
      %v323 = vunpack.c.l.b16 %v250
      %v324 = vunpack.c.l.b16 %v251
      %v325 = vunpack.c.l.b16 %v252
      %v326 = vunpack.c.l.b16 %v253
      %v327 = vunpack.c.l.b16 %v254
      %v328 = vunpack.c.l.b16 %v255
      %v329 = vunpack.c.l.b16 %v256
      %v330 = vunpack.c.l.b16 %v257
      %v331 = vunpack.c.l.b16 %v258
      %v332 = vunpack.c.l.b16 %v259
      %v333 = vunpack.c.l.b16 %v260
      %v334 = vunpack.c.l.b16 %v261
      %v335 = vunpack.c.l.b16 %v262
      %v336 = vunpack.c.l.b16 %v263
      %v337 = vunpack.c.l.b16 %v264
      %v338 = vunpack.c.l.b16 %v265
      %v339 = vunpack.c.l.b16 %v266
      %v340 = vunpack.c.l.b16 %v267
      %v341 = vunpack.c.l.b16 %v268
      %v342 = vunpack.c.l.b16 %v269
      %v343 = vunpack.c.l.b16 %v270
      %v344 = vunpack.c.l.b16 %v271
      %v345 = vunpack.c.l.b16 %v272
      %v346 = vunpack.c.l.b16 %v273
      %v347 = vunpack.c.l.b16 %v274
      %v348 = vunpack.c.l.b16 %v275
      %v349 = vunpack.c.l.b16 %v276
      %v350 = vunpack.c.l.b16 %v277
      %v351 = vunpack.c.l.b16 %v278
      %v352 = vunpack.c.l.b16 %v279
      %v353 = vunpack.c.l.b16 %v280
      %v354 = vpack.c.b16 %v319, %v318
      %v355 = vpack.c.b16 %v321, %v320
      %v356 = vpack.c.b16 %v323, %v322
      %v357 = vpack.c.b16 %v325, %v324
      %v358 = vpack.c.b16 %v327, %v326
      %v359 = vpack.c.b16 %v329, %v328
      %v360 = vpack.c.b16 %v331, %v330
      %v361 = vpack.c.b16 %v333, %v332
      %v362 = vpack.c.b16 %v335, %v334
      %v363 = vpack.c.b16 %v337, %v336
      %v364 = vpack.c.b16 %v339, %v338
      %v365 = vpack.c.b16 %v341, %v340
      %v366 = vpack.c.b16 %v343, %v342
      %v367 = vpack.c.b16 %v345, %v344
      %v368 = vpack.c.b16 %v347, %v346
      %v369 = vpack.c.b16 %v349, %v348
      %v370 = vpack.c.b16 %v351, %v350
      %v371 = vpack.c.b16 %v353, %v352
      %vm372 = vcmask 31744
      %v374 = vsel %vm372, %v354, 0
      %v377 = vsel %vm372, %v355, 0
      %v380 = vsel %vm372, %v356, 0
      %v383 = vsel %vm372, %v357, 0
      %v386 = vsel %vm372, %v358, 0
      %v389 = vsel %vm372, %v359, 0
      %v392 = vsel %vm372, %v360, 0
      %v395 = vsel %vm372, %v361, 0
      %v398 = vsel %vm372, %v362, 0
      %v401 = vsel %vm372, %v363, 0
      %v404 = vsel %vm372, %v364, 0
      %v407 = vsel %vm372, %v365, 0
      %v410 = vsel %vm372, %v366, 0
      %v413 = vsel %vm372, %v367, 0
      %v416 = vsel %vm372, %v368, 0
      %v419 = vsel %vm372, %v369, 0
      %v422 = vsel %vm372, %v370, 0
      %v425 = vsel %vm372, %v371, 0
      %vm427 = vcmask 1041408
      %v429 = vsel %vm427, %v281, 0
      %431 = vmatpush.bf16.msra.mxu0 0
      %432 = vmatpush.bf16.msra.mxu0 0
      %433 = vmatpush.bf16.msra.mxu0 0
      %434 = vmatpush.bf16.msra.mxu0 0
      %435 = vmatpush.bf16.msra.mxu0 0
      %436 = vmatpush.bf16.msra.mxu0 0
      %437 = vmatpush.bf16.msra.mxu0 0
      %438 = vmatpush.bf16.msra.mxu0 %v429
      %439 = vmatmul.bf16.gmra.mxu0 %v374
      %v440 = vpop.f32.mrf.mxu0
      %v441 = vadd.f32 0.0, %v440
      %v442 = vpop.f32.mrf.mxu0
      %v443 = vadd.f32 0.0, %v442
      %444 = vmatmul.bf16.gmra.mxu0 %v377
      %v445 = vpop.f32.mrf.mxu0
      %v446 = vadd.f32 0.0, %v445
      %v447 = vpop.f32.mrf.mxu0
      %v448 = vadd.f32 0.0, %v447
      %449 = vmatmul.bf16.gmra.mxu0 %v380
      %v450 = vpop.f32.mrf.mxu0
      %v451 = vadd.f32 0.0, %v450
      %v452 = vpop.f32.mrf.mxu0
      %v453 = vadd.f32 0.0, %v452
      %454 = vmatmul.bf16.gmra.mxu0 %v383
      %v455 = vpop.f32.mrf.mxu0
      %v456 = vadd.f32 0.0, %v455
      %v457 = vpop.f32.mrf.mxu0
      %v458 = vadd.f32 0.0, %v457
      %459 = vmatmul.bf16.gmra.mxu0 %v386
      %v460 = vpop.f32.mrf.mxu0
      %v461 = vadd.f32 0.0, %v460
      %v462 = vpop.f32.mrf.mxu0
      %v463 = vadd.f32 0.0, %v462
      %464 = vmatmul.bf16.gmra.mxu0 %v389
      %v465 = vpop.f32.mrf.mxu0
      %v466 = vadd.f32 0.0, %v465
      %v467 = vpop.f32.mrf.mxu0
      %v468 = vadd.f32 0.0, %v467
      %469 = vmatmul.bf16.gmra.mxu0 %v392
      %v470 = vpop.f32.mrf.mxu0
      %v471 = vadd.f32 0.0, %v470
      %v472 = vpop.f32.mrf.mxu0
      %v473 = vadd.f32 0.0, %v472
      %474 = vmatmul.bf16.gmra.mxu0 %v395
      %v475 = vpop.f32.mrf.mxu0
      %v476 = vadd.f32 0.0, %v475
      %v477 = vpop.f32.mrf.mxu0
      %v478 = vadd.f32 0.0, %v477
      %479 = vmatmul.bf16.gmra.mxu0 %v398
      %v480 = vpop.f32.mrf.mxu0
      %v481 = vadd.f32 0.0, %v480
      %v482 = vpop.f32.mrf.mxu0
      %v483 = vadd.f32 0.0, %v482
      %484 = vmatmul.bf16.gmra.mxu0 %v401
      %v485 = vpop.f32.mrf.mxu0
      %v486 = vadd.f32 0.0, %v485
      %v487 = vpop.f32.mrf.mxu0
      %v488 = vadd.f32 0.0, %v487
      %489 = vmatmul.bf16.gmra.mxu0 %v404
      %v490 = vpop.f32.mrf.mxu0
      %v491 = vadd.f32 0.0, %v490
      %v492 = vpop.f32.mrf.mxu0
      %v493 = vadd.f32 0.0, %v492
      %494 = vmatmul.bf16.gmra.mxu0 %v407
      %v495 = vpop.f32.mrf.mxu0
      %v496 = vadd.f32 0.0, %v495
      %v497 = vpop.f32.mrf.mxu0
      %v498 = vadd.f32 0.0, %v497
      %499 = vmatmul.bf16.gmra.mxu0 %v410
      %v500 = vpop.f32.mrf.mxu0
      %v501 = vadd.f32 0.0, %v500
      %v502 = vpop.f32.mrf.mxu0
      %v503 = vadd.f32 0.0, %v502
      %504 = vmatmul.bf16.gmra.mxu0 %v413
      %v505 = vpop.f32.mrf.mxu0
      %v506 = vadd.f32 0.0, %v505
      %v507 = vpop.f32.mrf.mxu0
      %v508 = vadd.f32 0.0, %v507
      %509 = vmatmul.bf16.gmra.mxu0 %v416
      %v510 = vpop.f32.mrf.mxu0
      %v511 = vadd.f32 0.0, %v510
      %v512 = vpop.f32.mrf.mxu0
      %v513 = vadd.f32 0.0, %v512
      %514 = vmatmul.bf16.gmra.mxu0 %v419
      %v515 = vpop.f32.mrf.mxu0
      %v516 = vadd.f32 0.0, %v515
      %v517 = vpop.f32.mrf.mxu0
      %v518 = vadd.f32 0.0, %v517
      %519 = vmatmul.bf16.gmra.mxu0 %v422
      %v520 = vpop.f32.mrf.mxu0
      %v521 = vadd.f32 0.0, %v520
      %v522 = vpop.f32.mrf.mxu0
      %v523 = vadd.f32 0.0, %v522
      %524 = vmatmul.bf16.gmra.mxu0 %v425
      %v525 = vpop.f32.mrf.mxu0
      %v526 = vadd.f32 0.0, %v525
      %v527 = vpop.f32.mrf.mxu0
      %v528 = vadd.f32 0.0, %v527
      %529 = vdwg.mxu0
      %v530 = vadd.f32 %v209, %v441
      %v531 = vadd.f32 %v210, %v443
      %v532 = vadd.f32 %v211, %v446
      %v533 = vadd.f32 %v212, %v448
      %v534 = vadd.f32 %v213, %v451
      %v535 = vadd.f32 %v214, %v453
      %v536 = vadd.f32 %v215, %v456
      %v537 = vadd.f32 %v216, %v458
      %v538 = vadd.f32 %v217, %v461
      %v539 = vadd.f32 %v218, %v463
      %v540 = vadd.f32 %v219, %v466
      %v541 = vadd.f32 %v220, %v468
      %v542 = vadd.f32 %v221, %v471
      %v543 = vadd.f32 %v222, %v473
      %v544 = vadd.f32 %v223, %v476
      %v545 = vadd.f32 %v224, %v478
      %v546 = vadd.f32 %v225, %v481
      %v547 = vadd.f32 %v226, %v483
      %v548 = vadd.f32 %v227, %v486
      %v549 = vadd.f32 %v228, %v488
      %v550 = vadd.f32 %v229, %v491
      %v551 = vadd.f32 %v230, %v493
      %v552 = vadd.f32 %v231, %v496
      %v553 = vadd.f32 %v232, %v498
      %v554 = vadd.f32 %v233, %v501
      %v555 = vadd.f32 %v234, %v503
      %v556 = vadd.f32 %v235, %v506
      %v557 = vadd.f32 %v236, %v508
      %v558 = vadd.f32 %v237, %v511
      %v559 = vadd.f32 %v238, %v513
      %v560 = vadd.f32 %v239, %v516
      %v561 = vadd.f32 %v240, %v518
      %v562 = vadd.f32 %v241, %v521
      %v563 = vadd.f32 %v242, %v523
      %v564 = vadd.f32 %v243, %v526
      %v565 = vadd.f32 %v244, %v528
      %566 = vst.msk [vmem:[#allocation2] sm:$0xff] %vm172, %v530
      %567 = vst.msk [vmem:[#allocation2 + $0x8] sm:$0xff] %vm172, %v531
      %568 = vst.msk [vmem:[#allocation2 + $0x10] sm:$0xff] %vm172, %v532
      %569 = vst.msk [vmem:[#allocation2 + $0x18] sm:$0xff] %vm172, %v533
      %570 = vst.msk [vmem:[#allocation2 + $0x20] sm:$0xff] %vm172, %v534
      %571 = vst.msk [vmem:[#allocation2 + $0x28] sm:$0xff] %vm172, %v535
      %572 = vst.msk [vmem:[#allocation2 + $0x30] sm:$0xff] %vm172, %v536
      %573 = vst.msk [vmem:[#allocation2 + $0x38] sm:$0xff] %vm172, %v537
      %574 = vst.msk [vmem:[#allocation2 + $0x40] sm:$0xff] %vm172, %v538
      %575 = vst.msk [vmem:[#allocation2 + $0x48] sm:$0xff] %vm172, %v539
      %576 = vst.msk [vmem:[#allocation2 + $0x50] sm:$0xff] %vm172, %v540
      %577 = vst.msk [vmem:[#allocation2 + $0x58] sm:$0xff] %vm172, %v541
      %578 = vst.msk [vmem:[#allocation2 + $0x60] sm:$0xff] %vm172, %v542
      %579 = vst.msk [vmem:[#allocation2 + $0x68] sm:$0xff] %vm172, %v543
      %580 = vst.msk [vmem:[#allocation2 + $0x70] sm:$0xff] %vm172, %v544
      %581 = vst.msk [vmem:[#allocation2 + $0x78] sm:$0xff] %vm172, %v545
      %582 = vst.msk [vmem:[#allocation2 + $0x80] sm:$0xff] %vm172, %v546
      %583 = vst.msk [vmem:[#allocation2 + $0x88] sm:$0xff] %vm172, %v547
      %584 = vst.msk [vmem:[#allocation2 + $0x90] sm:$0xff] %vm172, %v548
      %585 = vst.msk [vmem:[#allocation2 + $0x98] sm:$0xff] %vm172, %v549
      %586 = vst.msk [vmem:[#allocation2 + $0xa0] sm:$0xff] %vm172, %v550
      %587 = vst.msk [vmem:[#allocation2 + $0xa8] sm:$0xff] %vm172, %v551
      %588 = vst.msk [vmem:[#allocation2 + $0xb0] sm:$0xff] %vm172, %v552
      %589 = vst.msk [vmem:[#allocation2 + $0xb8] sm:$0xff] %vm172, %v553
      %590 = vst.msk [vmem:[#allocation2 + $0xc0] sm:$0xff] %vm172, %v554
      %591 = vst.msk [vmem:[#allocation2 + $0xc8] sm:$0xff] %vm172, %v555
      %592 = vst.msk [vmem:[#allocation2 + $0xd0] sm:$0xff] %vm172, %v556
      %593 = vst.msk [vmem:[#allocation2 + $0xd8] sm:$0xff] %vm172, %v557
      %594 = vst.msk [vmem:[#allocation2 + $0xe0] sm:$0xff] %vm172, %v558
      %595 = vst.msk [vmem:[#allocation2 + $0xe8] sm:$0xff] %vm172, %v559
      %596 = vst.msk [vmem:[#allocation2 + $0xf0] sm:$0xff] %vm172, %v560
      %597 = vst.msk [vmem:[#allocation2 + $0xf8] sm:$0xff] %vm172, %v561
      %598 = vst.msk [vmem:[#allocation2 + $0x100] sm:$0xff] %vm172, %v562
      %599 = vst.msk [vmem:[#allocation2 + $0x108] sm:$0xff] %vm172, %v563
      %600 = vst.msk [vmem:[#allocation2 + $0x110] sm:$0xff] %vm172, %v564
      %601 = vst.msk [vmem:[#allocation2 + $0x118] sm:$0xff] %vm172, %v565
      %v602 = vld [vmem:[#allocation2] sm:$0xff]
      %v603 = vld [vmem:[#allocation2 + $0x8] sm:$0xff]
      %v604 = vld [vmem:[#allocation2 + $0x10] sm:$0xff]
      %v605 = vld [vmem:[#allocation2 + $0x18] sm:$0xff]
      %v606 = vld [vmem:[#allocation2 + $0x20] sm:$0xff]
      %v607 = vld [vmem:[#allocation2 + $0x28] sm:$0xff]
      %v608 = vld [vmem:[#allocation2 + $0x30] sm:$0xff]
      %v609 = vld [vmem:[#allocation2 + $0x38] sm:$0xff]
      %v610 = vld [vmem:[#allocation2 + $0x40] sm:$0xff]
      %v611 = vld [vmem:[#allocation2 + $0x48] sm:$0xff]
      %v612 = vld [vmem:[#allocation2 + $0x50] sm:$0xff]
      %v613 = vld [vmem:[#allocation2 + $0x58] sm:$0xff]
      %v614 = vld [vmem:[#allocation2 + $0x60] sm:$0xff]
      %v615 = vld [vmem:[#allocation2 + $0x68] sm:$0xff]
      %v616 = vld [vmem:[#allocation2 + $0x70] sm:$0xff]
      %v617 = vld [vmem:[#allocation2 + $0x78] sm:$0xff]
      %v618 = vld [vmem:[#allocation2 + $0x80] sm:$0xff]
      %v619 = vld [vmem:[#allocation2 + $0x88] sm:$0xff]
      %v620 = vld [vmem:[#allocation2 + $0x90] sm:$0xff]
      %v621 = vld [vmem:[#allocation2 + $0x98] sm:$0xff]
      %v622 = vld [vmem:[#allocation2 + $0xa0] sm:$0xff]
      %v623 = vld [vmem:[#allocation2 + $0xa8] sm:$0xff]
      %v624 = vld [vmem:[#allocation2 + $0xb0] sm:$0xff]
      %v625 = vld [vmem:[#allocation2 + $0xb8] sm:$0xff]
      %v626 = vld [vmem:[#allocation2 + $0xc0] sm:$0xff]
      %v627 = vld [vmem:[#allocation2 + $0xc8] sm:$0xff]
      %v628 = vld [vmem:[#allocation2 + $0xd0] sm:$0xff]
      %v629 = vld [vmem:[#allocation2 + $0xd8] sm:$0xff]
      %v630 = vld [vmem:[#allocation2 + $0xe0] sm:$0xff]
      %v631 = vld [vmem:[#allocation2 + $0xe8] sm:$0xff]
      %v632 = vld [vmem:[#allocation2 + $0xf0] sm:$0xff]
      %v633 = vld [vmem:[#allocation2 + $0xf8] sm:$0xff]
      %v634 = vld [vmem:[#allocation2 + $0x100] sm:$0xff]
      %v635 = vld [vmem:[#allocation2 + $0x108] sm:$0xff]
      %v636 = vld [vmem:[#allocation2 + $0x110] sm:$0xff]
      %v637 = vld [vmem:[#allocation2 + $0x118] sm:$0xff]
      %v638 = vld [vmem:[%s165] sm:$0xf]
      %v639 = vld [vmem:[%s165 + $0x4] sm:$0xf]
      %v640 = vld [vmem:[%s165 + $0x8] sm:$0xf]
      %v641 = vld [vmem:[%s165 + $0xc] sm:$0xf]
      %v642 = vld [vmem:[%s165 + $0x10] sm:$0xf]
      %v643 = vld [vmem:[%s165 + $0x14] sm:$0xf]
      %v644 = vld [vmem:[%s165 + $0x18] sm:$0xf]
      %v645 = vld [vmem:[%s165 + $0x1c] sm:$0xf]
      %v646 = vld [vmem:[%s165 + $0x20] sm:$0xf]
      %v647 = vld [vmem:[%s165 + $0x24] sm:$0xf]
      %v648 = vld [vmem:[%s165 + $0x28] sm:$0xf]
      %v649 = vld [vmem:[%s165 + $0x2c] sm:$0xf]
      %v650 = vld [vmem:[%s165 + $0x30] sm:$0xf]
      %v651 = vld [vmem:[%s165 + $0x34] sm:$0xf]
      %v652 = vld [vmem:[%s165 + $0x38] sm:$0xf]
      %v653 = vld [vmem:[%s165 + $0x3c] sm:$0xf]
      %v654 = vld [vmem:[%s165 + $0x40] sm:$0xf]
      %v655 = vld [vmem:[%s165 + $0x44] sm:$0xf]
      %v656 = vld [vmem:[%s165 + $0x48] sm:$0xf]
      %v657 = vld [vmem:[%s165 + $0x4c] sm:$0xf]
      %v658 = vld [vmem:[%s165 + $0x50] sm:$0xf]
      %v659 = vld [vmem:[%s165 + $0x54] sm:$0xf]
      %v660 = vld [vmem:[%s165 + $0x58] sm:$0xf]
      %v661 = vld [vmem:[%s165 + $0x5c] sm:$0xf]
      %v662 = vld [vmem:[%s165 + $0x60] sm:$0xf]
      %v663 = vld [vmem:[%s165 + $0x64] sm:$0xf]
      %v664 = vld [vmem:[%s165 + $0x68] sm:$0xf]
      %v665 = vld [vmem:[%s165 + $0x6c] sm:$0xf]
      %v666 = vld [vmem:[%s165 + $0x70] sm:$0xf]
      %v667 = vld [vmem:[%s165 + $0x74] sm:$0xf]
      %v668 = vld [vmem:[%s165 + $0x78] sm:$0xf]
      %v669 = vld [vmem:[%s165 + $0x7c] sm:$0xf]
      %v670 = vld [vmem:[%s165 + $0x80] sm:$0xf]
      %v671 = vld [vmem:[%s165 + $0x84] sm:$0xf]
      %v672 = vld [vmem:[%s165 + $0x88] sm:$0xf]
      %v673 = vld [vmem:[%s165 + $0x8c] sm:$0xf]
      %v674 = vld [vmem:[%s165 + $0x90] sm:$0x1]
      %s675 = scalar_lea.vmem %s1, 2
      %v676 = vld [vmem:[%s675] sm:$0x3]
      %v714 = vunpack.c.l.b16 %v638
      %v715 = vunpack.c.l.b16 %v639
      %v716 = vunpack.c.l.b16 %v640
      %v717 = vunpack.c.l.b16 %v641
      %v718 = vunpack.c.l.b16 %v642
      %v719 = vunpack.c.l.b16 %v643
      %v720 = vunpack.c.l.b16 %v644
      %v721 = vunpack.c.l.b16 %v645
      %v722 = vunpack.c.l.b16 %v646
      %v723 = vunpack.c.l.b16 %v647
      %v724 = vunpack.c.l.b16 %v648
      %v725 = vunpack.c.l.b16 %v649
      %v726 = vunpack.c.l.b16 %v650
      %v727 = vunpack.c.l.b16 %v651
      %v728 = vunpack.c.l.b16 %v652
      %v729 = vunpack.c.l.b16 %v653
      %v730 = vunpack.c.l.b16 %v654
      %v731 = vunpack.c.l.b16 %v655
      %v732 = vunpack.c.l.b16 %v656
      %v733 = vunpack.c.l.b16 %v657
      %v734 = vunpack.c.l.b16 %v658
      %v735 = vunpack.c.l.b16 %v659
      %v736 = vunpack.c.l.b16 %v660
      %v737 = vunpack.c.l.b16 %v661
      %v738 = vunpack.c.l.b16 %v662
      %v739 = vunpack.c.l.b16 %v663
      %v740 = vunpack.c.l.b16 %v664
      %v741 = vunpack.c.l.b16 %v665
      %v742 = vunpack.c.l.b16 %v666
      %v743 = vunpack.c.l.b16 %v667
      %v744 = vunpack.c.l.b16 %v668
      %v745 = vunpack.c.l.b16 %v669
      %v746 = vunpack.c.l.b16 %v670
      %v747 = vunpack.c.l.b16 %v671
      %v748 = vunpack.c.l.b16 %v672
      %v749 = vunpack.c.l.b16 %v673
      %v750 = vunpack.c.l.b16 %v674
      %v751 = vpack.c.b16 %v715, %v714
      %v752 = vpack.c.b16 %v717, %v716
      %v753 = vpack.c.b16 %v719, %v718
      %v754 = vpack.c.b16 %v721, %v720
      %v755 = vpack.c.b16 %v723, %v722
      %v756 = vpack.c.b16 %v725, %v724
      %v757 = vpack.c.b16 %v727, %v726
      %v758 = vpack.c.b16 %v729, %v728
      %v759 = vpack.c.b16 %v731, %v730
      %v760 = vpack.c.b16 %v733, %v732
      %v761 = vpack.c.b16 %v735, %v734
      %v762 = vpack.c.b16 %v737, %v736
      %v763 = vpack.c.b16 %v739, %v738
      %v764 = vpack.c.b16 %v741, %v740
      %v765 = vpack.c.b16 %v743, %v742
      %v766 = vpack.c.b16 %v745, %v744
      %v767 = vpack.c.b16 %v747, %v746
      %v768 = vpack.c.b16 %v749, %v748
      %v769 = vpack.c.b16 %v750, %v750
      %vm770 = vsmask.f32 7424
      %v772 = vshrl.u32 %v751, 16
      %v774 = vshll.u32 %v751, 16
      %v776 = vrot.slane %v774, 1
      %v777 = vor.u32 %v772, %v776
      %v779 = vshll.u32 %v752, 16
      %v781 = vrot.slane %v779, 1
      %v782 = vsel %vm770, %v777, %v781
      %v783 = vshrl.u32 %v752, 16
      %v785 = vor.u32 %v783, %v781
      %v787 = vshll.u32 %v753, 16
      %v789 = vrot.slane %v787, 1
      %v790 = vsel %vm770, %v785, %v789
      %v791 = vshrl.u32 %v753, 16
      %v793 = vor.u32 %v791, %v789
      %v795 = vshll.u32 %v754, 16
      %v797 = vrot.slane %v795, 1
      %v798 = vsel %vm770, %v793, %v797
      %v799 = vshrl.u32 %v754, 16
      %v801 = vor.u32 %v799, %v797
      %v803 = vshll.u32 %v755, 16
      %v805 = vrot.slane %v803, 1
      %v806 = vsel %vm770, %v801, %v805
      %v807 = vshrl.u32 %v755, 16
      %v809 = vor.u32 %v807, %v805
      %v811 = vshll.u32 %v756, 16
      %v813 = vrot.slane %v811, 1
      %v814 = vsel %vm770, %v809, %v813
      %v815 = vshrl.u32 %v756, 16
      %v817 = vor.u32 %v815, %v813
      %v819 = vshll.u32 %v757, 16
      %v821 = vrot.slane %v819, 1
      %v822 = vsel %vm770, %v817, %v821
      %v823 = vshrl.u32 %v757, 16
      %v825 = vor.u32 %v823, %v821
      %v827 = vshll.u32 %v758, 16
      %v829 = vrot.slane %v827, 1
      %v830 = vsel %vm770, %v825, %v829
      %v831 = vshrl.u32 %v758, 16
      %v833 = vor.u32 %v831, %v829
      %v835 = vshll.u32 %v759, 16
      %v837 = vrot.slane %v835, 1
      %v838 = vsel %vm770, %v833, %v837
      %v839 = vshrl.u32 %v759, 16
      %v841 = vor.u32 %v839, %v837
      %v843 = vshll.u32 %v760, 16
      %v845 = vrot.slane %v843, 1
      %v846 = vsel %vm770, %v841, %v845
      %v847 = vshrl.u32 %v760, 16
      %v849 = vor.u32 %v847, %v845
      %v851 = vshll.u32 %v761, 16
      %v853 = vrot.slane %v851, 1
      %v854 = vsel %vm770, %v849, %v853
      %v855 = vshrl.u32 %v761, 16
      %v857 = vor.u32 %v855, %v853
      %v859 = vshll.u32 %v762, 16
      %v861 = vrot.slane %v859, 1
      %v862 = vsel %vm770, %v857, %v861
      %v863 = vshrl.u32 %v762, 16
      %v865 = vor.u32 %v863, %v861
      %v867 = vshll.u32 %v763, 16
      %v869 = vrot.slane %v867, 1
      %v870 = vsel %vm770, %v865, %v869
      %v871 = vshrl.u32 %v763, 16
      %v873 = vor.u32 %v871, %v869
      %v875 = vshll.u32 %v764, 16
      %v877 = vrot.slane %v875, 1
      %v878 = vsel %vm770, %v873, %v877
      %v879 = vshrl.u32 %v764, 16
      %v881 = vor.u32 %v879, %v877
      %v883 = vshll.u32 %v765, 16
      %v885 = vrot.slane %v883, 1
      %v886 = vsel %vm770, %v881, %v885
      %v887 = vshrl.u32 %v765, 16
      %v889 = vor.u32 %v887, %v885
      %v891 = vshll.u32 %v766, 16
      %v893 = vrot.slane %v891, 1
      %v894 = vsel %vm770, %v889, %v893
      %v895 = vshrl.u32 %v766, 16
      %v897 = vor.u32 %v895, %v893
      %v899 = vshll.u32 %v767, 16
      %v901 = vrot.slane %v899, 1
      %v902 = vsel %vm770, %v897, %v901
      %v903 = vshrl.u32 %v767, 16
      %v905 = vor.u32 %v903, %v901
      %v907 = vshll.u32 %v768, 16
      %v909 = vrot.slane %v907, 1
      %v910 = vsel %vm770, %v905, %v909
      %v911 = vshrl.u32 %v768, 16
      %v913 = vor.u32 %v911, %v909
      %v915 = vshll.u32 %v769, 16
      %v917 = vrot.slane %v915, 1
      %v918 = vsel %vm770, %v913, %v917
      %v920 = vsel %vm372, %v782, 0
      %v923 = vsel %vm372, %v790, 0
      %v926 = vsel %vm372, %v798, 0
      %v929 = vsel %vm372, %v806, 0
      %v932 = vsel %vm372, %v814, 0
      %v935 = vsel %vm372, %v822, 0
      %v938 = vsel %vm372, %v830, 0
      %v941 = vsel %vm372, %v838, 0
      %v944 = vsel %vm372, %v846, 0
      %v947 = vsel %vm372, %v854, 0
      %v950 = vsel %vm372, %v862, 0
      %v953 = vsel %vm372, %v870, 0
      %v956 = vsel %vm372, %v878, 0
      %v959 = vsel %vm372, %v886, 0
      %v962 = vsel %vm372, %v894, 0
      %v965 = vsel %vm372, %v902, 0
      %v968 = vsel %vm372, %v910, 0
      %v971 = vsel %vm372, %v918, 0
      %v974 = vsel %vm427, %v676, 0
      %976 = vmatpush.bf16.msra.mxu0 0
      %977 = vmatpush.bf16.msra.mxu0 0
      %978 = vmatpush.bf16.msra.mxu0 0
      %979 = vmatpush.bf16.msra.mxu0 0
      %980 = vmatpush.bf16.msra.mxu0 0
      %981 = vmatpush.bf16.msra.mxu0 0
      %982 = vmatpush.bf16.msra.mxu0 0
      %983 = vmatpush.bf16.msra.mxu0 %v974
      %984 = vmatmul.bf16.gmra.mxu0 %v920
      %v985 = vpop.f32.mrf.mxu0
      %v986 = vadd.f32 0.0, %v985
      %v987 = vpop.f32.mrf.mxu0
      %v988 = vadd.f32 0.0, %v987
      %989 = vmatmul.bf16.gmra.mxu0 %v923
      %v990 = vpop.f32.mrf.mxu0
      %v991 = vadd.f32 0.0, %v990
      %v992 = vpop.f32.mrf.mxu0
      %v993 = vadd.f32 0.0, %v992
      %994 = vmatmul.bf16.gmra.mxu0 %v926
      %v995 = vpop.f32.mrf.mxu0
      %v996 = vadd.f32 0.0, %v995
      %v997 = vpop.f32.mrf.mxu0
      %v998 = vadd.f32 0.0, %v997
      %999 = vmatmul.bf16.gmra.mxu0 %v929
      %v1000 = vpop.f32.mrf.mxu0
      %v1001 = vadd.f32 0.0, %v1000
      %v1002 = vpop.f32.mrf.mxu0
      %v1003 = vadd.f32 0.0, %v1002
      %1004 = vmatmul.bf16.gmra.mxu0 %v932
      %v1005 = vpop.f32.mrf.mxu0
      %v1006 = vadd.f32 0.0, %v1005
      %v1007 = vpop.f32.mrf.mxu0
      %v1008 = vadd.f32 0.0, %v1007
      %1009 = vmatmul.bf16.gmra.mxu0 %v935
      %v1010 = vpop.f32.mrf.mxu0
      %v1011 = vadd.f32 0.0, %v1010
      %v1012 = vpop.f32.mrf.mxu0
      %v1013 = vadd.f32 0.0, %v1012
      %1014 = vmatmul.bf16.gmra.mxu0 %v938
      %v1015 = vpop.f32.mrf.mxu0
      %v1016 = vadd.f32 0.0, %v1015
      %v1017 = vpop.f32.mrf.mxu0
      %v1018 = vadd.f32 0.0, %v1017
      %1019 = vmatmul.bf16.gmra.mxu0 %v941
      %v1020 = vpop.f32.mrf.mxu0
      %v1021 = vadd.f32 0.0, %v1020
      %v1022 = vpop.f32.mrf.mxu0
      %v1023 = vadd.f32 0.0, %v1022
      %1024 = vmatmul.bf16.gmra.mxu0 %v944
      %v1025 = vpop.f32.mrf.mxu0
      %v1026 = vadd.f32 0.0, %v1025
      %v1027 = vpop.f32.mrf.mxu0
      %v1028 = vadd.f32 0.0, %v1027
      %1029 = vmatmul.bf16.gmra.mxu0 %v947
      %v1030 = vpop.f32.mrf.mxu0
      %v1031 = vadd.f32 0.0, %v1030
      %v1032 = vpop.f32.mrf.mxu0
      %v1033 = vadd.f32 0.0, %v1032
      %1034 = vmatmul.bf16.gmra.mxu0 %v950
      %v1035 = vpop.f32.mrf.mxu0
      %v1036 = vadd.f32 0.0, %v1035
      %v1037 = vpop.f32.mrf.mxu0
      %v1038 = vadd.f32 0.0, %v1037
      %1039 = vmatmul.bf16.gmra.mxu0 %v953
      %v1040 = vpop.f32.mrf.mxu0
      %v1041 = vadd.f32 0.0, %v1040
      %v1042 = vpop.f32.mrf.mxu0
      %v1043 = vadd.f32 0.0, %v1042
      %1044 = vmatmul.bf16.gmra.mxu0 %v956
      %v1045 = vpop.f32.mrf.mxu0
      %v1046 = vadd.f32 0.0, %v1045
      %v1047 = vpop.f32.mrf.mxu0
      %v1048 = vadd.f32 0.0, %v1047
      %1049 = vmatmul.bf16.gmra.mxu0 %v959
      %v1050 = vpop.f32.mrf.mxu0
      %v1051 = vadd.f32 0.0, %v1050
      %v1052 = vpop.f32.mrf.mxu0
      %v1053 = vadd.f32 0.0, %v1052
      %1054 = vmatmul.bf16.gmra.mxu0 %v962
      %v1055 = vpop.f32.mrf.mxu0
      %v1056 = vadd.f32 0.0, %v1055
      %v1057 = vpop.f32.mrf.mxu0
      %v1058 = vadd.f32 0.0, %v1057
      %1059 = vmatmul.bf16.gmra.mxu0 %v965
      %v1060 = vpop.f32.mrf.mxu0
      %v1061 = vadd.f32 0.0, %v1060
      %v1062 = vpop.f32.mrf.mxu0
      %v1063 = vadd.f32 0.0, %v1062
      %1064 = vmatmul.bf16.gmra.mxu0 %v968
      %v1065 = vpop.f32.mrf.mxu0
      %v1066 = vadd.f32 0.0, %v1065
      %v1067 = vpop.f32.mrf.mxu0
      %v1068 = vadd.f32 0.0, %v1067
      %1069 = vmatmul.bf16.gmra.mxu0 %v971
      %v1070 = vpop.f32.mrf.mxu0
      %v1071 = vadd.f32 0.0, %v1070
      %v1072 = vpop.f32.mrf.mxu0
      %v1073 = vadd.f32 0.0, %v1072
      %1074 = vdwg.mxu0
      %v1075 = vadd.f32 %v602, %v986
      %v1076 = vadd.f32 %v603, %v988
      %v1077 = vadd.f32 %v604, %v991
      %v1078 = vadd.f32 %v605, %v993
      %v1079 = vadd.f32 %v606, %v996
      %v1080 = vadd.f32 %v607, %v998
      %v1081 = vadd.f32 %v608, %v1001
      %v1082 = vadd.f32 %v609, %v1003
      %v1083 = vadd.f32 %v610, %v1006
      %v1084 = vadd.f32 %v611, %v1008
      %v1085 = vadd.f32 %v612, %v1011
      %v1086 = vadd.f32 %v613, %v1013
      %v1087 = vadd.f32 %v614, %v1016
      %v1088 = vadd.f32 %v615, %v1018
      %v1089 = vadd.f32 %v616, %v1021
      %v1090 = vadd.f32 %v617, %v1023
      %v1091 = vadd.f32 %v618, %v1026
      %v1092 = vadd.f32 %v619, %v1028
      %v1093 = vadd.f32 %v620, %v1031
      %v1094 = vadd.f32 %v621, %v1033
      %v1095 = vadd.f32 %v622, %v1036
      %v1096 = vadd.f32 %v623, %v1038
      %v1097 = vadd.f32 %v624, %v1041
      %v1098 = vadd.f32 %v625, %v1043
      %v1099 = vadd.f32 %v626, %v1046
      %v1100 = vadd.f32 %v627, %v1048
      %v1101 = vadd.f32 %v628, %v1051
      %v1102 = vadd.f32 %v629, %v1053
      %v1103 = vadd.f32 %v630, %v1056
      %v1104 = vadd.f32 %v631, %v1058
      %v1105 = vadd.f32 %v632, %v1061
      %v1106 = vadd.f32 %v633, %v1063
      %v1107 = vadd.f32 %v634, %v1066
      %v1108 = vadd.f32 %v635, %v1068
      %v1109 = vadd.f32 %v636, %v1071
      %v1110 = vadd.f32 %v637, %v1073
      %1111 = vst.msk [vmem:[#allocation2] sm:$0xff] %vm172, %v1075
      %1112 = vst.msk [vmem:[#allocation2 + $0x8] sm:$0xff] %vm172, %v1076
      %1113 = vst.msk [vmem:[#allocation2 + $0x10] sm:$0xff] %vm172, %v1077
      %1114 = vst.msk [vmem:[#allocation2 + $0x18] sm:$0xff] %vm172, %v1078
      %1115 = vst.msk [vmem:[#allocation2 + $0x20] sm:$0xff] %vm172, %v1079
      %1116 = vst.msk [vmem:[#allocation2 + $0x28] sm:$0xff] %vm172, %v1080
      %1117 = vst.msk [vmem:[#allocation2 + $0x30] sm:$0xff] %vm172, %v1081
      %1118 = vst.msk [vmem:[#allocation2 + $0x38] sm:$0xff] %vm172, %v1082
      %1119 = vst.msk [vmem:[#allocation2 + $0x40] sm:$0xff] %vm172, %v1083
      %1120 = vst.msk [vmem:[#allocation2 + $0x48] sm:$0xff] %vm172, %v1084
      %1121 = vst.msk [vmem:[#allocation2 + $0x50] sm:$0xff] %vm172, %v1085
      %1122 = vst.msk [vmem:[#allocation2 + $0x58] sm:$0xff] %vm172, %v1086
      %1123 = vst.msk [vmem:[#allocation2 + $0x60] sm:$0xff] %vm172, %v1087
      %1124 = vst.msk [vmem:[#allocation2 + $0x68] sm:$0xff] %vm172, %v1088
      %1125 = vst.msk [vmem:[#allocation2 + $0x70] sm:$0xff] %vm172, %v1089
      %1126 = vst.msk [vmem:[#allocation2 + $0x78] sm:$0xff] %vm172, %v1090
      %1127 = vst.msk [vmem:[#allocation2 + $0x80] sm:$0xff] %vm172, %v1091
      %1128 = vst.msk [vmem:[#allocation2 + $0x88] sm:$0xff] %vm172, %v1092
      %1129 = vst.msk [vmem:[#allocation2 + $0x90] sm:$0xff] %vm172, %v1093
      %1130 = vst.msk [vmem:[#allocation2 + $0x98] sm:$0xff] %vm172, %v1094
      %1131 = vst.msk [vmem:[#allocation2 + $0xa0] sm:$0xff] %vm172, %v1095
      %1132 = vst.msk [vmem:[#allocation2 + $0xa8] sm:$0xff] %vm172, %v1096
      %1133 = vst.msk [vmem:[#allocation2 + $0xb0] sm:$0xff] %vm172, %v1097
      %1134 = vst.msk [vmem:[#allocation2 + $0xb8] sm:$0xff] %vm172, %v1098
      %1135 = vst.msk [vmem:[#allocation2 + $0xc0] sm:$0xff] %vm172, %v1099
      %1136 = vst.msk [vmem:[#allocation2 + $0xc8] sm:$0xff] %vm172, %v1100
      %1137 = vst.msk [vmem:[#allocation2 + $0xd0] sm:$0xff] %vm172, %v1101
      %1138 = vst.msk [vmem:[#allocation2 + $0xd8] sm:$0xff] %vm172, %v1102
      %1139 = vst.msk [vmem:[#allocation2 + $0xe0] sm:$0xff] %vm172, %v1103
      %1140 = vst.msk [vmem:[#allocation2 + $0xe8] sm:$0xff] %vm172, %v1104
      %1141 = vst.msk [vmem:[#allocation2 + $0xf0] sm:$0xff] %vm172, %v1105
      %1142 = vst.msk [vmem:[#allocation2 + $0xf8] sm:$0xff] %vm172, %v1106
      %1143 = vst.msk [vmem:[#allocation2 + $0x100] sm:$0xff] %vm172, %v1107
      %1144 = vst.msk [vmem:[#allocation2 + $0x108] sm:$0xff] %vm172, %v1108
      %1145 = vst.msk [vmem:[#allocation2 + $0x110] sm:$0xff] %vm172, %v1109
      %1146 = vst.msk [vmem:[#allocation2 + $0x118] sm:$0xff] %vm172, %v1110
      %v1147 = vld [vmem:[#allocation2] sm:$0xff]
      %v1148 = vld [vmem:[#allocation2 + $0x8] sm:$0xff]
      %v1149 = vld [vmem:[#allocation2 + $0x10] sm:$0xff]
      %v1150 = vld [vmem:[#allocation2 + $0x18] sm:$0xff]
      %v1151 = vld [vmem:[#allocation2 + $0x20] sm:$0xff]
      %v1152 = vld [vmem:[#allocation2 + $0x28] sm:$0xff]
      %v1153 = vld [vmem:[#allocation2 + $0x30] sm:$0xff]
      %v1154 = vld [vmem:[#allocation2 + $0x38] sm:$0xff]
      %v1155 = vld [vmem:[#allocation2 + $0x40] sm:$0xff]
      %v1156 = vld [vmem:[#allocation2 + $0x48] sm:$0xff]
      %v1157 = vld [vmem:[#allocation2 + $0x50] sm:$0xff]
      %v1158 = vld [vmem:[#allocation2 + $0x58] sm:$0xff]
      %v1159 = vld [vmem:[#allocation2 + $0x60] sm:$0xff]
      %v1160 = vld [vmem:[#allocation2 + $0x68] sm:$0xff]
      %v1161 = vld [vmem:[#allocation2 + $0x70] sm:$0xff]
      %v1162 = vld [vmem:[#allocation2 + $0x78] sm:$0xff]
      %v1163 = vld [vmem:[#allocation2 + $0x80] sm:$0xff]
      %v1164 = vld [vmem:[#allocation2 + $0x88] sm:$0xff]
      %v1165 = vld [vmem:[#allocation2 + $0x90] sm:$0xff]
      %v1166 = vld [vmem:[#allocation2 + $0x98] sm:$0xff]
      %v1167 = vld [vmem:[#allocation2 + $0xa0] sm:$0xff]
      %v1168 = vld [vmem:[#allocation2 + $0xa8] sm:$0xff]
      %v1169 = vld [vmem:[#allocation2 + $0xb0] sm:$0xff]
      %v1170 = vld [vmem:[#allocation2 + $0xb8] sm:$0xff]
      %v1171 = vld [vmem:[#allocation2 + $0xc0] sm:$0xff]
      %v1172 = vld [vmem:[#allocation2 + $0xc8] sm:$0xff]
      %v1173 = vld [vmem:[#allocation2 + $0xd0] sm:$0xff]
      %v1174 = vld [vmem:[#allocation2 + $0xd8] sm:$0xff]
      %v1175 = vld [vmem:[#allocation2 + $0xe0] sm:$0xff]
      %v1176 = vld [vmem:[#allocation2 + $0xe8] sm:$0xff]
      %v1177 = vld [vmem:[#allocation2 + $0xf0] sm:$0xff]
      %v1178 = vld [vmem:[#allocation2 + $0xf8] sm:$0xff]
      %v1179 = vld [vmem:[#allocation2 + $0x100] sm:$0xff]
      %v1180 = vld [vmem:[#allocation2 + $0x108] sm:$0xff]
      %v1181 = vld [vmem:[#allocation2 + $0x110] sm:$0xff]
      %v1182 = vld [vmem:[#allocation2 + $0x118] sm:$0xff]
      %v1183 = vld [vmem:[%s165] sm:$0xe]
      %v1184 = vld [vmem:[%s165 + $0x4] sm:$0xf]
      %v1185 = vld [vmem:[%s165 + $0x8] sm:$0xf]
      %v1186 = vld [vmem:[%s165 + $0xc] sm:$0xf]
      %v1187 = vld [vmem:[%s165 + $0x10] sm:$0xf]
      %v1188 = vld [vmem:[%s165 + $0x14] sm:$0xf]
      %v1189 = vld [vmem:[%s165 + $0x18] sm:$0xf]
      %v1190 = vld [vmem:[%s165 + $0x1c] sm:$0xf]
      %v1191 = vld [vmem:[%s165 + $0x20] sm:$0xf]
      %v1192 = vld [vmem:[%s165 + $0x24] sm:$0xf]
      %v1193 = vld [vmem:[%s165 + $0x28] sm:$0xf]
      %v1194 = vld [vmem:[%s165 + $0x2c] sm:$0xf]
      %v1195 = vld [vmem:[%s165 + $0x30] sm:$0xf]
      %v1196 = vld [vmem:[%s165 + $0x34] sm:$0xf]
      %v1197 = vld [vmem:[%s165 + $0x38] sm:$0xf]
      %v1198 = vld [vmem:[%s165 + $0x3c] sm:$0xf]
      %v1199 = vld [vmem:[%s165 + $0x40] sm:$0xf]
      %v1200 = vld [vmem:[%s165 + $0x44] sm:$0xf]
      %v1201 = vld [vmem:[%s165 + $0x48] sm:$0xf]
      %v1202 = vld [vmem:[%s165 + $0x4c] sm:$0xf]
      %v1203 = vld [vmem:[%s165 + $0x50] sm:$0xf]
      %v1204 = vld [vmem:[%s165 + $0x54] sm:$0xf]
      %v1205 = vld [vmem:[%s165 + $0x58] sm:$0xf]
      %v1206 = vld [vmem:[%s165 + $0x5c] sm:$0xf]
      %v1207 = vld [vmem:[%s165 + $0x60] sm:$0xf]
      %v1208 = vld [vmem:[%s165 + $0x64] sm:$0xf]
      %v1209 = vld [vmem:[%s165 + $0x68] sm:$0xf]
      %v1210 = vld [vmem:[%s165 + $0x6c] sm:$0xf]
      %v1211 = vld [vmem:[%s165 + $0x70] sm:$0xf]
      %v1212 = vld [vmem:[%s165 + $0x74] sm:$0xf]
      %v1213 = vld [vmem:[%s165 + $0x78] sm:$0xf]
      %v1214 = vld [vmem:[%s165 + $0x7c] sm:$0xf]
      %v1215 = vld [vmem:[%s165 + $0x80] sm:$0xf]
      %v1216 = vld [vmem:[%s165 + $0x84] sm:$0xf]
      %v1217 = vld [vmem:[%s165 + $0x88] sm:$0xf]
      %v1218 = vld [vmem:[%s165 + $0x8c] sm:$0xf]
      %v1219 = vld [vmem:[%s165 + $0x90] sm:$0x1]
      %s1220 = scalar_lea.vmem %s1, 4
      %v1221 = vld [vmem:[%s1220] sm:$0x3]
      %v1259 = vunpack.c.l.b16 %v1183
      %v1260 = vunpack.c.l.b16 %v1184
      %v1261 = vunpack.c.l.b16 %v1185
      %v1262 = vunpack.c.l.b16 %v1186
      %v1263 = vunpack.c.l.b16 %v1187
      %v1264 = vunpack.c.l.b16 %v1188
      %v1265 = vunpack.c.l.b16 %v1189
      %v1266 = vunpack.c.l.b16 %v1190
      %v1267 = vunpack.c.l.b16 %v1191
      %v1268 = vunpack.c.l.b16 %v1192
      %v1269 = vunpack.c.l.b16 %v1193
      %v1270 = vunpack.c.l.b16 %v1194
      %v1271 = vunpack.c.l.b16 %v1195
      %v1272 = vunpack.c.l.b16 %v1196
      %v1273 = vunpack.c.l.b16 %v1197
      %v1274 = vunpack.c.l.b16 %v1198
      %v1275 = vunpack.c.l.b16 %v1199
      %v1276 = vunpack.c.l.b16 %v1200
      %v1277 = vunpack.c.l.b16 %v1201
      %v1278 = vunpack.c.l.b16 %v1202
      %v1279 = vunpack.c.l.b16 %v1203
      %v1280 = vunpack.c.l.b16 %v1204
      %v1281 = vunpack.c.l.b16 %v1205
      %v1282 = vunpack.c.l.b16 %v1206
      %v1283 = vunpack.c.l.b16 %v1207
      %v1284 = vunpack.c.l.b16 %v1208
      %v1285 = vunpack.c.l.b16 %v1209
      %v1286 = vunpack.c.l.b16 %v1210
      %v1287 = vunpack.c.l.b16 %v1211
      %v1288 = vunpack.c.l.b16 %v1212
      %v1289 = vunpack.c.l.b16 %v1213
      %v1290 = vunpack.c.l.b16 %v1214
      %v1291 = vunpack.c.l.b16 %v1215
      %v1292 = vunpack.c.l.b16 %v1216
      %v1293 = vunpack.c.l.b16 %v1217
      %v1294 = vunpack.c.l.b16 %v1218
      %v1295 = vunpack.c.l.b16 %v1219
      %v1296 = vpack.c.b16 %v1260, %v1259
      %v1297 = vpack.c.b16 %v1262, %v1261
      %v1298 = vpack.c.b16 %v1264, %v1263
      %v1299 = vpack.c.b16 %v1266, %v1265
      %v1300 = vpack.c.b16 %v1268, %v1267
      %v1301 = vpack.c.b16 %v1270, %v1269
      %v1302 = vpack.c.b16 %v1272, %v1271
      %v1303 = vpack.c.b16 %v1274, %v1273
      %v1304 = vpack.c.b16 %v1276, %v1275
      %v1305 = vpack.c.b16 %v1278, %v1277
      %v1306 = vpack.c.b16 %v1280, %v1279
      %v1307 = vpack.c.b16 %v1282, %v1281
      %v1308 = vpack.c.b16 %v1284, %v1283
      %v1309 = vpack.c.b16 %v1286, %v1285
      %v1310 = vpack.c.b16 %v1288, %v1287
      %v1311 = vpack.c.b16 %v1290, %v1289
      %v1312 = vpack.c.b16 %v1292, %v1291
      %v1313 = vpack.c.b16 %v1294, %v1293
      %v1314 = vpack.c.b16 %v1295, %v1295
      %vm1315 = vcmask 1046528
      %v1316 = vrot.slane %v1296, 1
      %v1317 = vrot.slane %v1297, 1
      %v1318 = vsel %vm1315, %v1316, %v1317
      %v1319 = vrot.slane %v1298, 1
      %v1320 = vsel %vm1315, %v1317, %v1319
      %v1321 = vrot.slane %v1299, 1
      %v1322 = vsel %vm1315, %v1319, %v1321
      %v1323 = vrot.slane %v1300, 1
      %v1324 = vsel %vm1315, %v1321, %v1323
      %v1325 = vrot.slane %v1301, 1
      %v1326 = vsel %vm1315, %v1323, %v1325
      %v1327 = vrot.slane %v1302, 1
      %v1328 = vsel %vm1315, %v1325, %v1327
      %v1329 = vrot.slane %v1303, 1
      %v1330 = vsel %vm1315, %v1327, %v1329
      %v1331 = vrot.slane %v1304, 1
      %v1332 = vsel %vm1315, %v1329, %v1331
      %v1333 = vrot.slane %v1305, 1
      %v1334 = vsel %vm1315, %v1331, %v1333
      %v1335 = vrot.slane %v1306, 1
      %v1336 = vsel %vm1315, %v1333, %v1335
      %v1337 = vrot.slane %v1307, 1
      %v1338 = vsel %vm1315, %v1335, %v1337
      %v1339 = vrot.slane %v1308, 1
      %v1340 = vsel %vm1315, %v1337, %v1339
      %v1341 = vrot.slane %v1309, 1
      %v1342 = vsel %vm1315, %v1339, %v1341
      %v1343 = vrot.slane %v1310, 1
      %v1344 = vsel %vm1315, %v1341, %v1343
      %v1345 = vrot.slane %v1311, 1
      %v1346 = vsel %vm1315, %v1343, %v1345
      %v1347 = vrot.slane %v1312, 1
      %v1348 = vsel %vm1315, %v1345, %v1347
      %v1349 = vrot.slane %v1313, 1
      %v1350 = vsel %vm1315, %v1347, %v1349
      %v1351 = vrot.slane %v1314, 1
      %v1352 = vsel %vm1315, %v1349, %v1351
      %v1354 = vsel %vm372, %v1318, 0
      %v1357 = vsel %vm372, %v1320, 0
      %v1360 = vsel %vm372, %v1322, 0
      %v1363 = vsel %vm372, %v1324, 0
      %v1366 = vsel %vm372, %v1326, 0
      %v1369 = vsel %vm372, %v1328, 0
      %v1372 = vsel %vm372, %v1330, 0
      %v1375 = vsel %vm372, %v1332, 0
      %v1378 = vsel %vm372, %v1334, 0
      %v1381 = vsel %vm372, %v1336, 0
      %v1384 = vsel %vm372, %v1338, 0
      %v1387 = vsel %vm372, %v1340, 0
      %v1390 = vsel %vm372, %v1342, 0
      %v1393 = vsel %vm372, %v1344, 0
      %v1396 = vsel %vm372, %v1346, 0
      %v1399 = vsel %vm372, %v1348, 0
      %v1402 = vsel %vm372, %v1350, 0
      %v1405 = vsel %vm372, %v1352, 0
      %v1408 = vsel %vm427, %v1221, 0
      %1410 = vmatpush.bf16.msra.mxu0 0
      %1411 = vmatpush.bf16.msra.mxu0 0
      %1412 = vmatpush.bf16.msra.mxu0 0
      %1413 = vmatpush.bf16.msra.mxu0 0
      %1414 = vmatpush.bf16.msra.mxu0 0
      %1415 = vmatpush.bf16.msra.mxu0 0
      %1416 = vmatpush.bf16.msra.mxu0 0
      %1417 = vmatpush.bf16.msra.mxu0 %v1408
      %1418 = vmatmul.bf16.gmra.mxu0 %v1354
      %v1419 = vpop.f32.mrf.mxu0
      %v1420 = vadd.f32 0.0, %v1419
      %v1421 = vpop.f32.mrf.mxu0
      %v1422 = vadd.f32 0.0, %v1421
      %1423 = vmatmul.bf16.gmra.mxu0 %v1357
      %v1424 = vpop.f32.mrf.mxu0
      %v1425 = vadd.f32 0.0, %v1424
      %v1426 = vpop.f32.mrf.mxu0
      %v1427 = vadd.f32 0.0, %v1426
      %1428 = vmatmul.bf16.gmra.mxu0 %v1360
      %v1429 = vpop.f32.mrf.mxu0
      %v1430 = vadd.f32 0.0, %v1429
      %v1431 = vpop.f32.mrf.mxu0
      %v1432 = vadd.f32 0.0, %v1431
      %1433 = vmatmul.bf16.gmra.mxu0 %v1363
      %v1434 = vpop.f32.mrf.mxu0
      %v1435 = vadd.f32 0.0, %v1434
      %v1436 = vpop.f32.mrf.mxu0
      %v1437 = vadd.f32 0.0, %v1436
      %1438 = vmatmul.bf16.gmra.mxu0 %v1366
      %v1439 = vpop.f32.mrf.mxu0
      %v1440 = vadd.f32 0.0, %v1439
      %v1441 = vpop.f32.mrf.mxu0
      %v1442 = vadd.f32 0.0, %v1441
      %1443 = vmatmul.bf16.gmra.mxu0 %v1369
      %v1444 = vpop.f32.mrf.mxu0
      %v1445 = vadd.f32 0.0, %v1444
      %v1446 = vpop.f32.mrf.mxu0
      %v1447 = vadd.f32 0.0, %v1446
      %1448 = vmatmul.bf16.gmra.mxu0 %v1372
      %v1449 = vpop.f32.mrf.mxu0
      %v1450 = vadd.f32 0.0, %v1449
      %v1451 = vpop.f32.mrf.mxu0
      %v1452 = vadd.f32 0.0, %v1451
      %1453 = vmatmul.bf16.gmra.mxu0 %v1375
      %v1454 = vpop.f32.mrf.mxu0
      %v1455 = vadd.f32 0.0, %v1454
      %v1456 = vpop.f32.mrf.mxu0
      %v1457 = vadd.f32 0.0, %v1456
      %1458 = vmatmul.bf16.gmra.mxu0 %v1378
      %v1459 = vpop.f32.mrf.mxu0
      %v1460 = vadd.f32 0.0, %v1459
      %v1461 = vpop.f32.mrf.mxu0
      %v1462 = vadd.f32 0.0, %v1461
      %1463 = vmatmul.bf16.gmra.mxu0 %v1381
      %v1464 = vpop.f32.mrf.mxu0
      %v1465 = vadd.f32 0.0, %v1464
      %v1466 = vpop.f32.mrf.mxu0
      %v1467 = vadd.f32 0.0, %v1466
      %1468 = vmatmul.bf16.gmra.mxu0 %v1384
      %v1469 = vpop.f32.mrf.mxu0
      %v1470 = vadd.f32 0.0, %v1469
      %v1471 = vpop.f32.mrf.mxu0
      %v1472 = vadd.f32 0.0, %v1471
      %1473 = vmatmul.bf16.gmra.mxu0 %v1387
      %v1474 = vpop.f32.mrf.mxu0
      %v1475 = vadd.f32 0.0, %v1474
      %v1476 = vpop.f32.mrf.mxu0
      %v1477 = vadd.f32 0.0, %v1476
      %1478 = vmatmul.bf16.gmra.mxu0 %v1390
      %v1479 = vpop.f32.mrf.mxu0
      %v1480 = vadd.f32 0.0, %v1479
      %v1481 = vpop.f32.mrf.mxu0
      %v1482 = vadd.f32 0.0, %v1481
      %1483 = vmatmul.bf16.gmra.mxu0 %v1393
      %v1484 = vpop.f32.mrf.mxu0
      %v1485 = vadd.f32 0.0, %v1484
      %v1486 = vpop.f32.mrf.mxu0
      %v1487 = vadd.f32 0.0, %v1486
      %1488 = vmatmul.bf16.gmra.mxu0 %v1396
      %v1489 = vpop.f32.mrf.mxu0
      %v1490 = vadd.f32 0.0, %v1489
      %v1491 = vpop.f32.mrf.mxu0
      %v1492 = vadd.f32 0.0, %v1491
      %1493 = vmatmul.bf16.gmra.mxu0 %v1399
      %v1494 = vpop.f32.mrf.mxu0
      %v1495 = vadd.f32 0.0, %v1494
      %v1496 = vpop.f32.mrf.mxu0
      %v1497 = vadd.f32 0.0, %v1496
      %1498 = vmatmul.bf16.gmra.mxu0 %v1402
      %v1499 = vpop.f32.mrf.mxu0
      %v1500 = vadd.f32 0.0, %v1499
      %v1501 = vpop.f32.mrf.mxu0
      %v1502 = vadd.f32 0.0, %v1501
      %1503 = vmatmul.bf16.gmra.mxu0 %v1405
      %v1504 = vpop.f32.mrf.mxu0
      %v1505 = vadd.f32 0.0, %v1504
      %v1506 = vpop.f32.mrf.mxu0
      %v1507 = vadd.f32 0.0, %v1506
      %1508 = vdwg.mxu0
      %v1509 = vadd.f32 %v1147, %v1420
      %v1510 = vadd.f32 %v1148, %v1422
      %v1511 = vadd.f32 %v1149, %v1425
      %v1512 = vadd.f32 %v1150, %v1427
      %v1513 = vadd.f32 %v1151, %v1430
      %v1514 = vadd.f32 %v1152, %v1432
      %v1515 = vadd.f32 %v1153, %v1435
      %v1516 = vadd.f32 %v1154, %v1437
      %v1517 = vadd.f32 %v1155, %v1440
      %v1518 = vadd.f32 %v1156, %v1442
      %v1519 = vadd.f32 %v1157, %v1445
      %v1520 = vadd.f32 %v1158, %v1447
      %v1521 = vadd.f32 %v1159, %v1450
      %v1522 = vadd.f32 %v1160, %v1452
      %v1523 = vadd.f32 %v1161, %v1455
      %v1524 = vadd.f32 %v1162, %v1457
      %v1525 = vadd.f32 %v1163, %v1460
      %v1526 = vadd.f32 %v1164, %v1462
      %v1527 = vadd.f32 %v1165, %v1465
      %v1528 = vadd.f32 %v1166, %v1467
      %v1529 = vadd.f32 %v1167, %v1470
      %v1530 = vadd.f32 %v1168, %v1472
      %v1531 = vadd.f32 %v1169, %v1475
      %v1532 = vadd.f32 %v1170, %v1477
      %v1533 = vadd.f32 %v1171, %v1480
      %v1534 = vadd.f32 %v1172, %v1482
      %v1535 = vadd.f32 %v1173, %v1485
      %v1536 = vadd.f32 %v1174, %v1487
      %v1537 = vadd.f32 %v1175, %v1490
      %v1538 = vadd.f32 %v1176, %v1492
      %v1539 = vadd.f32 %v1177, %v1495
      %v1540 = vadd.f32 %v1178, %v1497
      %v1541 = vadd.f32 %v1179, %v1500
      %v1542 = vadd.f32 %v1180, %v1502
      %v1543 = vadd.f32 %v1181, %v1505
      %v1544 = vadd.f32 %v1182, %v1507
      %1545 = vst.msk [vmem:[#allocation2] sm:$0xff] %vm172, %v1509
      %1546 = vst.msk [vmem:[#allocation2 + $0x8] sm:$0xff] %vm172, %v1510
      %1547 = vst.msk [vmem:[#allocation2 + $0x10] sm:$0xff] %vm172, %v1511
      %1548 = vst.msk [vmem:[#allocation2 + $0x18] sm:$0xff] %vm172, %v1512
      %1549 = vst.msk [vmem:[#allocation2 + $0x20] sm:$0xff] %vm172, %v1513
      %1550 = vst.msk [vmem:[#allocation2 + $0x28] sm:$0xff] %vm172, %v1514
      %1551 = vst.msk [vmem:[#allocation2 + $0x30] sm:$0xff] %vm172, %v1515
      %1552 = vst.msk [vmem:[#allocation2 + $0x38] sm:$0xff] %vm172, %v1516
      %1553 = vst.msk [vmem:[#allocation2 + $0x40] sm:$0xff] %vm172, %v1517
      %1554 = vst.msk [vmem:[#allocation2 + $0x48] sm:$0xff] %vm172, %v1518
      %1555 = vst.msk [vmem:[#allocation2 + $0x50] sm:$0xff] %vm172, %v1519
      %1556 = vst.msk [vmem:[#allocation2 + $0x58] sm:$0xff] %vm172, %v1520
      %1557 = vst.msk [vmem:[#allocation2 + $0x60] sm:$0xff] %vm172, %v1521
      %1558 = vst.msk [vmem:[#allocation2 + $0x68] sm:$0xff] %vm172, %v1522
      %1559 = vst.msk [vmem:[#allocation2 + $0x70] sm:$0xff] %vm172, %v1523
      %1560 = vst.msk [vmem:[#allocation2 + $0x78] sm:$0xff] %vm172, %v1524
      %1561 = vst.msk [vmem:[#allocation2 + $0x80] sm:$0xff] %vm172, %v1525
      %1562 = vst.msk [vmem:[#allocation2 + $0x88] sm:$0xff] %vm172, %v1526
      %1563 = vst.msk [vmem:[#allocation2 + $0x90] sm:$0xff] %vm172, %v1527
      %1564 = vst.msk [vmem:[#allocation2 + $0x98] sm:$0xff] %vm172, %v1528
      %1565 = vst.msk [vmem:[#allocation2 + $0xa0] sm:$0xff] %vm172, %v1529
      %1566 = vst.msk [vmem:[#allocation2 + $0xa8] sm:$0xff] %vm172, %v1530
      %1567 = vst.msk [vmem:[#allocation2 + $0xb0] sm:$0xff] %vm172, %v1531
      %1568 = vst.msk [vmem:[#allocation2 + $0xb8] sm:$0xff] %vm172, %v1532
      %1569 = vst.msk [vmem:[#allocation2 + $0xc0] sm:$0xff] %vm172, %v1533
      %1570 = vst.msk [vmem:[#allocation2 + $0xc8] sm:$0xff] %vm172, %v1534
      %1571 = vst.msk [vmem:[#allocation2 + $0xd0] sm:$0xff] %vm172, %v1535
      %1572 = vst.msk [vmem:[#allocation2 + $0xd8] sm:$0xff] %vm172, %v1536
      %1573 = vst.msk [vmem:[#allocation2 + $0xe0] sm:$0xff] %vm172, %v1537
      %1574 = vst.msk [vmem:[#allocation2 + $0xe8] sm:$0xff] %vm172, %v1538
      %1575 = vst.msk [vmem:[#allocation2 + $0xf0] sm:$0xff] %vm172, %v1539
      %1576 = vst.msk [vmem:[#allocation2 + $0xf8] sm:$0xff] %vm172, %v1540
      %1577 = vst.msk [vmem:[#allocation2 + $0x100] sm:$0xff] %vm172, %v1541
      %1578 = vst.msk [vmem:[#allocation2 + $0x108] sm:$0xff] %vm172, %v1542
      %1579 = vst.msk [vmem:[#allocation2 + $0x110] sm:$0xff] %vm172, %v1543
      %1580 = vst.msk [vmem:[#allocation2 + $0x118] sm:$0xff] %vm172, %v1544
      %v1581 = vld [vmem:[#allocation2] sm:$0xff]
      %v1582 = vld [vmem:[#allocation2 + $0x8] sm:$0xff]
      %v1583 = vld [vmem:[#allocation2 + $0x10] sm:$0xff]
      %v1584 = vld [vmem:[#allocation2 + $0x18] sm:$0xff]
      %v1585 = vld [vmem:[#allocation2 + $0x20] sm:$0xff]
      %v1586 = vld [vmem:[#allocation2 + $0x28] sm:$0xff]
      %v1587 = vld [vmem:[#allocation2 + $0x30] sm:$0xff]
      %v1588 = vld [vmem:[#allocation2 + $0x38] sm:$0xff]
      %v1589 = vld [vmem:[#allocation2 + $0x40] sm:$0xff]
      %v1590 = vld [vmem:[#allocation2 + $0x48] sm:$0xff]
      %v1591 = vld [vmem:[#allocation2 + $0x50] sm:$0xff]
      %v1592 = vld [vmem:[#allocation2 + $0x58] sm:$0xff]
      %v1593 = vld [vmem:[#allocation2 + $0x60] sm:$0xff]
      %v1594 = vld [vmem:[#allocation2 + $0x68] sm:$0xff]
      %v1595 = vld [vmem:[#allocation2 + $0x70] sm:$0xff]
      %v1596 = vld [vmem:[#allocation2 + $0x78] sm:$0xff]
      %v1597 = vld [vmem:[#allocation2 + $0x80] sm:$0xff]
      %v1598 = vld [vmem:[#allocation2 + $0x88] sm:$0xff]
      %v1599 = vld [vmem:[#allocation2 + $0x90] sm:$0xff]
      %v1600 = vld [vmem:[#allocation2 + $0x98] sm:$0xff]
      %v1601 = vld [vmem:[#allocation2 + $0xa0] sm:$0xff]
      %v1602 = vld [vmem:[#allocation2 + $0xa8] sm:$0xff]
      %v1603 = vld [vmem:[#allocation2 + $0xb0] sm:$0xff]
      %v1604 = vld [vmem:[#allocation2 + $0xb8] sm:$0xff]
      %v1605 = vld [vmem:[#allocation2 + $0xc0] sm:$0xff]
      %v1606 = vld [vmem:[#allocation2 + $0xc8] sm:$0xff]
      %v1607 = vld [vmem:[#allocation2 + $0xd0] sm:$0xff]
      %v1608 = vld [vmem:[#allocation2 + $0xd8] sm:$0xff]
      %v1609 = vld [vmem:[#allocation2 + $0xe0] sm:$0xff]
      %v1610 = vld [vmem:[#allocation2 + $0xe8] sm:$0xff]
      %v1611 = vld [vmem:[#allocation2 + $0xf0] sm:$0xff]
      %v1612 = vld [vmem:[#allocation2 + $0xf8] sm:$0xff]
      %v1613 = vld [vmem:[#allocation2 + $0x100] sm:$0xff]
      %v1614 = vld [vmem:[#allocation2 + $0x108] sm:$0xff]
      %v1615 = vld [vmem:[#allocation2 + $0x110] sm:$0xff]
      %v1616 = vld [vmem:[#allocation2 + $0x118] sm:$0xff]
      %v1617 = vld [vmem:[%s165 + $0x8] sm:$0xe]
      %v1618 = vld [vmem:[%s165 + $0xc] sm:$0xf]
      %v1619 = vld [vmem:[%s165 + $0x10] sm:$0xf]
      %v1620 = vld [vmem:[%s165 + $0x14] sm:$0xf]
      %v1621 = vld [vmem:[%s165 + $0x18] sm:$0xf]
      %v1622 = vld [vmem:[%s165 + $0x1c] sm:$0xf]
      %v1623 = vld [vmem:[%s165 + $0x20] sm:$0xf]
      %v1624 = vld [vmem:[%s165 + $0x24] sm:$0xf]
      %v1625 = vld [vmem:[%s165 + $0x28] sm:$0xf]
      %v1626 = vld [vmem:[%s165 + $0x2c] sm:$0xf]
      %v1627 = vld [vmem:[%s165 + $0x30] sm:$0xf]
      %v1628 = vld [vmem:[%s165 + $0x34] sm:$0xf]
      %v1629 = vld [vmem:[%s165 + $0x38] sm:$0xf]
      %v1630 = vld [vmem:[%s165 + $0x3c] sm:$0xf]
      %v1631 = vld [vmem:[%s165 + $0x40] sm:$0xf]
      %v1632 = vld [vmem:[%s165 + $0x44] sm:$0xf]
      %v1633 = vld [vmem:[%s165 + $0x48] sm:$0xf]
      %v1634 = vld [vmem:[%s165 + $0x4c] sm:$0xf]
      %v1635 = vld [vmem:[%s165 + $0x50] sm:$0xf]
      %v1636 = vld [vmem:[%s165 + $0x54] sm:$0xf]
      %v1637 = vld [vmem:[%s165 + $0x58] sm:$0xf]
      %v1638 = vld [vmem:[%s165 + $0x5c] sm:$0xf]
      %v1639 = vld [vmem:[%s165 + $0x60] sm:$0xf]
      %v1640 = vld [vmem:[%s165 + $0x64] sm:$0xf]
      %v1641 = vld [vmem:[%s165 + $0x68] sm:$0xf]
      %v1642 = vld [vmem:[%s165 + $0x6c] sm:$0xf]
      %v1643 = vld [vmem:[%s165 + $0x70] sm:$0xf]
      %v1644 = vld [vmem:[%s165 + $0x74] sm:$0xf]
      %v1645 = vld [vmem:[%s165 + $0x78] sm:$0xf]
      %v1646 = vld [vmem:[%s165 + $0x7c] sm:$0xf]
      %v1647 = vld [vmem:[%s165 + $0x80] sm:$0xf]
      %v1648 = vld [vmem:[%s165 + $0x84] sm:$0xf]
      %v1649 = vld [vmem:[%s165 + $0x88] sm:$0xf]
      %v1650 = vld [vmem:[%s165 + $0x8c] sm:$0xf]
      %v1651 = vld [vmem:[%s165 + $0x90] sm:$0xf]
      %v1652 = vld [vmem:[%s165 + $0x94] sm:$0xf]
      %v1653 = vld [vmem:[%s165 + $0x98] sm:$0x1]
      %s1654 = scalar_lea.vmem %s1, 6
      %v1655 = vld [vmem:[%s1654] sm:$0x3]
      %v1693 = vunpack.c.l.b16 %v1617
      %v1694 = vunpack.c.l.b16 %v1618
      %v1695 = vunpack.c.l.b16 %v1619
      %v1696 = vunpack.c.l.b16 %v1620
      %v1697 = vunpack.c.l.b16 %v1621
      %v1698 = vunpack.c.l.b16 %v1622
      %v1699 = vunpack.c.l.b16 %v1623
      %v1700 = vunpack.c.l.b16 %v1624
      %v1701 = vunpack.c.l.b16 %v1625
      %v1702 = vunpack.c.l.b16 %v1626
      %v1703 = vunpack.c.l.b16 %v1627
      %v1704 = vunpack.c.l.b16 %v1628
      %v1705 = vunpack.c.l.b16 %v1629
      %v1706 = vunpack.c.l.b16 %v1630
      %v1707 = vunpack.c.l.b16 %v1631
      %v1708 = vunpack.c.l.b16 %v1632
      %v1709 = vunpack.c.l.b16 %v1633
      %v1710 = vunpack.c.l.b16 %v1634
      %v1711 = vunpack.c.l.b16 %v1635
      %v1712 = vunpack.c.l.b16 %v1636
      %v1713 = vunpack.c.l.b16 %v1637
      %v1714 = vunpack.c.l.b16 %v1638
      %v1715 = vunpack.c.l.b16 %v1639
      %v1716 = vunpack.c.l.b16 %v1640
      %v1717 = vunpack.c.l.b16 %v1641
      %v1718 = vunpack.c.l.b16 %v1642
      %v1719 = vunpack.c.l.b16 %v1643
      %v1720 = vunpack.c.l.b16 %v1644
      %v1721 = vunpack.c.l.b16 %v1645
      %v1722 = vunpack.c.l.b16 %v1646
      %v1723 = vunpack.c.l.b16 %v1647
      %v1724 = vunpack.c.l.b16 %v1648
      %v1725 = vunpack.c.l.b16 %v1649
      %v1726 = vunpack.c.l.b16 %v1650
      %v1727 = vunpack.c.l.b16 %v1651
      %v1728 = vunpack.c.l.b16 %v1652
      %v1729 = vunpack.c.l.b16 %v1653
      %v1730 = vpack.c.b16 %v1694, %v1693
      %v1731 = vpack.c.b16 %v1696, %v1695
      %v1732 = vpack.c.b16 %v1698, %v1697
      %v1733 = vpack.c.b16 %v1700, %v1699
      %v1734 = vpack.c.b16 %v1702, %v1701
      %v1735 = vpack.c.b16 %v1704, %v1703
      %v1736 = vpack.c.b16 %v1706, %v1705
      %v1737 = vpack.c.b16 %v1708, %v1707
      %v1738 = vpack.c.b16 %v1710, %v1709
      %v1739 = vpack.c.b16 %v1712, %v1711
      %v1740 = vpack.c.b16 %v1714, %v1713
      %v1741 = vpack.c.b16 %v1716, %v1715
      %v1742 = vpack.c.b16 %v1718, %v1717
      %v1743 = vpack.c.b16 %v1720, %v1719
      %v1744 = vpack.c.b16 %v1722, %v1721
      %v1745 = vpack.c.b16 %v1724, %v1723
      %v1746 = vpack.c.b16 %v1726, %v1725
      %v1747 = vpack.c.b16 %v1728, %v1727
      %v1748 = vpack.c.b16 %v1729, %v1729
      %v1749 = vrot.slane %v1730, 1
      %v1750 = vrot.slane %v1731, 1
      %v1751 = vsel %vm1315, %v1749, %v1750
      %v1752 = vrot.slane %v1732, 1
      %v1753 = vsel %vm1315, %v1750, %v1752
      %v1754 = vrot.slane %v1733, 1
      %v1755 = vsel %vm1315, %v1752, %v1754
      %v1756 = vrot.slane %v1734, 1
      %v1757 = vsel %vm1315, %v1754, %v1756
      %v1758 = vrot.slane %v1735, 1
      %v1759 = vsel %vm1315, %v1756, %v1758
      %v1760 = vrot.slane %v1736, 1
      %v1761 = vsel %vm1315, %v1758, %v1760
      %v1762 = vrot.slane %v1737, 1
      %v1763 = vsel %vm1315, %v1760, %v1762
      %v1764 = vrot.slane %v1738, 1
      %v1765 = vsel %vm1315, %v1762, %v1764
      %v1766 = vrot.slane %v1739, 1
      %v1767 = vsel %vm1315, %v1764, %v1766
      %v1768 = vrot.slane %v1740, 1
      %v1769 = vsel %vm1315, %v1766, %v1768
      %v1770 = vrot.slane %v1741, 1
      %v1771 = vsel %vm1315, %v1768, %v1770
      %v1772 = vrot.slane %v1742, 1
      %v1773 = vsel %vm1315, %v1770, %v1772
      %v1774 = vrot.slane %v1743, 1
      %v1775 = vsel %vm1315, %v1772, %v1774
      %v1776 = vrot.slane %v1744, 1
      %v1777 = vsel %vm1315, %v1774, %v1776
      %v1778 = vrot.slane %v1745, 1
      %v1779 = vsel %vm1315, %v1776, %v1778
      %v1780 = vrot.slane %v1746, 1
      %v1781 = vsel %vm1315, %v1778, %v1780
      %v1782 = vrot.slane %v1747, 1
      %v1783 = vsel %vm1315, %v1780, %v1782
      %v1784 = vrot.slane %v1748, 1
      %v1785 = vsel %vm1315, %v1782, %v1784
      %v1787 = vsel %vm372, %v1751, 0
      %v1790 = vsel %vm372, %v1753, 0
      %v1793 = vsel %vm372, %v1755, 0
      %v1796 = vsel %vm372, %v1757, 0
      %v1799 = vsel %vm372, %v1759, 0
      %v1802 = vsel %vm372, %v1761, 0
      %v1805 = vsel %vm372, %v1763, 0
      %v1808 = vsel %vm372, %v1765, 0
      %v1811 = vsel %vm372, %v1767, 0
      %v1814 = vsel %vm372, %v1769, 0
      %v1817 = vsel %vm372, %v1771, 0
      %v1820 = vsel %vm372, %v1773, 0
      %v1823 = vsel %vm372, %v1775, 0
      %v1826 = vsel %vm372, %v1777, 0
      %v1829 = vsel %vm372, %v1779, 0
      %v1832 = vsel %vm372, %v1781, 0
      %v1835 = vsel %vm372, %v1783, 0
      %v1838 = vsel %vm372, %v1785, 0
      %v1841 = vsel %vm427, %v1655, 0
      %1843 = vmatpush.bf16.msra.mxu0 0
      %1844 = vmatpush.bf16.msra.mxu0 0
      %1845 = vmatpush.bf16.msra.mxu0 0
      %1846 = vmatpush.bf16.msra.mxu0 0
      %1847 = vmatpush.bf16.msra.mxu0 0
      %1848 = vmatpush.bf16.msra.mxu0 0
      %1849 = vmatpush.bf16.msra.mxu0 0
      %1850 = vmatpush.bf16.msra.mxu0 %v1841
      %1851 = vmatmul.bf16.gmra.mxu0 %v1787
      %v1852 = vpop.f32.mrf.mxu0
      %v1853 = vadd.f32 0.0, %v1852
      %v1854 = vpop.f32.mrf.mxu0
      %v1855 = vadd.f32 0.0, %v1854
      %1856 = vmatmul.bf16.gmra.mxu0 %v1790
      %v1857 = vpop.f32.mrf.mxu0
      %v1858 = vadd.f32 0.0, %v1857
      %v1859 = vpop.f32.mrf.mxu0
      %v1860 = vadd.f32 0.0, %v1859
      %1861 = vmatmul.bf16.gmra.mxu0 %v1793
      %v1862 = vpop.f32.mrf.mxu0
      %v1863 = vadd.f32 0.0, %v1862
      %v1864 = vpop.f32.mrf.mxu0
      %v1865 = vadd.f32 0.0, %v1864
      %1866 = vmatmul.bf16.gmra.mxu0 %v1796
      %v1867 = vpop.f32.mrf.mxu0
      %v1868 = vadd.f32 0.0, %v1867
      %v1869 = vpop.f32.mrf.mxu0
      %v1870 = vadd.f32 0.0, %v1869
      %1871 = vmatmul.bf16.gmra.mxu0 %v1799
      %v1872 = vpop.f32.mrf.mxu0
      %v1873 = vadd.f32 0.0, %v1872
      %v1874 = vpop.f32.mrf.mxu0
      %v1875 = vadd.f32 0.0, %v1874
      %1876 = vmatmul.bf16.gmra.mxu0 %v1802
      %v1877 = vpop.f32.mrf.mxu0
      %v1878 = vadd.f32 0.0, %v1877
      %v1879 = vpop.f32.mrf.mxu0
      %v1880 = vadd.f32 0.0, %v1879
      %1881 = vmatmul.bf16.gmra.mxu0 %v1805
      %v1882 = vpop.f32.mrf.mxu0
      %v1883 = vadd.f32 0.0, %v1882
      %v1884 = vpop.f32.mrf.mxu0
      %v1885 = vadd.f32 0.0, %v1884
      %1886 = vmatmul.bf16.gmra.mxu0 %v1808
      %v1887 = vpop.f32.mrf.mxu0
      %v1888 = vadd.f32 0.0, %v1887
      %v1889 = vpop.f32.mrf.mxu0
      %v1890 = vadd.f32 0.0, %v1889
      %1891 = vmatmul.bf16.gmra.mxu0 %v1811
      %v1892 = vpop.f32.mrf.mxu0
      %v1893 = vadd.f32 0.0, %v1892
      %v1894 = vpop.f32.mrf.mxu0
      %v1895 = vadd.f32 0.0, %v1894
      %1896 = vmatmul.bf16.gmra.mxu0 %v1814
      %v1897 = vpop.f32.mrf.mxu0
      %v1898 = vadd.f32 0.0, %v1897
      %v1899 = vpop.f32.mrf.mxu0
      %v1900 = vadd.f32 0.0, %v1899
      %1901 = vmatmul.bf16.gmra.mxu0 %v1817
      %v1902 = vpop.f32.mrf.mxu0
      %v1903 = vadd.f32 0.0, %v1902
      %v1904 = vpop.f32.mrf.mxu0
      %v1905 = vadd.f32 0.0, %v1904
      %1906 = vmatmul.bf16.gmra.mxu0 %v1820
      %v1907 = vpop.f32.mrf.mxu0
      %v1908 = vadd.f32 0.0, %v1907
      %v1909 = vpop.f32.mrf.mxu0
      %v1910 = vadd.f32 0.0, %v1909
      %1911 = vmatmul.bf16.gmra.mxu0 %v1823
      %v1912 = vpop.f32.mrf.mxu0
      %v1913 = vadd.f32 0.0, %v1912
      %v1914 = vpop.f32.mrf.mxu0
      %v1915 = vadd.f32 0.0, %v1914
      %1916 = vmatmul.bf16.gmra.mxu0 %v1826
      %v1917 = vpop.f32.mrf.mxu0
      %v1918 = vadd.f32 0.0, %v1917
      %v1919 = vpop.f32.mrf.mxu0
      %v1920 = vadd.f32 0.0, %v1919
      %1921 = vmatmul.bf16.gmra.mxu0 %v1829
      %v1922 = vpop.f32.mrf.mxu0
      %v1923 = vadd.f32 0.0, %v1922
      %v1924 = vpop.f32.mrf.mxu0
      %v1925 = vadd.f32 0.0, %v1924
      %1926 = vmatmul.bf16.gmra.mxu0 %v1832
      %v1927 = vpop.f32.mrf.mxu0
      %v1928 = vadd.f32 0.0, %v1927
      %v1929 = vpop.f32.mrf.mxu0
      %v1930 = vadd.f32 0.0, %v1929
      %1931 = vmatmul.bf16.gmra.mxu0 %v1835
      %v1932 = vpop.f32.mrf.mxu0
      %v1933 = vadd.f32 0.0, %v1932
      %v1934 = vpop.f32.mrf.mxu0
      %v1935 = vadd.f32 0.0, %v1934
      %1936 = vmatmul.bf16.gmra.mxu0 %v1838
      %v1937 = vpop.f32.mrf.mxu0
      %v1938 = vadd.f32 0.0, %v1937
      %v1939 = vpop.f32.mrf.mxu0
      %v1940 = vadd.f32 0.0, %v1939
      %1941 = vdwg.mxu0
      %v1942 = vadd.f32 %v1581, %v1853
      %v1943 = vadd.f32 %v1582, %v1855
      %v1944 = vadd.f32 %v1583, %v1858
      %v1945 = vadd.f32 %v1584, %v1860
      %v1946 = vadd.f32 %v1585, %v1863
      %v1947 = vadd.f32 %v1586, %v1865
      %v1948 = vadd.f32 %v1587, %v1868
      %v1949 = vadd.f32 %v1588, %v1870
      %v1950 = vadd.f32 %v1589, %v1873
      %v1951 = vadd.f32 %v1590, %v1875
      %v1952 = vadd.f32 %v1591, %v1878
      %v1953 = vadd.f32 %v1592, %v1880
      %v1954 = vadd.f32 %v1593, %v1883
      %v1955 = vadd.f32 %v1594, %v1885
      %v1956 = vadd.f32 %v1595, %v1888
      %v1957 = vadd.f32 %v1596, %v1890
      %v1958 = vadd.f32 %v1597, %v1893
      %v1959 = vadd.f32 %v1598, %v1895
      %v1960 = vadd.f32 %v1599, %v1898
      %v1961 = vadd.f32 %v1600, %v1900
      %v1962 = vadd.f32 %v1601, %v1903
      %v1963 = vadd.f32 %v1602, %v1905
      %v1964 = vadd.f32 %v1603, %v1908
      %v1965 = vadd.f32 %v1604, %v1910
      %v1966 = vadd.f32 %v1605, %v1913
      %v1967 = vadd.f32 %v1606, %v1915
      %v1968 = vadd.f32 %v1607, %v1918
      %v1969 = vadd.f32 %v1608, %v1920
      %v1970 = vadd.f32 %v1609, %v1923
      %v1971 = vadd.f32 %v1610, %v1925
      %v1972 = vadd.f32 %v1611, %v1928
      %v1973 = vadd.f32 %v1612, %v1930
      %v1974 = vadd.f32 %v1613, %v1933
      %v1975 = vadd.f32 %v1614, %v1935
      %v1976 = vadd.f32 %v1615, %v1938
      %v1977 = vadd.f32 %v1616, %v1940
      %1978 = vst.msk [vmem:[#allocation2] sm:$0xff] %vm172, %v1942
      %1979 = vst.msk [vmem:[#allocation2 + $0x8] sm:$0xff] %vm172, %v1943
      %1980 = vst.msk [vmem:[#allocation2 + $0x10] sm:$0xff] %vm172, %v1944
      %1981 = vst.msk [vmem:[#allocation2 + $0x18] sm:$0xff] %vm172, %v1945
      %1982 = vst.msk [vmem:[#allocation2 + $0x20] sm:$0xff] %vm172, %v1946
      %1983 = vst.msk [vmem:[#allocation2 + $0x28] sm:$0xff] %vm172, %v1947
      %1984 = vst.msk [vmem:[#allocation2 + $0x30] sm:$0xff] %vm172, %v1948
      %1985 = vst.msk [vmem:[#allocation2 + $0x38] sm:$0xff] %vm172, %v1949
      %1986 = vst.msk [vmem:[#allocation2 + $0x40] sm:$0xff] %vm172, %v1950
      %1987 = vst.msk [vmem:[#allocation2 + $0x48] sm:$0xff] %vm172, %v1951
      %1988 = vst.msk [vmem:[#allocation2 + $0x50] sm:$0xff] %vm172, %v1952
      %1989 = vst.msk [vmem:[#allocation2 + $0x58] sm:$0xff] %vm172, %v1953
      %1990 = vst.msk [vmem:[#allocation2 + $0x60] sm:$0xff] %vm172, %v1954
      %1991 = vst.msk [vmem:[#allocation2 + $0x68] sm:$0xff] %vm172, %v1955
      %1992 = vst.msk [vmem:[#allocation2 + $0x70] sm:$0xff] %vm172, %v1956
      %1993 = vst.msk [vmem:[#allocation2 + $0x78] sm:$0xff] %vm172, %v1957
      %1994 = vst.msk [vmem:[#allocation2 + $0x80] sm:$0xff] %vm172, %v1958
      %1995 = vst.msk [vmem:[#allocation2 + $0x88] sm:$0xff] %vm172, %v1959
      %1996 = vst.msk [vmem:[#allocation2 + $0x90] sm:$0xff] %vm172, %v1960
      %1997 = vst.msk [vmem:[#allocation2 + $0x98] sm:$0xff] %vm172, %v1961
      %1998 = vst.msk [vmem:[#allocation2 + $0xa0] sm:$0xff] %vm172, %v1962
      %1999 = vst.msk [vmem:[#allocation2 + $0xa8] sm:$0xff] %vm172, %v1963
      %2000 = vst.msk [vmem:[#allocation2 + $0xb0] sm:$0xff] %vm172, %v1964
      %2001 = vst.msk [vmem:[#allocation2 + $0xb8] sm:$0xff] %vm172, %v1965
      %2002 = vst.msk [vmem:[#allocation2 + $0xc0] sm:$0xff] %vm172, %v1966
      %2003 = vst.msk [vmem:[#allocation2 + $0xc8] sm:$0xff] %vm172, %v1967
      %2004 = vst.msk [vmem:[#allocation2 + $0xd0] sm:$0xff] %vm172, %v1968
      %2005 = vst.msk [vmem:[#allocation2 + $0xd8] sm:$0xff] %vm172, %v1969
      %2006 = vst.msk [vmem:[#allocation2 + $0xe0] sm:$0xff] %vm172, %v1970
      %2007 = vst.msk [vmem:[#allocation2 + $0xe8] sm:$0xff] %vm172, %v1971
      %2008 = vst.msk [vmem:[#allocation2 + $0xf0] sm:$0xff] %vm172, %v1972
      %2009 = vst.msk [vmem:[#allocation2 + $0xf8] sm:$0xff] %vm172, %v1973
      %2010 = vst.msk [vmem:[#allocation2 + $0x100] sm:$0xff] %vm172, %v1974
      %2011 = vst.msk [vmem:[#allocation2 + $0x108] sm:$0xff] %vm172, %v1975
      %2012 = vst.msk [vmem:[#allocation2 + $0x110] sm:$0xff] %vm172, %v1976
      %2013 = vst.msk [vmem:[#allocation2 + $0x118] sm:$0xff] %vm172, %v1977
      %v2014 = vld [vmem:[#allocation2] sm:$0xff]
      %v2015 = vld [vmem:[#allocation2 + $0x8] sm:$0xff]
      %v2016 = vld [vmem:[#allocation2 + $0x10] sm:$0xff]
      %v2017 = vld [vmem:[#allocation2 + $0x18] sm:$0xff]
      %v2018 = vld [vmem:[#allocation2 + $0x20] sm:$0xff]
      %v2019 = vld [vmem:[#allocation2 + $0x28] sm:$0xff]
      %v2020 = vld [vmem:[#allocation2 + $0x30] sm:$0xff]
      %v2021 = vld [vmem:[#allocation2 + $0x38] sm:$0xff]
      %v2022 = vld [vmem:[#allocation2 + $0x40] sm:$0xff]
      %v2023 = vld [vmem:[#allocation2 + $0x48] sm:$0xff]
      %v2024 = vld [vmem:[#allocation2 + $0x50] sm:$0xff]
      %v2025 = vld [vmem:[#allocation2 + $0x58] sm:$0xff]
      %v2026 = vld [vmem:[#allocation2 + $0x60] sm:$0xff]
      %v2027 = vld [vmem:[#allocation2 + $0x68] sm:$0xff]
      %v2028 = vld [vmem:[#allocation2 + $0x70] sm:$0xff]
      %v2029 = vld [vmem:[#allocation2 + $0x78] sm:$0xff]
      %v2030 = vld [vmem:[#allocation2 + $0x80] sm:$0xff]
      %v2031 = vld [vmem:[#allocation2 + $0x88] sm:$0xff]
      %v2032 = vld [vmem:[#allocation2 + $0x90] sm:$0xff]
      %v2033 = vld [vmem:[#allocation2 + $0x98] sm:$0xff]
      %v2034 = vld [vmem:[#allocation2 + $0xa0] sm:$0xff]
      %v2035 = vld [vmem:[#allocation2 + $0xa8] sm:$0xff]
      %v2036 = vld [vmem:[#allocation2 + $0xb0] sm:$0xff]
      %v2037 = vld [vmem:[#allocation2 + $0xb8] sm:$0xff]
      %v2038 = vld [vmem:[#allocation2 + $0xc0] sm:$0xff]
      %v2039 = vld [vmem:[#allocation2 + $0xc8] sm:$0xff]
      %v2040 = vld [vmem:[#allocation2 + $0xd0] sm:$0xff]
      %v2041 = vld [vmem:[#allocation2 + $0xd8] sm:$0xff]
      %v2042 = vld [vmem:[#allocation2 + $0xe0] sm:$0xff]
      %v2043 = vld [vmem:[#allocation2 + $0xe8] sm:$0xff]
      %v2044 = vld [vmem:[#allocation2 + $0xf0] sm:$0xff]
      %v2045 = vld [vmem:[#allocation2 + $0xf8] sm:$0xff]
      %v2046 = vld [vmem:[#allocation2 + $0x100] sm:$0xff]
      %v2047 = vld [vmem:[#allocation2 + $0x108] sm:$0xff]
      %v2048 = vld [vmem:[#allocation2 + $0x110] sm:$0xff]
      %v2049 = vld [vmem:[#allocation2 + $0x118] sm:$0xff]
      %v2050 = vld [vmem:[%s165 + $0x8] sm:$0xe]
      %v2051 = vld [vmem:[%s165 + $0xc] sm:$0xf]
      %v2052 = vld [vmem:[%s165 + $0x10] sm:$0xf]
      %v2053 = vld [vmem:[%s165 + $0x14] sm:$0xf]
      %v2054 = vld [vmem:[%s165 + $0x18] sm:$0xf]
      %v2055 = vld [vmem:[%s165 + $0x1c] sm:$0xf]
      %v2056 = vld [vmem:[%s165 + $0x20] sm:$0xf]
      %v2057 = vld [vmem:[%s165 + $0x24] sm:$0xf]
      %v2058 = vld [vmem:[%s165 + $0x28] sm:$0xf]
      %v2059 = vld [vmem:[%s165 + $0x2c] sm:$0xf]
      %v2060 = vld [vmem:[%s165 + $0x30] sm:$0xf]
      %v2061 = vld [vmem:[%s165 + $0x34] sm:$0xf]
      %v2062 = vld [vmem:[%s165 + $0x38] sm:$0xf]
      %v2063 = vld [vmem:[%s165 + $0x3c] sm:$0xf]
      %v2064 = vld [vmem:[%s165 + $0x40] sm:$0xf]
      %v2065 = vld [vmem:[%s165 + $0x44] sm:$0xf]
      %v2066 = vld [vmem:[%s165 + $0x48] sm:$0xf]
      %v2067 = vld [vmem:[%s165 + $0x4c] sm:$0xf]
      %v2068 = vld [vmem:[%s165 + $0x50] sm:$0xf]
      %v2069 = vld [vmem:[%s165 + $0x54] sm:$0xf]
      %v2070 = vld [vmem:[%s165 + $0x58] sm:$0xf]
      %v2071 = vld [vmem:[%s165 + $0x5c] sm:$0xf]
      %v2072 = vld [vmem:[%s165 + $0x60] sm:$0xf]
      %v2073 = vld [vmem:[%s165 + $0x64] sm:$0xf]
      %v2074 = vld [vmem:[%s165 + $0x68] sm:$0xf]
      %v2075 = vld [vmem:[%s165 + $0x6c] sm:$0xf]
      %v2076 = vld [vmem:[%s165 + $0x70] sm:$0xf]
      %v2077 = vld [vmem:[%s165 + $0x74] sm:$0xf]
      %v2078 = vld [vmem:[%s165 + $0x78] sm:$0xf]
      %v2079 = vld [vmem:[%s165 + $0x7c] sm:$0xf]
      %v2080 = vld [vmem:[%s165 + $0x80] sm:$0xf]
      %v2081 = vld [vmem:[%s165 + $0x84] sm:$0xf]
      %v2082 = vld [vmem:[%s165 + $0x88] sm:$0xf]
      %v2083 = vld [vmem:[%s165 + $0x8c] sm:$0xf]
      %v2084 = vld [vmem:[%s165 + $0x90] sm:$0xf]
      %v2085 = vld [vmem:[%s165 + $0x94] sm:$0xf]
      %v2086 = vld [vmem:[%s165 + $0x98] sm:$0x3]
      %s2087 = scalar_lea.vmem %s1, 8
      %v2088 = vld [vmem:[%s2087] sm:$0x3]
      %v2126 = vunpack.c.l.b16 %v2050
      %v2127 = vunpack.c.l.b16 %v2051
      %v2128 = vunpack.c.l.b16 %v2052
      %v2129 = vunpack.c.l.b16 %v2053
      %v2130 = vunpack.c.l.b16 %v2054
      %v2131 = vunpack.c.l.b16 %v2055
      %v2132 = vunpack.c.l.b16 %v2056
      %v2133 = vunpack.c.l.b16 %v2057
      %v2134 = vunpack.c.l.b16 %v2058
      %v2135 = vunpack.c.l.b16 %v2059
      %v2136 = vunpack.c.l.b16 %v2060
      %v2137 = vunpack.c.l.b16 %v2061
      %v2138 = vunpack.c.l.b16 %v2062
      %v2139 = vunpack.c.l.b16 %v2063
      %v2140 = vunpack.c.l.b16 %v2064
      %v2141 = vunpack.c.l.b16 %v2065
      %v2142 = vunpack.c.l.b16 %v2066
      %v2143 = vunpack.c.l.b16 %v2067
      %v2144 = vunpack.c.l.b16 %v2068
      %v2145 = vunpack.c.l.b16 %v2069
      %v2146 = vunpack.c.l.b16 %v2070
      %v2147 = vunpack.c.l.b16 %v2071
      %v2148 = vunpack.c.l.b16 %v2072
      %v2149 = vunpack.c.l.b16 %v2073
      %v2150 = vunpack.c.l.b16 %v2074
      %v2151 = vunpack.c.l.b16 %v2075
      %v2152 = vunpack.c.l.b16 %v2076
      %v2153 = vunpack.c.l.b16 %v2077
      %v2154 = vunpack.c.l.b16 %v2078
      %v2155 = vunpack.c.l.b16 %v2079
      %v2156 = vunpack.c.l.b16 %v2080
      %v2157 = vunpack.c.l.b16 %v2081
      %v2158 = vunpack.c.l.b16 %v2082
      %v2159 = vunpack.c.l.b16 %v2083
      %v2160 = vunpack.c.l.b16 %v2084
      %v2161 = vunpack.c.l.b16 %v2085
      %v2162 = vunpack.c.l.b16 %v2086
      %v2163 = vpack.c.b16 %v2127, %v2126
      %v2164 = vpack.c.b16 %v2129, %v2128
      %v2165 = vpack.c.b16 %v2131, %v2130
      %v2166 = vpack.c.b16 %v2133, %v2132
      %v2167 = vpack.c.b16 %v2135, %v2134
      %v2168 = vpack.c.b16 %v2137, %v2136
      %v2169 = vpack.c.b16 %v2139, %v2138
      %v2170 = vpack.c.b16 %v2141, %v2140
      %v2171 = vpack.c.b16 %v2143, %v2142
      %v2172 = vpack.c.b16 %v2145, %v2144
      %v2173 = vpack.c.b16 %v2147, %v2146
      %v2174 = vpack.c.b16 %v2149, %v2148
      %v2175 = vpack.c.b16 %v2151, %v2150
      %v2176 = vpack.c.b16 %v2153, %v2152
      %v2177 = vpack.c.b16 %v2155, %v2154
      %v2178 = vpack.c.b16 %v2157, %v2156
      %v2179 = vpack.c.b16 %v2159, %v2158
      %v2180 = vpack.c.b16 %v2161, %v2160
      %v2181 = vpack.c.b16 %v2162, %v2162
      %vm2182 = vsmask.f32 6400
      %v2184 = vshrl.u32 %v2163, 16
      %v2186 = vrot.slane %v2184, 1
      %v2187 = vshll.u32 %v2163, 16
      %v2189 = vrot.slane %v2187, 2
      %v2190 = vor.u32 %v2186, %v2189
      %v2192 = vshrl.u32 %v2164, 16
      %v2194 = vrot.slane %v2192, 1
      %v2195 = vshll.u32 %v2164, 16
      %v2197 = vrot.slane %v2195, 2
      %v2198 = vor.u32 %v2194, %v2197
      %v2199 = vsel %vm2182, %v2190, %v2198
      %v2201 = vshrl.u32 %v2165, 16
      %v2203 = vrot.slane %v2201, 1
      %v2204 = vshll.u32 %v2165, 16
      %v2206 = vrot.slane %v2204, 2
      %v2207 = vor.u32 %v2203, %v2206
      %v2208 = vsel %vm2182, %v2198, %v2207
      %v2210 = vshrl.u32 %v2166, 16
      %v2212 = vrot.slane %v2210, 1
      %v2213 = vshll.u32 %v2166, 16
      %v2215 = vrot.slane %v2213, 2
      %v2216 = vor.u32 %v2212, %v2215
      %v2217 = vsel %vm2182, %v2207, %v2216
      %v2219 = vshrl.u32 %v2167, 16
      %v2221 = vrot.slane %v2219, 1
      %v2222 = vshll.u32 %v2167, 16
      %v2224 = vrot.slane %v2222, 2
      %v2225 = vor.u32 %v2221, %v2224
      %v2226 = vsel %vm2182, %v2216, %v2225
      %v2228 = vshrl.u32 %v2168, 16
      %v2230 = vrot.slane %v2228, 1
      %v2231 = vshll.u32 %v2168, 16
      %v2233 = vrot.slane %v2231, 2
      %v2234 = vor.u32 %v2230, %v2233
      %v2235 = vsel %vm2182, %v2225, %v2234
      %v2237 = vshrl.u32 %v2169, 16
      %v2239 = vrot.slane %v2237, 1
      %v2240 = vshll.u32 %v2169, 16
      %v2242 = vrot.slane %v2240, 2
      %v2243 = vor.u32 %v2239, %v2242
      %v2244 = vsel %vm2182, %v2234, %v2243
      %v2246 = vshrl.u32 %v2170, 16
      %v2248 = vrot.slane %v2246, 1
      %v2249 = vshll.u32 %v2170, 16
      %v2251 = vrot.slane %v2249, 2
      %v2252 = vor.u32 %v2248, %v2251
      %v2253 = vsel %vm2182, %v2243, %v2252
      %v2255 = vshrl.u32 %v2171, 16
      %v2257 = vrot.slane %v2255, 1
      %v2258 = vshll.u32 %v2171, 16
      %v2260 = vrot.slane %v2258, 2
      %v2261 = vor.u32 %v2257, %v2260
      %v2262 = vsel %vm2182, %v2252, %v2261
      %v2264 = vshrl.u32 %v2172, 16
      %v2266 = vrot.slane %v2264, 1
      %v2267 = vshll.u32 %v2172, 16
      %v2269 = vrot.slane %v2267, 2
      %v2270 = vor.u32 %v2266, %v2269
      %v2271 = vsel %vm2182, %v2261, %v2270
      %v2273 = vshrl.u32 %v2173, 16
      %v2275 = vrot.slane %v2273, 1
      %v2276 = vshll.u32 %v2173, 16
      %v2278 = vrot.slane %v2276, 2
      %v2279 = vor.u32 %v2275, %v2278
      %v2280 = vsel %vm2182, %v2270, %v2279
      %v2282 = vshrl.u32 %v2174, 16
      %v2284 = vrot.slane %v2282, 1
      %v2285 = vshll.u32 %v2174, 16
      %v2287 = vrot.slane %v2285, 2
      %v2288 = vor.u32 %v2284, %v2287
      %v2289 = vsel %vm2182, %v2279, %v2288
      %v2291 = vshrl.u32 %v2175, 16
      %v2293 = vrot.slane %v2291, 1
      %v2294 = vshll.u32 %v2175, 16
      %v2296 = vrot.slane %v2294, 2
      %v2297 = vor.u32 %v2293, %v2296
      %v2298 = vsel %vm2182, %v2288, %v2297
      %v2300 = vshrl.u32 %v2176, 16
      %v2302 = vrot.slane %v2300, 1
      %v2303 = vshll.u32 %v2176, 16
      %v2305 = vrot.slane %v2303, 2
      %v2306 = vor.u32 %v2302, %v2305
      %v2307 = vsel %vm2182, %v2297, %v2306
      %v2309 = vshrl.u32 %v2177, 16
      %v2311 = vrot.slane %v2309, 1
      %v2312 = vshll.u32 %v2177, 16
      %v2314 = vrot.slane %v2312, 2
      %v2315 = vor.u32 %v2311, %v2314
      %v2316 = vsel %vm2182, %v2306, %v2315
      %v2318 = vshrl.u32 %v2178, 16
      %v2320 = vrot.slane %v2318, 1
      %v2321 = vshll.u32 %v2178, 16
      %v2323 = vrot.slane %v2321, 2
      %v2324 = vor.u32 %v2320, %v2323
      %v2325 = vsel %vm2182, %v2315, %v2324
      %v2327 = vshrl.u32 %v2179, 16
      %v2329 = vrot.slane %v2327, 1
      %v2330 = vshll.u32 %v2179, 16
      %v2332 = vrot.slane %v2330, 2
      %v2333 = vor.u32 %v2329, %v2332
      %v2334 = vsel %vm2182, %v2324, %v2333
      %v2336 = vshrl.u32 %v2180, 16
      %v2338 = vrot.slane %v2336, 1
      %v2339 = vshll.u32 %v2180, 16
      %v2341 = vrot.slane %v2339, 2
      %v2342 = vor.u32 %v2338, %v2341
      %v2343 = vsel %vm2182, %v2333, %v2342
      %v2345 = vshrl.u32 %v2181, 16
      %v2347 = vrot.slane %v2345, 1
      %v2348 = vshll.u32 %v2181, 16
      %v2350 = vrot.slane %v2348, 2
      %v2351 = vor.u32 %v2347, %v2350
      %v2352 = vsel %vm2182, %v2342, %v2351
      %v2354 = vsel %vm372, %v2199, 0
      %v2357 = vsel %vm372, %v2208, 0
      %v2360 = vsel %vm372, %v2217, 0
      %v2363 = vsel %vm372, %v2226, 0
      %v2366 = vsel %vm372, %v2235, 0
      %v2369 = vsel %vm372, %v2244, 0
      %v2372 = vsel %vm372, %v2253, 0
      %v2375 = vsel %vm372, %v2262, 0
      %v2378 = vsel %vm372, %v2271, 0
      %v2381 = vsel %vm372, %v2280, 0
      %v2384 = vsel %vm372, %v2289, 0
      %v2387 = vsel %vm372, %v2298, 0
      %v2390 = vsel %vm372, %v2307, 0
      %v2393 = vsel %vm372, %v2316, 0
      %v2396 = vsel %vm372, %v2325, 0
      %v2399 = vsel %vm372, %v2334, 0
      %v2402 = vsel %vm372, %v2343, 0
      %v2405 = vsel %vm372, %v2352, 0
      %v2408 = vsel %vm427, %v2088, 0
      %2410 = vmatpush.bf16.msra.mxu0 0
      %2411 = vmatpush.bf16.msra.mxu0 0
      %2412 = vmatpush.bf16.msra.mxu0 0
      %2413 = vmatpush.bf16.msra.mxu0 0
      %2414 = vmatpush.bf16.msra.mxu0 0
      %2415 = vmatpush.bf16.msra.mxu0 0
      %2416 = vmatpush.bf16.msra.mxu0 0
      %2417 = vmatpush.bf16.msra.mxu0 %v2408
      %2418 = vmatmul.bf16.gmra.mxu0 %v2354
      %v2419 = vpop.f32.mrf.mxu0
      %v2420 = vadd.f32 0.0, %v2419
      %v2421 = vpop.f32.mrf.mxu0
      %v2422 = vadd.f32 0.0, %v2421
      %2423 = vmatmul.bf16.gmra.mxu0 %v2357
      %v2424 = vpop.f32.mrf.mxu0
      %v2425 = vadd.f32 0.0, %v2424
      %v2426 = vpop.f32.mrf.mxu0
      %v2427 = vadd.f32 0.0, %v2426
      %2428 = vmatmul.bf16.gmra.mxu0 %v2360
      %v2429 = vpop.f32.mrf.mxu0
      %v2430 = vadd.f32 0.0, %v2429
      %v2431 = vpop.f32.mrf.mxu0
      %v2432 = vadd.f32 0.0, %v2431
      %2433 = vmatmul.bf16.gmra.mxu0 %v2363
      %v2434 = vpop.f32.mrf.mxu0
      %v2435 = vadd.f32 0.0, %v2434
      %v2436 = vpop.f32.mrf.mxu0
      %v2437 = vadd.f32 0.0, %v2436
      %2438 = vmatmul.bf16.gmra.mxu0 %v2366
      %v2439 = vpop.f32.mrf.mxu0
      %v2440 = vadd.f32 0.0, %v2439
      %v2441 = vpop.f32.mrf.mxu0
      %v2442 = vadd.f32 0.0, %v2441
      %2443 = vmatmul.bf16.gmra.mxu0 %v2369
      %v2444 = vpop.f32.mrf.mxu0
      %v2445 = vadd.f32 0.0, %v2444
      %v2446 = vpop.f32.mrf.mxu0
      %v2447 = vadd.f32 0.0, %v2446
      %2448 = vmatmul.bf16.gmra.mxu0 %v2372
      %v2449 = vpop.f32.mrf.mxu0
      %v2450 = vadd.f32 0.0, %v2449
      %v2451 = vpop.f32.mrf.mxu0
      %v2452 = vadd.f32 0.0, %v2451
      %2453 = vmatmul.bf16.gmra.mxu0 %v2375
      %v2454 = vpop.f32.mrf.mxu0
      %v2455 = vadd.f32 0.0, %v2454
      %v2456 = vpop.f32.mrf.mxu0
      %v2457 = vadd.f32 0.0, %v2456
      %2458 = vmatmul.bf16.gmra.mxu0 %v2378
      %v2459 = vpop.f32.mrf.mxu0
      %v2460 = vadd.f32 0.0, %v2459
      %v2461 = vpop.f32.mrf.mxu0
      %v2462 = vadd.f32 0.0, %v2461
      %2463 = vmatmul.bf16.gmra.mxu0 %v2381
      %v2464 = vpop.f32.mrf.mxu0
      %v2465 = vadd.f32 0.0, %v2464
      %v2466 = vpop.f32.mrf.mxu0
      %v2467 = vadd.f32 0.0, %v2466
      %2468 = vmatmul.bf16.gmra.mxu0 %v2384
      %v2469 = vpop.f32.mrf.mxu0
      %v2470 = vadd.f32 0.0, %v2469
      %v2471 = vpop.f32.mrf.mxu0
      %v2472 = vadd.f32 0.0, %v2471
      %2473 = vmatmul.bf16.gmra.mxu0 %v2387
      %v2474 = vpop.f32.mrf.mxu0
      %v2475 = vadd.f32 0.0, %v2474
      %v2476 = vpop.f32.mrf.mxu0
      %v2477 = vadd.f32 0.0, %v2476
      %2478 = vmatmul.bf16.gmra.mxu0 %v2390
      %v2479 = vpop.f32.mrf.mxu0
      %v2480 = vadd.f32 0.0, %v2479
      %v2481 = vpop.f32.mrf.mxu0
      %v2482 = vadd.f32 0.0, %v2481
      %2483 = vmatmul.bf16.gmra.mxu0 %v2393
      %v2484 = vpop.f32.mrf.mxu0
      %v2485 = vadd.f32 0.0, %v2484
      %v2486 = vpop.f32.mrf.mxu0
      %v2487 = vadd.f32 0.0, %v2486
      %2488 = vmatmul.bf16.gmra.mxu0 %v2396
      %v2489 = vpop.f32.mrf.mxu0
      %v2490 = vadd.f32 0.0, %v2489
      %v2491 = vpop.f32.mrf.mxu0
      %v2492 = vadd.f32 0.0, %v2491
      %2493 = vmatmul.bf16.gmra.mxu0 %v2399
      %v2494 = vpop.f32.mrf.mxu0
      %v2495 = vadd.f32 0.0, %v2494
      %v2496 = vpop.f32.mrf.mxu0
      %v2497 = vadd.f32 0.0, %v2496
      %2498 = vmatmul.bf16.gmra.mxu0 %v2402
      %v2499 = vpop.f32.mrf.mxu0
      %v2500 = vadd.f32 0.0, %v2499
      %v2501 = vpop.f32.mrf.mxu0
      %v2502 = vadd.f32 0.0, %v2501
      %2503 = vmatmul.bf16.gmra.mxu0 %v2405
      %v2504 = vpop.f32.mrf.mxu0
      %v2505 = vadd.f32 0.0, %v2504
      %v2506 = vpop.f32.mrf.mxu0
      %v2507 = vadd.f32 0.0, %v2506
      %2508 = vdwg.mxu0
      %v2509 = vadd.f32 %v2014, %v2420
      %v2510 = vadd.f32 %v2015, %v2422
      %v2511 = vadd.f32 %v2016, %v2425
      %v2512 = vadd.f32 %v2017, %v2427
      %v2513 = vadd.f32 %v2018, %v2430
      %v2514 = vadd.f32 %v2019, %v2432
      %v2515 = vadd.f32 %v2020, %v2435
      %v2516 = vadd.f32 %v2021, %v2437
      %v2517 = vadd.f32 %v2022, %v2440
      %v2518 = vadd.f32 %v2023, %v2442
      %v2519 = vadd.f32 %v2024, %v2445
      %v2520 = vadd.f32 %v2025, %v2447
      %v2521 = vadd.f32 %v2026, %v2450
      %v2522 = vadd.f32 %v2027, %v2452
      %v2523 = vadd.f32 %v2028, %v2455
      %v2524 = vadd.f32 %v2029, %v2457
      %v2525 = vadd.f32 %v2030, %v2460
      %v2526 = vadd.f32 %v2031, %v2462
      %v2527 = vadd.f32 %v2032, %v2465
      %v2528 = vadd.f32 %v2033, %v2467
      %v2529 = vadd.f32 %v2034, %v2470
      %v2530 = vadd.f32 %v2035, %v2472
      %v2531 = vadd.f32 %v2036, %v2475
      %v2532 = vadd.f32 %v2037, %v2477
      %v2533 = vadd.f32 %v2038, %v2480
      %v2534 = vadd.f32 %v2039, %v2482
      %v2535 = vadd.f32 %v2040, %v2485
      %v2536 = vadd.f32 %v2041, %v2487
      %v2537 = vadd.f32 %v2042, %v2490
      %v2538 = vadd.f32 %v2043, %v2492
      %v2539 = vadd.f32 %v2044, %v2495
      %v2540 = vadd.f32 %v2045, %v2497
      %v2541 = vadd.f32 %v2046, %v2500
      %v2542 = vadd.f32 %v2047, %v2502
      %v2543 = vadd.f32 %v2048, %v2505
      %v2544 = vadd.f32 %v2049, %v2507
      %2545 = vst.msk [vmem:[#allocation2] sm:$0xff] %vm172, %v2509
      %2546 = vst.msk [vmem:[#allocation2 + $0x8] sm:$0xff] %vm172, %v2510
      %2547 = vst.msk [vmem:[#allocation2 + $0x10] sm:$0xff] %vm172, %v2511
      %2548 = vst.msk [vmem:[#allocation2 + $0x18] sm:$0xff] %vm172, %v2512
      %2549 = vst.msk [vmem:[#allocation2 + $0x20] sm:$0xff] %vm172, %v2513
      %2550 = vst.msk [vmem:[#allocation2 + $0x28] sm:$0xff] %vm172, %v2514
      %2551 = vst.msk [vmem:[#allocation2 + $0x30] sm:$0xff] %vm172, %v2515
      %2552 = vst.msk [vmem:[#allocation2 + $0x38] sm:$0xff] %vm172, %v2516
      %2553 = vst.msk [vmem:[#allocation2 + $0x40] sm:$0xff] %vm172, %v2517
      %2554 = vst.msk [vmem:[#allocation2 + $0x48] sm:$0xff] %vm172, %v2518
      %2555 = vst.msk [vmem:[#allocation2 + $0x50] sm:$0xff] %vm172, %v2519
      %2556 = vst.msk [vmem:[#allocation2 + $0x58] sm:$0xff] %vm172, %v2520
      %2557 = vst.msk [vmem:[#allocation2 + $0x60] sm:$0xff] %vm172, %v2521
      %2558 = vst.msk [vmem:[#allocation2 + $0x68] sm:$0xff] %vm172, %v2522
      %2559 = vst.msk [vmem:[#allocation2 + $0x70] sm:$0xff] %vm172, %v2523
      %2560 = vst.msk [vmem:[#allocation2 + $0x78] sm:$0xff] %vm172, %v2524
      %2561 = vst.msk [vmem:[#allocation2 + $0x80] sm:$0xff] %vm172, %v2525
      %2562 = vst.msk [vmem:[#allocation2 + $0x88] sm:$0xff] %vm172, %v2526
      %2563 = vst.msk [vmem:[#allocation2 + $0x90] sm:$0xff] %vm172, %v2527
      %2564 = vst.msk [vmem:[#allocation2 + $0x98] sm:$0xff] %vm172, %v2528
      %2565 = vst.msk [vmem:[#allocation2 + $0xa0] sm:$0xff] %vm172, %v2529
      %2566 = vst.msk [vmem:[#allocation2 + $0xa8] sm:$0xff] %vm172, %v2530
      %2567 = vst.msk [vmem:[#allocation2 + $0xb0] sm:$0xff] %vm172, %v2531
      %2568 = vst.msk [vmem:[#allocation2 + $0xb8] sm:$0xff] %vm172, %v2532
      %2569 = vst.msk [vmem:[#allocation2 + $0xc0] sm:$0xff] %vm172, %v2533
      %2570 = vst.msk [vmem:[#allocation2 + $0xc8] sm:$0xff] %vm172, %v2534
      %2571 = vst.msk [vmem:[#allocation2 + $0xd0] sm:$0xff] %vm172, %v2535
      %2572 = vst.msk [vmem:[#allocation2 + $0xd8] sm:$0xff] %vm172, %v2536
      %2573 = vst.msk [vmem:[#allocation2 + $0xe0] sm:$0xff] %vm172, %v2537
      %2574 = vst.msk [vmem:[#allocation2 + $0xe8] sm:$0xff] %vm172, %v2538
      %2575 = vst.msk [vmem:[#allocation2 + $0xf0] sm:$0xff] %vm172, %v2539
      %2576 = vst.msk [vmem:[#allocation2 + $0xf8] sm:$0xff] %vm172, %v2540
      %2577 = vst.msk [vmem:[#allocation2 + $0x100] sm:$0xff] %vm172, %v2541
      %2578 = vst.msk [vmem:[#allocation2 + $0x108] sm:$0xff] %vm172, %v2542
      %2579 = vst.msk [vmem:[#allocation2 + $0x110] sm:$0xff] %vm172, %v2543
      %2580 = vst.msk [vmem:[#allocation2 + $0x118] sm:$0xff] %vm172, %v2544
      %v2581 = vld [vmem:[#allocation2] sm:$0xff]
      %v2582 = vld [vmem:[#allocation2 + $0x8] sm:$0xff]
      %v2583 = vld [vmem:[#allocation2 + $0x10] sm:$0xff]
      %v2584 = vld [vmem:[#allocation2 + $0x18] sm:$0xff]
      %v2585 = vld [vmem:[#allocation2 + $0x20] sm:$0xff]
      %v2586 = vld [vmem:[#allocation2 + $0x28] sm:$0xff]
      %v2587 = vld [vmem:[#allocation2 + $0x30] sm:$0xff]
      %v2588 = vld [vmem:[#allocation2 + $0x38] sm:$0xff]
      %v2589 = vld [vmem:[#allocation2 + $0x40] sm:$0xff]
      %v2590 = vld [vmem:[#allocation2 + $0x48] sm:$0xff]
      %v2591 = vld [vmem:[#allocation2 + $0x50] sm:$0xff]
      %v2592 = vld [vmem:[#allocation2 + $0x58] sm:$0xff]
      %v2593 = vld [vmem:[#allocation2 + $0x60] sm:$0xff]
      %v2594 = vld [vmem:[#allocation2 + $0x68] sm:$0xff]
      %v2595 = vld [vmem:[#allocation2 + $0x70] sm:$0xff]
      %v2596 = vld [vmem:[#allocation2 + $0x78] sm:$0xff]
      %v2597 = vld [vmem:[#allocation2 + $0x80] sm:$0xff]
      %v2598 = vld [vmem:[#allocation2 + $0x88] sm:$0xff]
      %v2599 = vld [vmem:[#allocation2 + $0x90] sm:$0xff]
      %v2600 = vld [vmem:[#allocation2 + $0x98] sm:$0xff]
      %v2601 = vld [vmem:[#allocation2 + $0xa0] sm:$0xff]
      %v2602 = vld [vmem:[#allocation2 + $0xa8] sm:$0xff]
      %v2603 = vld [vmem:[#allocation2 + $0xb0] sm:$0xff]
      %v2604 = vld [vmem:[#allocation2 + $0xb8] sm:$0xff]
      %v2605 = vld [vmem:[#allocation2 + $0xc0] sm:$0xff]
      %v2606 = vld [vmem:[#allocation2 + $0xc8] sm:$0xff]
      %v2607 = vld [vmem:[#allocation2 + $0xd0] sm:$0xff]
      %v2608 = vld [vmem:[#allocation2 + $0xd8] sm:$0xff]
      %v2609 = vld [vmem:[#allocation2 + $0xe0] sm:$0xff]
      %v2610 = vld [vmem:[#allocation2 + $0xe8] sm:$0xff]
      %v2611 = vld [vmem:[#allocation2 + $0xf0] sm:$0xff]
      %v2612 = vld [vmem:[#allocation2 + $0xf8] sm:$0xff]
      %v2613 = vld [vmem:[#allocation2 + $0x100] sm:$0xff]
      %v2614 = vld [vmem:[#allocation2 + $0x108] sm:$0xff]
      %v2615 = vld [vmem:[#allocation2 + $0x110] sm:$0xff]
      %v2616 = vld [vmem:[#allocation2 + $0x118] sm:$0xff]
      %v2617 = vld [vmem:[%s165 + $0x8] sm:$0xc]
      %v2618 = vld [vmem:[%s165 + $0xc] sm:$0xf]
      %v2619 = vld [vmem:[%s165 + $0x10] sm:$0xf]
      %v2620 = vld [vmem:[%s165 + $0x14] sm:$0xf]
      %v2621 = vld [vmem:[%s165 + $0x18] sm:$0xf]
      %v2622 = vld [vmem:[%s165 + $0x1c] sm:$0xf]
      %v2623 = vld [vmem:[%s165 + $0x20] sm:$0xf]
      %v2624 = vld [vmem:[%s165 + $0x24] sm:$0xf]
      %v2625 = vld [vmem:[%s165 + $0x28] sm:$0xf]
      %v2626 = vld [vmem:[%s165 + $0x2c] sm:$0xf]
      %v2627 = vld [vmem:[%s165 + $0x30] sm:$0xf]
      %v2628 = vld [vmem:[%s165 + $0x34] sm:$0xf]
      %v2629 = vld [vmem:[%s165 + $0x38] sm:$0xf]
      %v2630 = vld [vmem:[%s165 + $0x3c] sm:$0xf]
      %v2631 = vld [vmem:[%s165 + $0x40] sm:$0xf]
      %v2632 = vld [vmem:[%s165 + $0x44] sm:$0xf]
      %v2633 = vld [vmem:[%s165 + $0x48] sm:$0xf]
      %v2634 = vld [vmem:[%s165 + $0x4c] sm:$0xf]
      %v2635 = vld [vmem:[%s165 + $0x50] sm:$0xf]
      %v2636 = vld [vmem:[%s165 + $0x54] sm:$0xf]
      %v2637 = vld [vmem:[%s165 + $0x58] sm:$0xf]
      %v2638 = vld [vmem:[%s165 + $0x5c] sm:$0xf]
      %v2639 = vld [vmem:[%s165 + $0x60] sm:$0xf]
      %v2640 = vld [vmem:[%s165 + $0x64] sm:$0xf]
      %v2641 = vld [vmem:[%s165 + $0x68] sm:$0xf]
      %v2642 = vld [vmem:[%s165 + $0x6c] sm:$0xf]
      %v2643 = vld [vmem:[%s165 + $0x70] sm:$0xf]
      %v2644 = vld [vmem:[%s165 + $0x74] sm:$0xf]
      %v2645 = vld [vmem:[%s165 + $0x78] sm:$0xf]
      %v2646 = vld [vmem:[%s165 + $0x7c] sm:$0xf]
      %v2647 = vld [vmem:[%s165 + $0x80] sm:$0xf]
      %v2648 = vld [vmem:[%s165 + $0x84] sm:$0xf]
      %v2649 = vld [vmem:[%s165 + $0x88] sm:$0xf]
      %v2650 = vld [vmem:[%s165 + $0x8c] sm:$0xf]
      %v2651 = vld [vmem:[%s165 + $0x90] sm:$0xf]
      %v2652 = vld [vmem:[%s165 + $0x94] sm:$0xf]
      %v2653 = vld [vmem:[%s165 + $0x98] sm:$0x3]
      %s2654 = scalar_lea.vmem %s1, 10
      %v2655 = vld [vmem:[%s2654] sm:$0x3]
      %v2693 = vunpack.c.l.b16 %v2617
      %v2694 = vunpack.c.l.b16 %v2618
      %v2695 = vunpack.c.l.b16 %v2619
      %v2696 = vunpack.c.l.b16 %v2620
      %v2697 = vunpack.c.l.b16 %v2621
      %v2698 = vunpack.c.l.b16 %v2622
      %v2699 = vunpack.c.l.b16 %v2623
      %v2700 = vunpack.c.l.b16 %v2624
      %v2701 = vunpack.c.l.b16 %v2625
      %v2702 = vunpack.c.l.b16 %v2626
      %v2703 = vunpack.c.l.b16 %v2627
      %v2704 = vunpack.c.l.b16 %v2628
      %v2705 = vunpack.c.l.b16 %v2629
      %v2706 = vunpack.c.l.b16 %v2630
      %v2707 = vunpack.c.l.b16 %v2631
      %v2708 = vunpack.c.l.b16 %v2632
      %v2709 = vunpack.c.l.b16 %v2633
      %v2710 = vunpack.c.l.b16 %v2634
      %v2711 = vunpack.c.l.b16 %v2635
      %v2712 = vunpack.c.l.b16 %v2636
      %v2713 = vunpack.c.l.b16 %v2637
      %v2714 = vunpack.c.l.b16 %v2638
      %v2715 = vunpack.c.l.b16 %v2639
      %v2716 = vunpack.c.l.b16 %v2640
      %v2717 = vunpack.c.l.b16 %v2641
      %v2718 = vunpack.c.l.b16 %v2642
      %v2719 = vunpack.c.l.b16 %v2643
      %v2720 = vunpack.c.l.b16 %v2644
      %v2721 = vunpack.c.l.b16 %v2645
      %v2722 = vunpack.c.l.b16 %v2646
      %v2723 = vunpack.c.l.b16 %v2647
      %v2724 = vunpack.c.l.b16 %v2648
      %v2725 = vunpack.c.l.b16 %v2649
      %v2726 = vunpack.c.l.b16 %v2650
      %v2727 = vunpack.c.l.b16 %v2651
      %v2728 = vunpack.c.l.b16 %v2652
      %v2729 = vunpack.c.l.b16 %v2653
      %v2730 = vpack.c.b16 %v2694, %v2693
      %v2731 = vpack.c.b16 %v2696, %v2695
      %v2732 = vpack.c.b16 %v2698, %v2697
      %v2733 = vpack.c.b16 %v2700, %v2699
      %v2734 = vpack.c.b16 %v2702, %v2701
      %v2735 = vpack.c.b16 %v2704, %v2703
      %v2736 = vpack.c.b16 %v2706, %v2705
      %v2737 = vpack.c.b16 %v2708, %v2707
      %v2738 = vpack.c.b16 %v2710, %v2709
      %v2739 = vpack.c.b16 %v2712, %v2711
      %v2740 = vpack.c.b16 %v2714, %v2713
      %v2741 = vpack.c.b16 %v2716, %v2715
      %v2742 = vpack.c.b16 %v2718, %v2717
      %v2743 = vpack.c.b16 %v2720, %v2719
      %v2744 = vpack.c.b16 %v2722, %v2721
      %v2745 = vpack.c.b16 %v2724, %v2723
      %v2746 = vpack.c.b16 %v2726, %v2725
      %v2747 = vpack.c.b16 %v2728, %v2727
      %v2748 = vpack.c.b16 %v2729, %v2729
      %vm2749 = vcmask 1045504
      %v2750 = vrot.slane %v2730, 2
      %v2751 = vrot.slane %v2731, 2
      %v2752 = vsel %vm2749, %v2750, %v2751
      %v2753 = vrot.slane %v2732, 2
      %v2754 = vsel %vm2749, %v2751, %v2753
      %v2755 = vrot.slane %v2733, 2
      %v2756 = vsel %vm2749, %v2753, %v2755
      %v2757 = vrot.slane %v2734, 2
      %v2758 = vsel %vm2749, %v2755, %v2757
      %v2759 = vrot.slane %v2735, 2
      %v2760 = vsel %vm2749, %v2757, %v2759
      %v2761 = vrot.slane %v2736, 2
      %v2762 = vsel %vm2749, %v2759, %v2761
      %v2763 = vrot.slane %v2737, 2
      %v2764 = vsel %vm2749, %v2761, %v2763
      %v2765 = vrot.slane %v2738, 2
      %v2766 = vsel %vm2749, %v2763, %v2765
      %v2767 = vrot.slane %v2739, 2
      %v2768 = vsel %vm2749, %v2765, %v2767
      %v2769 = vrot.slane %v2740, 2
      %v2770 = vsel %vm2749, %v2767, %v2769
      %v2771 = vrot.slane %v2741, 2
      %v2772 = vsel %vm2749, %v2769, %v2771
      %v2773 = vrot.slane %v2742, 2
      %v2774 = vsel %vm2749, %v2771, %v2773
      %v2775 = vrot.slane %v2743, 2
      %v2776 = vsel %vm2749, %v2773, %v2775
      %v2777 = vrot.slane %v2744, 2
      %v2778 = vsel %vm2749, %v2775, %v2777
      %v2779 = vrot.slane %v2745, 2
      %v2780 = vsel %vm2749, %v2777, %v2779
      %v2781 = vrot.slane %v2746, 2
      %v2782 = vsel %vm2749, %v2779, %v2781
      %v2783 = vrot.slane %v2747, 2
      %v2784 = vsel %vm2749, %v2781, %v2783
      %v2785 = vrot.slane %v2748, 2
      %v2786 = vsel %vm2749, %v2783, %v2785
      %v2788 = vsel %vm372, %v2752, 0
      %v2791 = vsel %vm372, %v2754, 0
      %v2794 = vsel %vm372, %v2756, 0
      %v2797 = vsel %vm372, %v2758, 0
      %v2800 = vsel %vm372, %v2760, 0
      %v2803 = vsel %vm372, %v2762, 0
      %v2806 = vsel %vm372, %v2764, 0
      %v2809 = vsel %vm372, %v2766, 0
      %v2812 = vsel %vm372, %v2768, 0
      %v2815 = vsel %vm372, %v2770, 0
      %v2818 = vsel %vm372, %v2772, 0
      %v2821 = vsel %vm372, %v2774, 0
      %v2824 = vsel %vm372, %v2776, 0
      %v2827 = vsel %vm372, %v2778, 0
      %v2830 = vsel %vm372, %v2780, 0
      %v2833 = vsel %vm372, %v2782, 0
      %v2836 = vsel %vm372, %v2784, 0
      %v2839 = vsel %vm372, %v2786, 0
      %v2842 = vsel %vm427, %v2655, 0
      %2844 = vmatpush.bf16.msra.mxu0 0
      %2845 = vmatpush.bf16.msra.mxu0 0
      %2846 = vmatpush.bf16.msra.mxu0 0
      %2847 = vmatpush.bf16.msra.mxu0 0
      %2848 = vmatpush.bf16.msra.mxu0 0
      %2849 = vmatpush.bf16.msra.mxu0 0
      %2850 = vmatpush.bf16.msra.mxu0 0
      %2851 = vmatpush.bf16.msra.mxu0 %v2842
      %2852 = vmatmul.bf16.gmra.mxu0 %v2788
      %v2853 = vpop.f32.mrf.mxu0
      %v2854 = vadd.f32 0.0, %v2853
      %v2855 = vpop.f32.mrf.mxu0
      %v2856 = vadd.f32 0.0, %v2855
      %2857 = vmatmul.bf16.gmra.mxu0 %v2791
      %v2858 = vpop.f32.mrf.mxu0
      %v2859 = vadd.f32 0.0, %v2858
      %v2860 = vpop.f32.mrf.mxu0
      %v2861 = vadd.f32 0.0, %v2860
      %2862 = vmatmul.bf16.gmra.mxu0 %v2794
      %v2863 = vpop.f32.mrf.mxu0
      %v2864 = vadd.f32 0.0, %v2863
      %v2865 = vpop.f32.mrf.mxu0
      %v2866 = vadd.f32 0.0, %v2865
      %2867 = vmatmul.bf16.gmra.mxu0 %v2797
      %v2868 = vpop.f32.mrf.mxu0
      %v2869 = vadd.f32 0.0, %v2868
      %v2870 = vpop.f32.mrf.mxu0
      %v2871 = vadd.f32 0.0, %v2870
      %2872 = vmatmul.bf16.gmra.mxu0 %v2800
      %v2873 = vpop.f32.mrf.mxu0
      %v2874 = vadd.f32 0.0, %v2873
      %v2875 = vpop.f32.mrf.mxu0
      %v2876 = vadd.f32 0.0, %v2875
      %2877 = vmatmul.bf16.gmra.mxu0 %v2803
      %v2878 = vpop.f32.mrf.mxu0
      %v2879 = vadd.f32 0.0, %v2878
      %v2880 = vpop.f32.mrf.mxu0
      %v2881 = vadd.f32 0.0, %v2880
      %2882 = vmatmul.bf16.gmra.mxu0 %v2806
      %v2883 = vpop.f32.mrf.mxu0
      %v2884 = vadd.f32 0.0, %v2883
      %v2885 = vpop.f32.mrf.mxu0
      %v2886 = vadd.f32 0.0, %v2885
      %2887 = vmatmul.bf16.gmra.mxu0 %v2809
      %v2888 = vpop.f32.mrf.mxu0
      %v2889 = vadd.f32 0.0, %v2888
      %v2890 = vpop.f32.mrf.mxu0
      %v2891 = vadd.f32 0.0, %v2890
      %2892 = vmatmul.bf16.gmra.mxu0 %v2812
      %v2893 = vpop.f32.mrf.mxu0
      %v2894 = vadd.f32 0.0, %v2893
      %v2895 = vpop.f32.mrf.mxu0
      %v2896 = vadd.f32 0.0, %v2895
      %2897 = vmatmul.bf16.gmra.mxu0 %v2815
      %v2898 = vpop.f32.mrf.mxu0
      %v2899 = vadd.f32 0.0, %v2898
      %v2900 = vpop.f32.mrf.mxu0
      %v2901 = vadd.f32 0.0, %v2900
      %2902 = vmatmul.bf16.gmra.mxu0 %v2818
      %v2903 = vpop.f32.mrf.mxu0
      %v2904 = vadd.f32 0.0, %v2903
      %v2905 = vpop.f32.mrf.mxu0
      %v2906 = vadd.f32 0.0, %v2905
      %2907 = vmatmul.bf16.gmra.mxu0 %v2821
      %v2908 = vpop.f32.mrf.mxu0
      %v2909 = vadd.f32 0.0, %v2908
      %v2910 = vpop.f32.mrf.mxu0
      %v2911 = vadd.f32 0.0, %v2910
      %2912 = vmatmul.bf16.gmra.mxu0 %v2824
      %v2913 = vpop.f32.mrf.mxu0
      %v2914 = vadd.f32 0.0, %v2913
      %v2915 = vpop.f32.mrf.mxu0
      %v2916 = vadd.f32 0.0, %v2915
      %2917 = vmatmul.bf16.gmra.mxu0 %v2827
      %v2918 = vpop.f32.mrf.mxu0
      %v2919 = vadd.f32 0.0, %v2918
      %v2920 = vpop.f32.mrf.mxu0
      %v2921 = vadd.f32 0.0, %v2920
      %2922 = vmatmul.bf16.gmra.mxu0 %v2830
      %v2923 = vpop.f32.mrf.mxu0
      %v2924 = vadd.f32 0.0, %v2923
      %v2925 = vpop.f32.mrf.mxu0
      %v2926 = vadd.f32 0.0, %v2925
      %2927 = vmatmul.bf16.gmra.mxu0 %v2833
      %v2928 = vpop.f32.mrf.mxu0
      %v2929 = vadd.f32 0.0, %v2928
      %v2930 = vpop.f32.mrf.mxu0
      %v2931 = vadd.f32 0.0, %v2930
      %2932 = vmatmul.bf16.gmra.mxu0 %v2836
      %v2933 = vpop.f32.mrf.mxu0
      %v2934 = vadd.f32 0.0, %v2933
      %v2935 = vpop.f32.mrf.mxu0
      %v2936 = vadd.f32 0.0, %v2935
      %2937 = vmatmul.bf16.gmra.mxu0 %v2839
      %v2938 = vpop.f32.mrf.mxu0
      %v2939 = vadd.f32 0.0, %v2938
      %v2940 = vpop.f32.mrf.mxu0
      %v2941 = vadd.f32 0.0, %v2940
      %2942 = vdwg.mxu0
      %v2943 = vadd.f32 %v2581, %v2854
      %v2944 = vadd.f32 %v2582, %v2856
      %v2945 = vadd.f32 %v2583, %v2859
      %v2946 = vadd.f32 %v2584, %v2861
      %v2947 = vadd.f32 %v2585, %v2864
      %v2948 = vadd.f32 %v2586, %v2866
      %v2949 = vadd.f32 %v2587, %v2869
      %v2950 = vadd.f32 %v2588, %v2871
      %v2951 = vadd.f32 %v2589, %v2874
      %v2952 = vadd.f32 %v2590, %v2876
      %v2953 = vadd.f32 %v2591, %v2879
      %v2954 = vadd.f32 %v2592, %v2881
      %v2955 = vadd.f32 %v2593, %v2884
      %v2956 = vadd.f32 %v2594, %v2886
      %v2957 = vadd.f32 %v2595, %v2889
      %v2958 = vadd.f32 %v2596, %v2891
      %v2959 = vadd.f32 %v2597, %v2894
      %v2960 = vadd.f32 %v2598, %v2896
      %v2961 = vadd.f32 %v2599, %v2899
      %v2962 = vadd.f32 %v2600, %v2901
      %v2963 = vadd.f32 %v2601, %v2904
      %v2964 = vadd.f32 %v2602, %v2906
      %v2965 = vadd.f32 %v2603, %v2909
      %v2966 = vadd.f32 %v2604, %v2911
      %v2967 = vadd.f32 %v2605, %v2914
      %v2968 = vadd.f32 %v2606, %v2916
      %v2969 = vadd.f32 %v2607, %v2919
      %v2970 = vadd.f32 %v2608, %v2921
      %v2971 = vadd.f32 %v2609, %v2924
      %v2972 = vadd.f32 %v2610, %v2926
      %v2973 = vadd.f32 %v2611, %v2929
      %v2974 = vadd.f32 %v2612, %v2931
      %v2975 = vadd.f32 %v2613, %v2934
      %v2976 = vadd.f32 %v2614, %v2936
      %v2977 = vadd.f32 %v2615, %v2939
      %v2978 = vadd.f32 %v2616, %v2941
      %2979 = vst.msk [vmem:[#allocation2] sm:$0xff] %vm172, %v2943
      %2980 = vst.msk [vmem:[#allocation2 + $0x8] sm:$0xff] %vm172, %v2944
      %2981 = vst.msk [vmem:[#allocation2 + $0x10] sm:$0xff] %vm172, %v2945
      %2982 = vst.msk [vmem:[#allocation2 + $0x18] sm:$0xff] %vm172, %v2946
      %2983 = vst.msk [vmem:[#allocation2 + $0x20] sm:$0xff] %vm172, %v2947
      %2984 = vst.msk [vmem:[#allocation2 + $0x28] sm:$0xff] %vm172, %v2948
      %2985 = vst.msk [vmem:[#allocation2 + $0x30] sm:$0xff] %vm172, %v2949
      %2986 = vst.msk [vmem:[#allocation2 + $0x38] sm:$0xff] %vm172, %v2950
      %2987 = vst.msk [vmem:[#allocation2 + $0x40] sm:$0xff] %vm172, %v2951
      %2988 = vst.msk [vmem:[#allocation2 + $0x48] sm:$0xff] %vm172, %v2952
      %2989 = vst.msk [vmem:[#allocation2 + $0x50] sm:$0xff] %vm172, %v2953
      %2990 = vst.msk [vmem:[#allocation2 + $0x58] sm:$0xff] %vm172, %v2954
      %2991 = vst.msk [vmem:[#allocation2 + $0x60] sm:$0xff] %vm172, %v2955
      %2992 = vst.msk [vmem:[#allocation2 + $0x68] sm:$0xff] %vm172, %v2956
      %2993 = vst.msk [vmem:[#allocation2 + $0x70] sm:$0xff] %vm172, %v2957
      %2994 = vst.msk [vmem:[#allocation2 + $0x78] sm:$0xff] %vm172, %v2958
      %2995 = vst.msk [vmem:[#allocation2 + $0x80] sm:$0xff] %vm172, %v2959
      %2996 = vst.msk [vmem:[#allocation2 + $0x88] sm:$0xff] %vm172, %v2960
      %2997 = vst.msk [vmem:[#allocation2 + $0x90] sm:$0xff] %vm172, %v2961
      %2998 = vst.msk [vmem:[#allocation2 + $0x98] sm:$0xff] %vm172, %v2962
      %2999 = vst.msk [vmem:[#allocation2 + $0xa0] sm:$0xff] %vm172, %v2963
      %3000 = vst.msk [vmem:[#allocation2 + $0xa8] sm:$0xff] %vm172, %v2964
      %3001 = vst.msk [vmem:[#allocation2 + $0xb0] sm:$0xff] %vm172, %v2965
      %3002 = vst.msk [vmem:[#allocation2 + $0xb8] sm:$0xff] %vm172, %v2966
      %3003 = vst.msk [vmem:[#allocation2 + $0xc0] sm:$0xff] %vm172, %v2967
      %3004 = vst.msk [vmem:[#allocation2 + $0xc8] sm:$0xff] %vm172, %v2968
      %3005 = vst.msk [vmem:[#allocation2 + $0xd0] sm:$0xff] %vm172, %v2969
      %3006 = vst.msk [vmem:[#allocation2 + $0xd8] sm:$0xff] %vm172, %v2970
      %3007 = vst.msk [vmem:[#allocation2 + $0xe0] sm:$0xff] %vm172, %v2971
      %3008 = vst.msk [vmem:[#allocation2 + $0xe8] sm:$0xff] %vm172, %v2972
      %3009 = vst.msk [vmem:[#allocation2 + $0xf0] sm:$0xff] %vm172, %v2973
      %3010 = vst.msk [vmem:[#allocation2 + $0xf8] sm:$0xff] %vm172, %v2974
      %3011 = vst.msk [vmem:[#allocation2 + $0x100] sm:$0xff] %vm172, %v2975
      %3012 = vst.msk [vmem:[#allocation2 + $0x108] sm:$0xff] %vm172, %v2976
      %3013 = vst.msk [vmem:[#allocation2 + $0x110] sm:$0xff] %vm172, %v2977
      %3014 = vst.msk [vmem:[#allocation2 + $0x118] sm:$0xff] %vm172, %v2978
      %v3015 = vld [vmem:[#allocation2] sm:$0xff]
      %v3016 = vld [vmem:[#allocation2 + $0x8] sm:$0xff]
      %v3017 = vld [vmem:[#allocation2 + $0x10] sm:$0xff]
      %v3018 = vld [vmem:[#allocation2 + $0x18] sm:$0xff]
      %v3019 = vld [vmem:[#allocation2 + $0x20] sm:$0xff]
      %v3020 = vld [vmem:[#allocation2 + $0x28] sm:$0xff]
      %v3021 = vld [vmem:[#allocation2 + $0x30] sm:$0xff]
      %v3022 = vld [vmem:[#allocation2 + $0x38] sm:$0xff]
      %v3023 = vld [vmem:[#allocation2 + $0x40] sm:$0xff]
      %v3024 = vld [vmem:[#allocation2 + $0x48] sm:$0xff]
      %v3025 = vld [vmem:[#allocation2 + $0x50] sm:$0xff]
      %v3026 = vld [vmem:[#allocation2 + $0x58] sm:$0xff]
      %v3027 = vld [vmem:[#allocation2 + $0x60] sm:$0xff]
      %v3028 = vld [vmem:[#allocation2 + $0x68] sm:$0xff]
      %v3029 = vld [vmem:[#allocation2 + $0x70] sm:$0xff]
      %v3030 = vld [vmem:[#allocation2 + $0x78] sm:$0xff]
      %v3031 = vld [vmem:[#allocation2 + $0x80] sm:$0xff]
      %v3032 = vld [vmem:[#allocation2 + $0x88] sm:$0xff]
      %v3033 = vld [vmem:[#allocation2 + $0x90] sm:$0xff]
      %v3034 = vld [vmem:[#allocation2 + $0x98] sm:$0xff]
      %v3035 = vld [vmem:[#allocation2 + $0xa0] sm:$0xff]
      %v3036 = vld [vmem:[#allocation2 + $0xa8] sm:$0xff]
      %v3037 = vld [vmem:[#allocation2 + $0xb0] sm:$0xff]
      %v3038 = vld [vmem:[#allocation2 + $0xb8] sm:$0xff]
      %v3039 = vld [vmem:[#allocation2 + $0xc0] sm:$0xff]
      %v3040 = vld [vmem:[#allocation2 + $0xc8] sm:$0xff]
      %v3041 = vld [vmem:[#allocation2 + $0xd0] sm:$0xff]
      %v3042 = vld [vmem:[#allocation2 + $0xd8] sm:$0xff]
      %v3043 = vld [vmem:[#allocation2 + $0xe0] sm:$0xff]
      %v3044 = vld [vmem:[#allocation2 + $0xe8] sm:$0xff]
      %v3045 = vld [vmem:[#allocation2 + $0xf0] sm:$0xff]
      %v3046 = vld [vmem:[#allocation2 + $0xf8] sm:$0xff]
      %v3047 = vld [vmem:[#allocation2 + $0x100] sm:$0xff]
      %v3048 = vld [vmem:[#allocation2 + $0x108] sm:$0xff]
      %v3049 = vld [vmem:[#allocation2 + $0x110] sm:$0xff]
      %v3050 = vld [vmem:[#allocation2 + $0x118] sm:$0xff]
      %v3051 = vld [vmem:[%s165 + $0x10] sm:$0xc]
      %v3052 = vld [vmem:[%s165 + $0x14] sm:$0xf]
      %v3053 = vld [vmem:[%s165 + $0x18] sm:$0xf]
      %v3054 = vld [vmem:[%s165 + $0x1c] sm:$0xf]
      %v3055 = vld [vmem:[%s165 + $0x20] sm:$0xf]
      %v3056 = vld [vmem:[%s165 + $0x24] sm:$0xf]
      %v3057 = vld [vmem:[%s165 + $0x28] sm:$0xf]
      %v3058 = vld [vmem:[%s165 + $0x2c] sm:$0xf]
      %v3059 = vld [vmem:[%s165 + $0x30] sm:$0xf]
      %v3060 = vld [vmem:[%s165 + $0x34] sm:$0xf]
      %v3061 = vld [vmem:[%s165 + $0x38] sm:$0xf]
      %v3062 = vld [vmem:[%s165 + $0x3c] sm:$0xf]
      %v3063 = vld [vmem:[%s165 + $0x40] sm:$0xf]
      %v3064 = vld [vmem:[%s165 + $0x44] sm:$0xf]
      %v3065 = vld [vmem:[%s165 + $0x48] sm:$0xf]
      %v3066 = vld [vmem:[%s165 + $0x4c] sm:$0xf]
      %v3067 = vld [vmem:[%s165 + $0x50] sm:$0xf]
      %v3068 = vld [vmem:[%s165 + $0x54] sm:$0xf]
      %v3069 = vld [vmem:[%s165 + $0x58] sm:$0xf]
      %v3070 = vld [vmem:[%s165 + $0x5c] sm:$0xf]
      %v3071 = vld [vmem:[%s165 + $0x60] sm:$0xf]
      %v3072 = vld [vmem:[%s165 + $0x64] sm:$0xf]
      %v3073 = vld [vmem:[%s165 + $0x68] sm:$0xf]
      %v3074 = vld [vmem:[%s165 + $0x6c] sm:$0xf]
      %v3075 = vld [vmem:[%s165 + $0x70] sm:$0xf]
      %v3076 = vld [vmem:[%s165 + $0x74] sm:$0xf]
      %v3077 = vld [vmem:[%s165 + $0x78] sm:$0xf]
      %v3078 = vld [vmem:[%s165 + $0x7c] sm:$0xf]
      %v3079 = vld [vmem:[%s165 + $0x80] sm:$0xf]
      %v3080 = vld [vmem:[%s165 + $0x84] sm:$0xf]
      %v3081 = vld [vmem:[%s165 + $0x88] sm:$0xf]
      %v3082 = vld [vmem:[%s165 + $0x8c] sm:$0xf]
      %v3083 = vld [vmem:[%s165 + $0x90] sm:$0xf]
      %v3084 = vld [vmem:[%s165 + $0x94] sm:$0xf]
      %v3085 = vld [vmem:[%s165 + $0x98] sm:$0xf]
      %v3086 = vld [vmem:[%s165 + $0x9c] sm:$0xf]
      %v3087 = vld [vmem:[%s165 + $0xa0] sm:$0x3]
      %s3088 = scalar_lea.vmem %s1, 12
      %v3089 = vld [vmem:[%s3088] sm:$0x3]
      %v3127 = vunpack.c.l.b16 %v3051
      %v3128 = vunpack.c.l.b16 %v3052
      %v3129 = vunpack.c.l.b16 %v3053
      %v3130 = vunpack.c.l.b16 %v3054
      %v3131 = vunpack.c.l.b16 %v3055
      %v3132 = vunpack.c.l.b16 %v3056
      %v3133 = vunpack.c.l.b16 %v3057
      %v3134 = vunpack.c.l.b16 %v3058
      %v3135 = vunpack.c.l.b16 %v3059
      %v3136 = vunpack.c.l.b16 %v3060
      %v3137 = vunpack.c.l.b16 %v3061
      %v3138 = vunpack.c.l.b16 %v3062
      %v3139 = vunpack.c.l.b16 %v3063
      %v3140 = vunpack.c.l.b16 %v3064
      %v3141 = vunpack.c.l.b16 %v3065
      %v3142 = vunpack.c.l.b16 %v3066
      %v3143 = vunpack.c.l.b16 %v3067
      %v3144 = vunpack.c.l.b16 %v3068
      %v3145 = vunpack.c.l.b16 %v3069
      %v3146 = vunpack.c.l.b16 %v3070
      %v3147 = vunpack.c.l.b16 %v3071
      %v3148 = vunpack.c.l.b16 %v3072
      %v3149 = vunpack.c.l.b16 %v3073
      %v3150 = vunpack.c.l.b16 %v3074
      %v3151 = vunpack.c.l.b16 %v3075
      %v3152 = vunpack.c.l.b16 %v3076
      %v3153 = vunpack.c.l.b16 %v3077
      %v3154 = vunpack.c.l.b16 %v3078
      %v3155 = vunpack.c.l.b16 %v3079
      %v3156 = vunpack.c.l.b16 %v3080
      %v3157 = vunpack.c.l.b16 %v3081
      %v3158 = vunpack.c.l.b16 %v3082
      %v3159 = vunpack.c.l.b16 %v3083
      %v3160 = vunpack.c.l.b16 %v3084
      %v3161 = vunpack.c.l.b16 %v3085
      %v3162 = vunpack.c.l.b16 %v3086
      %v3163 = vunpack.c.l.b16 %v3087
      %v3164 = vpack.c.b16 %v3128, %v3127
      %v3165 = vpack.c.b16 %v3130, %v3129
      %v3166 = vpack.c.b16 %v3132, %v3131
      %v3167 = vpack.c.b16 %v3134, %v3133
      %v3168 = vpack.c.b16 %v3136, %v3135
      %v3169 = vpack.c.b16 %v3138, %v3137
      %v3170 = vpack.c.b16 %v3140, %v3139
      %v3171 = vpack.c.b16 %v3142, %v3141
      %v3172 = vpack.c.b16 %v3144, %v3143
      %v3173 = vpack.c.b16 %v3146, %v3145
      %v3174 = vpack.c.b16 %v3148, %v3147
      %v3175 = vpack.c.b16 %v3150, %v3149
      %v3176 = vpack.c.b16 %v3152, %v3151
      %v3177 = vpack.c.b16 %v3154, %v3153
      %v3178 = vpack.c.b16 %v3156, %v3155
      %v3179 = vpack.c.b16 %v3158, %v3157
      %v3180 = vpack.c.b16 %v3160, %v3159
      %v3181 = vpack.c.b16 %v3162, %v3161
      %v3182 = vpack.c.b16 %v3163, %v3163
      %v3183 = vrot.slane %v3164, 2
      %v3184 = vrot.slane %v3165, 2
      %v3185 = vsel %vm2749, %v3183, %v3184
      %v3186 = vrot.slane %v3166, 2
      %v3187 = vsel %vm2749, %v3184, %v3186
      %v3188 = vrot.slane %v3167, 2
      %v3189 = vsel %vm2749, %v3186, %v3188
      %v3190 = vrot.slane %v3168, 2
      %v3191 = vsel %vm2749, %v3188, %v3190
      %v3192 = vrot.slane %v3169, 2
      %v3193 = vsel %vm2749, %v3190, %v3192
      %v3194 = vrot.slane %v3170, 2
      %v3195 = vsel %vm2749, %v3192, %v3194
      %v3196 = vrot.slane %v3171, 2
      %v3197 = vsel %vm2749, %v3194, %v3196
      %v3198 = vrot.slane %v3172, 2
      %v3199 = vsel %vm2749, %v3196, %v3198
      %v3200 = vrot.slane %v3173, 2
      %v3201 = vsel %vm2749, %v3198, %v3200
      %v3202 = vrot.slane %v3174, 2
      %v3203 = vsel %vm2749, %v3200, %v3202
      %v3204 = vrot.slane %v3175, 2
      %v3205 = vsel %vm2749, %v3202, %v3204
      %v3206 = vrot.slane %v3176, 2
      %v3207 = vsel %vm2749, %v3204, %v3206
      %v3208 = vrot.slane %v3177, 2
      %v3209 = vsel %vm2749, %v3206, %v3208
      %v3210 = vrot.slane %v3178, 2
      %v3211 = vsel %vm2749, %v3208, %v3210
      %v3212 = vrot.slane %v3179, 2
      %v3213 = vsel %vm2749, %v3210, %v3212
      %v3214 = vrot.slane %v3180, 2
      %v3215 = vsel %vm2749, %v3212, %v3214
      %v3216 = vrot.slane %v3181, 2
      %v3217 = vsel %vm2749, %v3214, %v3216
      %v3218 = vrot.slane %v3182, 2
      %v3219 = vsel %vm2749, %v3216, %v3218
      %v3221 = vsel %vm372, %v3185, 0
      %v3224 = vsel %vm372, %v3187, 0
      %v3227 = vsel %vm372, %v3189, 0
      %v3230 = vsel %vm372, %v3191, 0
      %v3233 = vsel %vm372, %v3193, 0
      %v3236 = vsel %vm372, %v3195, 0
      %v3239 = vsel %vm372, %v3197, 0
      %v3242 = vsel %vm372, %v3199, 0
      %v3245 = vsel %vm372, %v3201, 0
      %v3248 = vsel %vm372, %v3203, 0
      %v3251 = vsel %vm372, %v3205, 0
      %v3254 = vsel %vm372, %v3207, 0
      %v3257 = vsel %vm372, %v3209, 0
      %v3260 = vsel %vm372, %v3211, 0
      %v3263 = vsel %vm372, %v3213, 0
      %v3266 = vsel %vm372, %v3215, 0
      %v3269 = vsel %vm372, %v3217, 0
      %v3272 = vsel %vm372, %v3219, 0
      %v3275 = vsel %vm427, %v3089, 0
      %3277 = vmatpush.bf16.msra.mxu0 0
      %3278 = vmatpush.bf16.msra.mxu0 0
      %3279 = vmatpush.bf16.msra.mxu0 0
      %3280 = vmatpush.bf16.msra.mxu0 0
      %3281 = vmatpush.bf16.msra.mxu0 0
      %3282 = vmatpush.bf16.msra.mxu0 0
      %3283 = vmatpush.bf16.msra.mxu0 0
      %3284 = vmatpush.bf16.msra.mxu0 %v3275
      %3285 = vmatmul.bf16.gmra.mxu0 %v3221
      %v3286 = vpop.f32.mrf.mxu0
      %v3287 = vadd.f32 0.0, %v3286
      %v3288 = vpop.f32.mrf.mxu0
      %v3289 = vadd.f32 0.0, %v3288
      %3290 = vmatmul.bf16.gmra.mxu0 %v3224
      %v3291 = vpop.f32.mrf.mxu0
      %v3292 = vadd.f32 0.0, %v3291
      %v3293 = vpop.f32.mrf.mxu0
      %v3294 = vadd.f32 0.0, %v3293
      %3295 = vmatmul.bf16.gmra.mxu0 %v3227
      %v3296 = vpop.f32.mrf.mxu0
      %v3297 = vadd.f32 0.0, %v3296
      %v3298 = vpop.f32.mrf.mxu0
      %v3299 = vadd.f32 0.0, %v3298
      %3300 = vmatmul.bf16.gmra.mxu0 %v3230
      %v3301 = vpop.f32.mrf.mxu0
      %v3302 = vadd.f32 0.0, %v3301
      %v3303 = vpop.f32.mrf.mxu0
      %v3304 = vadd.f32 0.0, %v3303
      %3305 = vmatmul.bf16.gmra.mxu0 %v3233
      %v3306 = vpop.f32.mrf.mxu0
      %v3307 = vadd.f32 0.0, %v3306
      %v3308 = vpop.f32.mrf.mxu0
      %v3309 = vadd.f32 0.0, %v3308
      %3310 = vmatmul.bf16.gmra.mxu0 %v3236
      %v3311 = vpop.f32.mrf.mxu0
      %v3312 = vadd.f32 0.0, %v3311
      %v3313 = vpop.f32.mrf.mxu0
      %v3314 = vadd.f32 0.0, %v3313
      %3315 = vmatmul.bf16.gmra.mxu0 %v3239
      %v3316 = vpop.f32.mrf.mxu0
      %v3317 = vadd.f32 0.0, %v3316
      %v3318 = vpop.f32.mrf.mxu0
      %v3319 = vadd.f32 0.0, %v3318
      %3320 = vmatmul.bf16.gmra.mxu0 %v3242
      %v3321 = vpop.f32.mrf.mxu0
      %v3322 = vadd.f32 0.0, %v3321
      %v3323 = vpop.f32.mrf.mxu0
      %v3324 = vadd.f32 0.0, %v3323
      %3325 = vmatmul.bf16.gmra.mxu0 %v3245
      %v3326 = vpop.f32.mrf.mxu0
      %v3327 = vadd.f32 0.0, %v3326
      %v3328 = vpop.f32.mrf.mxu0
      %v3329 = vadd.f32 0.0, %v3328
      %3330 = vmatmul.bf16.gmra.mxu0 %v3248
      %v3331 = vpop.f32.mrf.mxu0
      %v3332 = vadd.f32 0.0, %v3331
      %v3333 = vpop.f32.mrf.mxu0
      %v3334 = vadd.f32 0.0, %v3333
      %3335 = vmatmul.bf16.gmra.mxu0 %v3251
      %v3336 = vpop.f32.mrf.mxu0
      %v3337 = vadd.f32 0.0, %v3336
      %v3338 = vpop.f32.mrf.mxu0
      %v3339 = vadd.f32 0.0, %v3338
      %3340 = vmatmul.bf16.gmra.mxu0 %v3254
      %v3341 = vpop.f32.mrf.mxu0
      %v3342 = vadd.f32 0.0, %v3341
      %v3343 = vpop.f32.mrf.mxu0
      %v3344 = vadd.f32 0.0, %v3343
      %3345 = vmatmul.bf16.gmra.mxu0 %v3257
      %v3346 = vpop.f32.mrf.mxu0
      %v3347 = vadd.f32 0.0, %v3346
      %v3348 = vpop.f32.mrf.mxu0
      %v3349 = vadd.f32 0.0, %v3348
      %3350 = vmatmul.bf16.gmra.mxu0 %v3260
      %v3351 = vpop.f32.mrf.mxu0
      %v3352 = vadd.f32 0.0, %v3351
      %v3353 = vpop.f32.mrf.mxu0
      %v3354 = vadd.f32 0.0, %v3353
      %3355 = vmatmul.bf16.gmra.mxu0 %v3263
      %v3356 = vpop.f32.mrf.mxu0
      %v3357 = vadd.f32 0.0, %v3356
      %v3358 = vpop.f32.mrf.mxu0
      %v3359 = vadd.f32 0.0, %v3358
      %3360 = vmatmul.bf16.gmra.mxu0 %v3266
      %v3361 = vpop.f32.mrf.mxu0
      %v3362 = vadd.f32 0.0, %v3361
      %v3363 = vpop.f32.mrf.mxu0
      %v3364 = vadd.f32 0.0, %v3363
      %3365 = vmatmul.bf16.gmra.mxu0 %v3269
      %v3366 = vpop.f32.mrf.mxu0
      %v3367 = vadd.f32 0.0, %v3366
      %v3368 = vpop.f32.mrf.mxu0
      %v3369 = vadd.f32 0.0, %v3368
      %3370 = vmatmul.bf16.gmra.mxu0 %v3272
      %v3371 = vpop.f32.mrf.mxu0
      %v3372 = vadd.f32 0.0, %v3371
      %v3373 = vpop.f32.mrf.mxu0
      %v3374 = vadd.f32 0.0, %v3373
      %3375 = vdwg.mxu0
      %v3376 = vadd.f32 %v3015, %v3287
      %v3377 = vadd.f32 %v3016, %v3289
      %v3378 = vadd.f32 %v3017, %v3292
      %v3379 = vadd.f32 %v3018, %v3294
      %v3380 = vadd.f32 %v3019, %v3297
      %v3381 = vadd.f32 %v3020, %v3299
      %v3382 = vadd.f32 %v3021, %v3302
      %v3383 = vadd.f32 %v3022, %v3304
      %v3384 = vadd.f32 %v3023, %v3307
      %v3385 = vadd.f32 %v3024, %v3309
      %v3386 = vadd.f32 %v3025, %v3312
      %v3387 = vadd.f32 %v3026, %v3314
      %v3388 = vadd.f32 %v3027, %v3317
      %v3389 = vadd.f32 %v3028, %v3319
      %v3390 = vadd.f32 %v3029, %v3322
      %v3391 = vadd.f32 %v3030, %v3324
      %v3392 = vadd.f32 %v3031, %v3327
      %v3393 = vadd.f32 %v3032, %v3329
      %v3394 = vadd.f32 %v3033, %v3332
      %v3395 = vadd.f32 %v3034, %v3334
      %v3396 = vadd.f32 %v3035, %v3337
      %v3397 = vadd.f32 %v3036, %v3339
      %v3398 = vadd.f32 %v3037, %v3342
      %v3399 = vadd.f32 %v3038, %v3344
      %v3400 = vadd.f32 %v3039, %v3347
      %v3401 = vadd.f32 %v3040, %v3349
      %v3402 = vadd.f32 %v3041, %v3352
      %v3403 = vadd.f32 %v3042, %v3354
      %v3404 = vadd.f32 %v3043, %v3357
      %v3405 = vadd.f32 %v3044, %v3359
      %v3406 = vadd.f32 %v3045, %v3362
      %v3407 = vadd.f32 %v3046, %v3364
      %v3408 = vadd.f32 %v3047, %v3367
      %v3409 = vadd.f32 %v3048, %v3369
      %v3410 = vadd.f32 %v3049, %v3372
      %v3411 = vadd.f32 %v3050, %v3374
      %3412 = vst.msk [vmem:[#allocation2] sm:$0xff] %vm172, %v3376
      %3413 = vst.msk [vmem:[#allocation2 + $0x8] sm:$0xff] %vm172, %v3377
      %3414 = vst.msk [vmem:[#allocation2 + $0x10] sm:$0xff] %vm172, %v3378
      %3415 = vst.msk [vmem:[#allocation2 + $0x18] sm:$0xff] %vm172, %v3379
      %3416 = vst.msk [vmem:[#allocation2 + $0x20] sm:$0xff] %vm172, %v3380
      %3417 = vst.msk [vmem:[#allocation2 + $0x28] sm:$0xff] %vm172, %v3381
      %3418 = vst.msk [vmem:[#allocation2 + $0x30] sm:$0xff] %vm172, %v3382
      %3419 = vst.msk [vmem:[#allocation2 + $0x38] sm:$0xff] %vm172, %v3383
      %3420 = vst.msk [vmem:[#allocation2 + $0x40] sm:$0xff] %vm172, %v3384
      %3421 = vst.msk [vmem:[#allocation2 + $0x48] sm:$0xff] %vm172, %v3385
      %3422 = vst.msk [vmem:[#allocation2 + $0x50] sm:$0xff] %vm172, %v3386
      %3423 = vst.msk [vmem:[#allocation2 + $0x58] sm:$0xff] %vm172, %v3387
      %3424 = vst.msk [vmem:[#allocation2 + $0x60] sm:$0xff] %vm172, %v3388
      %3425 = vst.msk [vmem:[#allocation2 + $0x68] sm:$0xff] %vm172, %v3389
      %3426 = vst.msk [vmem:[#allocation2 + $0x70] sm:$0xff] %vm172, %v3390
      %3427 = vst.msk [vmem:[#allocation2 + $0x78] sm:$0xff] %vm172, %v3391
      %3428 = vst.msk [vmem:[#allocation2 + $0x80] sm:$0xff] %vm172, %v3392
      %3429 = vst.msk [vmem:[#allocation2 + $0x88] sm:$0xff] %vm172, %v3393
      %3430 = vst.msk [vmem:[#allocation2 + $0x90] sm:$0xff] %vm172, %v3394
      %3431 = vst.msk [vmem:[#allocation2 + $0x98] sm:$0xff] %vm172, %v3395
      %3432 = vst.msk [vmem:[#allocation2 + $0xa0] sm:$0xff] %vm172, %v3396
      %3433 = vst.msk [vmem:[#allocation2 + $0xa8] sm:$0xff] %vm172, %v3397
      %3434 = vst.msk [vmem:[#allocation2 + $0xb0] sm:$0xff] %vm172, %v3398
      %3435 = vst.msk [vmem:[#allocation2 + $0xb8] sm:$0xff] %vm172, %v3399
      %3436 = vst.msk [vmem:[#allocation2 + $0xc0] sm:$0xff] %vm172, %v3400
      %3437 = vst.msk [vmem:[#allocation2 + $0xc8] sm:$0xff] %vm172, %v3401
      %3438 = vst.msk [vmem:[#allocation2 + $0xd0] sm:$0xff] %vm172, %v3402
      %3439 = vst.msk [vmem:[#allocation2 + $0xd8] sm:$0xff] %vm172, %v3403
      %3440 = vst.msk [vmem:[#allocation2 + $0xe0] sm:$0xff] %vm172, %v3404
      %3441 = vst.msk [vmem:[#allocation2 + $0xe8] sm:$0xff] %vm172, %v3405
      %3442 = vst.msk [vmem:[#allocation2 + $0xf0] sm:$0xff] %vm172, %v3406
      %3443 = vst.msk [vmem:[#allocation2 + $0xf8] sm:$0xff] %vm172, %v3407
      %3444 = vst.msk [vmem:[#allocation2 + $0x100] sm:$0xff] %vm172, %v3408
      %3445 = vst.msk [vmem:[#allocation2 + $0x108] sm:$0xff] %vm172, %v3409
      %3446 = vst.msk [vmem:[#allocation2 + $0x110] sm:$0xff] %vm172, %v3410
      %3447 = vst.msk [vmem:[#allocation2 + $0x118] sm:$0xff] %vm172, %v3411
      %v3448 = vld [vmem:[#allocation2] sm:$0xff]
      %v3449 = vld [vmem:[#allocation2 + $0x8] sm:$0xff]
      %v3450 = vld [vmem:[#allocation2 + $0x10] sm:$0xff]
      %v3451 = vld [vmem:[#allocation2 + $0x18] sm:$0xff]
      %v3452 = vld [vmem:[#allocation2 + $0x20] sm:$0xff]
      %v3453 = vld [vmem:[#allocation2 + $0x28] sm:$0xff]
      %v3454 = vld [vmem:[#allocation2 + $0x30] sm:$0xff]
      %v3455 = vld [vmem:[#allocation2 + $0x38] sm:$0xff]
      %v3456 = vld [vmem:[#allocation2 + $0x40] sm:$0xff]
      %v3457 = vld [vmem:[#allocation2 + $0x48] sm:$0xff]
      %v3458 = vld [vmem:[#allocation2 + $0x50] sm:$0xff]
      %v3459 = vld [vmem:[#allocation2 + $0x58] sm:$0xff]
      %v3460 = vld [vmem:[#allocation2 + $0x60] sm:$0xff]
      %v3461 = vld [vmem:[#allocation2 + $0x68] sm:$0xff]
      %v3462 = vld [vmem:[#allocation2 + $0x70] sm:$0xff]
      %v3463 = vld [vmem:[#allocation2 + $0x78] sm:$0xff]
      %v3464 = vld [vmem:[#allocation2 + $0x80] sm:$0xff]
      %v3465 = vld [vmem:[#allocation2 + $0x88] sm:$0xff]
      %v3466 = vld [vmem:[#allocation2 + $0x90] sm:$0xff]
      %v3467 = vld [vmem:[#allocation2 + $0x98] sm:$0xff]
      %v3468 = vld [vmem:[#allocation2 + $0xa0] sm:$0xff]
      %v3469 = vld [vmem:[#allocation2 + $0xa8] sm:$0xff]
      %v3470 = vld [vmem:[#allocation2 + $0xb0] sm:$0xff]
      %v3471 = vld [vmem:[#allocation2 + $0xb8] sm:$0xff]
      %v3472 = vld [vmem:[#allocation2 + $0xc0] sm:$0xff]
      %v3473 = vld [vmem:[#allocation2 + $0xc8] sm:$0xff]
      %v3474 = vld [vmem:[#allocation2 + $0xd0] sm:$0xff]
      %v3475 = vld [vmem:[#allocation2 + $0xd8] sm:$0xff]
      %v3476 = vld [vmem:[#allocation2 + $0xe0] sm:$0xff]
      %v3477 = vld [vmem:[#allocation2 + $0xe8] sm:$0xff]
      %v3478 = vld [vmem:[#allocation2 + $0xf0] sm:$0xff]
      %v3479 = vld [vmem:[#allocation2 + $0xf8] sm:$0xff]
      %v3480 = vld [vmem:[#allocation2 + $0x100] sm:$0xff]
      %v3481 = vld [vmem:[#allocation2 + $0x108] sm:$0xff]
      %v3482 = vld [vmem:[#allocation2 + $0x110] sm:$0xff]
      %v3483 = vld [vmem:[#allocation2 + $0x118] sm:$0xff]
      %v3484 = vld [vmem:[%s165 + $0x10] sm:$0xc]
      %v3485 = vld [vmem:[%s165 + $0x14] sm:$0xf]
      %v3486 = vld [vmem:[%s165 + $0x18] sm:$0xf]
      %v3487 = vld [vmem:[%s165 + $0x1c] sm:$0xf]
      %v3488 = vld [vmem:[%s165 + $0x20] sm:$0xf]
      %v3489 = vld [vmem:[%s165 + $0x24] sm:$0xf]
      %v3490 = vld [vmem:[%s165 + $0x28] sm:$0xf]
      %v3491 = vld [vmem:[%s165 + $0x2c] sm:$0xf]
      %v3492 = vld [vmem:[%s165 + $0x30] sm:$0xf]
      %v3493 = vld [vmem:[%s165 + $0x34] sm:$0xf]
      %v3494 = vld [vmem:[%s165 + $0x38] sm:$0xf]
      %v3495 = vld [vmem:[%s165 + $0x3c] sm:$0xf]
      %v3496 = vld [vmem:[%s165 + $0x40] sm:$0xf]
      %v3497 = vld [vmem:[%s165 + $0x44] sm:$0xf]
      %v3498 = vld [vmem:[%s165 + $0x48] sm:$0xf]
      %v3499 = vld [vmem:[%s165 + $0x4c] sm:$0xf]
      %v3500 = vld [vmem:[%s165 + $0x50] sm:$0xf]
      %v3501 = vld [vmem:[%s165 + $0x54] sm:$0xf]
      %v3502 = vld [vmem:[%s165 + $0x58] sm:$0xf]
      %v3503 = vld [vmem:[%s165 + $0x5c] sm:$0xf]
      %v3504 = vld [vmem:[%s165 + $0x60] sm:$0xf]
      %v3505 = vld [vmem:[%s165 + $0x64] sm:$0xf]
      %v3506 = vld [vmem:[%s165 + $0x68] sm:$0xf]
      %v3507 = vld [vmem:[%s165 + $0x6c] sm:$0xf]
      %v3508 = vld [vmem:[%s165 + $0x70] sm:$0xf]
      %v3509 = vld [vmem:[%s165 + $0x74] sm:$0xf]
      %v3510 = vld [vmem:[%s165 + $0x78] sm:$0xf]
      %v3511 = vld [vmem:[%s165 + $0x7c] sm:$0xf]
      %v3512 = vld [vmem:[%s165 + $0x80] sm:$0xf]
      %v3513 = vld [vmem:[%s165 + $0x84] sm:$0xf]
      %v3514 = vld [vmem:[%s165 + $0x88] sm:$0xf]
      %v3515 = vld [vmem:[%s165 + $0x8c] sm:$0xf]
      %v3516 = vld [vmem:[%s165 + $0x90] sm:$0xf]
      %v3517 = vld [vmem:[%s165 + $0x94] sm:$0xf]
      %v3518 = vld [vmem:[%s165 + $0x98] sm:$0xf]
      %v3519 = vld [vmem:[%s165 + $0x9c] sm:$0xf]
      %v3520 = vld [vmem:[%s165 + $0xa0] sm:$0x7]
      %s3521 = scalar_lea.vmem %s1, 14
      %v3522 = vld [vmem:[%s3521] sm:$0x3]
      %v3560 = vunpack.c.l.b16 %v3484
      %v3561 = vunpack.c.l.b16 %v3485
      %v3562 = vunpack.c.l.b16 %v3486
      %v3563 = vunpack.c.l.b16 %v3487
      %v3564 = vunpack.c.l.b16 %v3488
      %v3565 = vunpack.c.l.b16 %v3489
      %v3566 = vunpack.c.l.b16 %v3490
      %v3567 = vunpack.c.l.b16 %v3491
      %v3568 = vunpack.c.l.b16 %v3492
      %v3569 = vunpack.c.l.b16 %v3493
      %v3570 = vunpack.c.l.b16 %v3494
      %v3571 = vunpack.c.l.b16 %v3495
      %v3572 = vunpack.c.l.b16 %v3496
      %v3573 = vunpack.c.l.b16 %v3497
      %v3574 = vunpack.c.l.b16 %v3498
      %v3575 = vunpack.c.l.b16 %v3499
      %v3576 = vunpack.c.l.b16 %v3500
      %v3577 = vunpack.c.l.b16 %v3501
      %v3578 = vunpack.c.l.b16 %v3502
      %v3579 = vunpack.c.l.b16 %v3503
      %v3580 = vunpack.c.l.b16 %v3504
      %v3581 = vunpack.c.l.b16 %v3505
      %v3582 = vunpack.c.l.b16 %v3506
      %v3583 = vunpack.c.l.b16 %v3507
      %v3584 = vunpack.c.l.b16 %v3508
      %v3585 = vunpack.c.l.b16 %v3509
      %v3586 = vunpack.c.l.b16 %v3510
      %v3587 = vunpack.c.l.b16 %v3511
      %v3588 = vunpack.c.l.b16 %v3512
      %v3589 = vunpack.c.l.b16 %v3513
      %v3590 = vunpack.c.l.b16 %v3514
      %v3591 = vunpack.c.l.b16 %v3515
      %v3592 = vunpack.c.l.b16 %v3516
      %v3593 = vunpack.c.l.b16 %v3517
      %v3594 = vunpack.c.l.b16 %v3518
      %v3595 = vunpack.c.l.b16 %v3519
      %v3596 = vunpack.c.l.b16 %v3520
      %v3597 = vpack.c.b16 %v3561, %v3560
      %v3598 = vpack.c.b16 %v3563, %v3562
      %v3599 = vpack.c.b16 %v3565, %v3564
      %v3600 = vpack.c.b16 %v3567, %v3566
      %v3601 = vpack.c.b16 %v3569, %v3568
      %v3602 = vpack.c.b16 %v3571, %v3570
      %v3603 = vpack.c.b16 %v3573, %v3572
      %v3604 = vpack.c.b16 %v3575, %v3574
      %v3605 = vpack.c.b16 %v3577, %v3576
      %v3606 = vpack.c.b16 %v3579, %v3578
      %v3607 = vpack.c.b16 %v3581, %v3580
      %v3608 = vpack.c.b16 %v3583, %v3582
      %v3609 = vpack.c.b16 %v3585, %v3584
      %v3610 = vpack.c.b16 %v3587, %v3586
      %v3611 = vpack.c.b16 %v3589, %v3588
      %v3612 = vpack.c.b16 %v3591, %v3590
      %v3613 = vpack.c.b16 %v3593, %v3592
      %v3614 = vpack.c.b16 %v3595, %v3594
      %v3615 = vpack.c.b16 %v3596, %v3596
      %vm3616 = vsmask.f32 5376
      %v3618 = vshrl.u32 %v3597, 16
      %v3620 = vrot.slane %v3618, 2
      %v3621 = vshll.u32 %v3597, 16
      %v3623 = vrot.slane %v3621, 3
      %v3624 = vor.u32 %v3620, %v3623
      %v3626 = vshrl.u32 %v3598, 16
      %v3628 = vrot.slane %v3626, 2
      %v3629 = vshll.u32 %v3598, 16
      %v3631 = vrot.slane %v3629, 3
      %v3632 = vor.u32 %v3628, %v3631
      %v3633 = vsel %vm3616, %v3624, %v3632
      %v3635 = vshrl.u32 %v3599, 16
      %v3637 = vrot.slane %v3635, 2
      %v3638 = vshll.u32 %v3599, 16
      %v3640 = vrot.slane %v3638, 3
      %v3641 = vor.u32 %v3637, %v3640
      %v3642 = vsel %vm3616, %v3632, %v3641
      %v3644 = vshrl.u32 %v3600, 16
      %v3646 = vrot.slane %v3644, 2
      %v3647 = vshll.u32 %v3600, 16
      %v3649 = vrot.slane %v3647, 3
      %v3650 = vor.u32 %v3646, %v3649
      %v3651 = vsel %vm3616, %v3641, %v3650
      %v3653 = vshrl.u32 %v3601, 16
      %v3655 = vrot.slane %v3653, 2
      %v3656 = vshll.u32 %v3601, 16
      %v3658 = vrot.slane %v3656, 3
      %v3659 = vor.u32 %v3655, %v3658
      %v3660 = vsel %vm3616, %v3650, %v3659
      %v3662 = vshrl.u32 %v3602, 16
      %v3664 = vrot.slane %v3662, 2
      %v3665 = vshll.u32 %v3602, 16
      %v3667 = vrot.slane %v3665, 3
      %v3668 = vor.u32 %v3664, %v3667
      %v3669 = vsel %vm3616, %v3659, %v3668
      %v3671 = vshrl.u32 %v3603, 16
      %v3673 = vrot.slane %v3671, 2
      %v3674 = vshll.u32 %v3603, 16
      %v3676 = vrot.slane %v3674, 3
      %v3677 = vor.u32 %v3673, %v3676
      %v3678 = vsel %vm3616, %v3668, %v3677
      %v3680 = vshrl.u32 %v3604, 16
      %v3682 = vrot.slane %v3680, 2
      %v3683 = vshll.u32 %v3604, 16
      %v3685 = vrot.slane %v3683, 3
      %v3686 = vor.u32 %v3682, %v3685
      %v3687 = vsel %vm3616, %v3677, %v3686
      %v3689 = vshrl.u32 %v3605, 16
      %v3691 = vrot.slane %v3689, 2
      %v3692 = vshll.u32 %v3605, 16
      %v3694 = vrot.slane %v3692, 3
      %v3695 = vor.u32 %v3691, %v3694
      %v3696 = vsel %vm3616, %v3686, %v3695
      %v3698 = vshrl.u32 %v3606, 16
      %v3700 = vrot.slane %v3698, 2
      %v3701 = vshll.u32 %v3606, 16
      %v3703 = vrot.slane %v3701, 3
      %v3704 = vor.u32 %v3700, %v3703
      %v3705 = vsel %vm3616, %v3695, %v3704
      %v3707 = vshrl.u32 %v3607, 16
      %v3709 = vrot.slane %v3707, 2
      %v3710 = vshll.u32 %v3607, 16
      %v3712 = vrot.slane %v3710, 3
      %v3713 = vor.u32 %v3709, %v3712
      %v3714 = vsel %vm3616, %v3704, %v3713
      %v3716 = vshrl.u32 %v3608, 16
      %v3718 = vrot.slane %v3716, 2
      %v3719 = vshll.u32 %v3608, 16
      %v3721 = vrot.slane %v3719, 3
      %v3722 = vor.u32 %v3718, %v3721
      %v3723 = vsel %vm3616, %v3713, %v3722
      %v3725 = vshrl.u32 %v3609, 16
      %v3727 = vrot.slane %v3725, 2
      %v3728 = vshll.u32 %v3609, 16
      %v3730 = vrot.slane %v3728, 3
      %v3731 = vor.u32 %v3727, %v3730
      %v3732 = vsel %vm3616, %v3722, %v3731
      %v3734 = vshrl.u32 %v3610, 16
      %v3736 = vrot.slane %v3734, 2
      %v3737 = vshll.u32 %v3610, 16
      %v3739 = vrot.slane %v3737, 3
      %v3740 = vor.u32 %v3736, %v3739
      %v3741 = vsel %vm3616, %v3731, %v3740
      %v3743 = vshrl.u32 %v3611, 16
      %v3745 = vrot.slane %v3743, 2
      %v3746 = vshll.u32 %v3611, 16
      %v3748 = vrot.slane %v3746, 3
      %v3749 = vor.u32 %v3745, %v3748
      %v3750 = vsel %vm3616, %v3740, %v3749
      %v3752 = vshrl.u32 %v3612, 16
      %v3754 = vrot.slane %v3752, 2
      %v3755 = vshll.u32 %v3612, 16
      %v3757 = vrot.slane %v3755, 3
      %v3758 = vor.u32 %v3754, %v3757
      %v3759 = vsel %vm3616, %v3749, %v3758
      %v3761 = vshrl.u32 %v3613, 16
      %v3763 = vrot.slane %v3761, 2
      %v3764 = vshll.u32 %v3613, 16
      %v3766 = vrot.slane %v3764, 3
      %v3767 = vor.u32 %v3763, %v3766
      %v3768 = vsel %vm3616, %v3758, %v3767
      %v3770 = vshrl.u32 %v3614, 16
      %v3772 = vrot.slane %v3770, 2
      %v3773 = vshll.u32 %v3614, 16
      %v3775 = vrot.slane %v3773, 3
      %v3776 = vor.u32 %v3772, %v3775
      %v3777 = vsel %vm3616, %v3767, %v3776
      %v3779 = vshrl.u32 %v3615, 16
      %v3781 = vrot.slane %v3779, 2
      %v3782 = vshll.u32 %v3615, 16
      %v3784 = vrot.slane %v3782, 3
      %v3785 = vor.u32 %v3781, %v3784
      %v3786 = vsel %vm3616, %v3776, %v3785
      %v3788 = vsel %vm372, %v3633, 0
      %v3791 = vsel %vm372, %v3642, 0
      %v3794 = vsel %vm372, %v3651, 0
      %v3797 = vsel %vm372, %v3660, 0
      %v3800 = vsel %vm372, %v3669, 0
      %v3803 = vsel %vm372, %v3678, 0
      %v3806 = vsel %vm372, %v3687, 0
      %v3809 = vsel %vm372, %v3696, 0
      %v3812 = vsel %vm372, %v3705, 0
      %v3815 = vsel %vm372, %v3714, 0
      %v3818 = vsel %vm372, %v3723, 0
      %v3821 = vsel %vm372, %v3732, 0
      %v3824 = vsel %vm372, %v3741, 0
      %v3827 = vsel %vm372, %v3750, 0
      %v3830 = vsel %vm372, %v3759, 0
      %v3833 = vsel %vm372, %v3768, 0
      %v3836 = vsel %vm372, %v3777, 0
      %v3839 = vsel %vm372, %v3786, 0
      %v3842 = vsel %vm427, %v3522, 0
      %3844 = vmatpush.bf16.msra.mxu0 0
      %3845 = vmatpush.bf16.msra.mxu0 0
      %3846 = vmatpush.bf16.msra.mxu0 0
      %3847 = vmatpush.bf16.msra.mxu0 0
      %3848 = vmatpush.bf16.msra.mxu0 0
      %3849 = vmatpush.bf16.msra.mxu0 0
      %3850 = vmatpush.bf16.msra.mxu0 0
      %3851 = vmatpush.bf16.msra.mxu0 %v3842
      %3852 = vmatmul.bf16.gmra.mxu0 %v3788
      %v3853 = vpop.f32.mrf.mxu0
      %v3854 = vadd.f32 0.0, %v3853
      %v3855 = vpop.f32.mrf.mxu0
      %v3856 = vadd.f32 0.0, %v3855
      %3857 = vmatmul.bf16.gmra.mxu0 %v3791
      %v3858 = vpop.f32.mrf.mxu0
      %v3859 = vadd.f32 0.0, %v3858
      %v3860 = vpop.f32.mrf.mxu0
      %v3861 = vadd.f32 0.0, %v3860
      %3862 = vmatmul.bf16.gmra.mxu0 %v3794
      %v3863 = vpop.f32.mrf.mxu0
      %v3864 = vadd.f32 0.0, %v3863
      %v3865 = vpop.f32.mrf.mxu0
      %v3866 = vadd.f32 0.0, %v3865
      %3867 = vmatmul.bf16.gmra.mxu0 %v3797
      %v3868 = vpop.f32.mrf.mxu0
      %v3869 = vadd.f32 0.0, %v3868
      %v3870 = vpop.f32.mrf.mxu0
      %v3871 = vadd.f32 0.0, %v3870
      %3872 = vmatmul.bf16.gmra.mxu0 %v3800
      %v3873 = vpop.f32.mrf.mxu0
      %v3874 = vadd.f32 0.0, %v3873
      %v3875 = vpop.f32.mrf.mxu0
      %v3876 = vadd.f32 0.0, %v3875
      %3877 = vmatmul.bf16.gmra.mxu0 %v3803
      %v3878 = vpop.f32.mrf.mxu0
      %v3879 = vadd.f32 0.0, %v3878
      %v3880 = vpop.f32.mrf.mxu0
      %v3881 = vadd.f32 0.0, %v3880
      %3882 = vmatmul.bf16.gmra.mxu0 %v3806
      %v3883 = vpop.f32.mrf.mxu0
      %v3884 = vadd.f32 0.0, %v3883
      %v3885 = vpop.f32.mrf.mxu0
      %v3886 = vadd.f32 0.0, %v3885
      %3887 = vmatmul.bf16.gmra.mxu0 %v3809
      %v3888 = vpop.f32.mrf.mxu0
      %v3889 = vadd.f32 0.0, %v3888
      %v3890 = vpop.f32.mrf.mxu0
      %v3891 = vadd.f32 0.0, %v3890
      %3892 = vmatmul.bf16.gmra.mxu0 %v3812
      %v3893 = vpop.f32.mrf.mxu0
      %v3894 = vadd.f32 0.0, %v3893
      %v3895 = vpop.f32.mrf.mxu0
      %v3896 = vadd.f32 0.0, %v3895
      %3897 = vmatmul.bf16.gmra.mxu0 %v3815
      %v3898 = vpop.f32.mrf.mxu0
      %v3899 = vadd.f32 0.0, %v3898
      %v3900 = vpop.f32.mrf.mxu0
      %v3901 = vadd.f32 0.0, %v3900
      %3902 = vmatmul.bf16.gmra.mxu0 %v3818
      %v3903 = vpop.f32.mrf.mxu0
      %v3904 = vadd.f32 0.0, %v3903
      %v3905 = vpop.f32.mrf.mxu0
      %v3906 = vadd.f32 0.0, %v3905
      %3907 = vmatmul.bf16.gmra.mxu0 %v3821
      %v3908 = vpop.f32.mrf.mxu0
      %v3909 = vadd.f32 0.0, %v3908
      %v3910 = vpop.f32.mrf.mxu0
      %v3911 = vadd.f32 0.0, %v3910
      %3912 = vmatmul.bf16.gmra.mxu0 %v3824
      %v3913 = vpop.f32.mrf.mxu0
      %v3914 = vadd.f32 0.0, %v3913
      %v3915 = vpop.f32.mrf.mxu0
      %v3916 = vadd.f32 0.0, %v3915
      %3917 = vmatmul.bf16.gmra.mxu0 %v3827
      %v3918 = vpop.f32.mrf.mxu0
      %v3919 = vadd.f32 0.0, %v3918
      %v3920 = vpop.f32.mrf.mxu0
      %v3921 = vadd.f32 0.0, %v3920
      %3922 = vmatmul.bf16.gmra.mxu0 %v3830
      %v3923 = vpop.f32.mrf.mxu0
      %v3924 = vadd.f32 0.0, %v3923
      %v3925 = vpop.f32.mrf.mxu0
      %v3926 = vadd.f32 0.0, %v3925
      %3927 = vmatmul.bf16.gmra.mxu0 %v3833
      %v3928 = vpop.f32.mrf.mxu0
      %v3929 = vadd.f32 0.0, %v3928
      %v3930 = vpop.f32.mrf.mxu0
      %v3931 = vadd.f32 0.0, %v3930
      %3932 = vmatmul.bf16.gmra.mxu0 %v3836
      %v3933 = vpop.f32.mrf.mxu0
      %v3934 = vadd.f32 0.0, %v3933
      %v3935 = vpop.f32.mrf.mxu0
      %v3936 = vadd.f32 0.0, %v3935
      %3937 = vmatmul.bf16.gmra.mxu0 %v3839
      %v3938 = vpop.f32.mrf.mxu0
      %v3939 = vadd.f32 0.0, %v3938
      %v3940 = vpop.f32.mrf.mxu0
      %v3941 = vadd.f32 0.0, %v3940
      %3942 = vdwg.mxu0
      %v3943 = vadd.f32 %v3448, %v3854
      %v3944 = vadd.f32 %v3449, %v3856
      %v3945 = vadd.f32 %v3450, %v3859
      %v3946 = vadd.f32 %v3451, %v3861
      %v3947 = vadd.f32 %v3452, %v3864
      %v3948 = vadd.f32 %v3453, %v3866
      %v3949 = vadd.f32 %v3454, %v3869
      %v3950 = vadd.f32 %v3455, %v3871
      %v3951 = vadd.f32 %v3456, %v3874
      %v3952 = vadd.f32 %v3457, %v3876
      %v3953 = vadd.f32 %v3458, %v3879
      %v3954 = vadd.f32 %v3459, %v3881
      %v3955 = vadd.f32 %v3460, %v3884
      %v3956 = vadd.f32 %v3461, %v3886
      %v3957 = vadd.f32 %v3462, %v3889
      %v3958 = vadd.f32 %v3463, %v3891
      %v3959 = vadd.f32 %v3464, %v3894
      %v3960 = vadd.f32 %v3465, %v3896
      %v3961 = vadd.f32 %v3466, %v3899
      %v3962 = vadd.f32 %v3467, %v3901
      %v3963 = vadd.f32 %v3468, %v3904
      %v3964 = vadd.f32 %v3469, %v3906
      %v3965 = vadd.f32 %v3470, %v3909
      %v3966 = vadd.f32 %v3471, %v3911
      %v3967 = vadd.f32 %v3472, %v3914
      %v3968 = vadd.f32 %v3473, %v3916
      %v3969 = vadd.f32 %v3474, %v3919
      %v3970 = vadd.f32 %v3475, %v3921
      %v3971 = vadd.f32 %v3476, %v3924
      %v3972 = vadd.f32 %v3477, %v3926
      %v3973 = vadd.f32 %v3478, %v3929
      %v3974 = vadd.f32 %v3479, %v3931
      %v3975 = vadd.f32 %v3480, %v3934
      %v3976 = vadd.f32 %v3481, %v3936
      %v3977 = vadd.f32 %v3482, %v3939
      %v3978 = vadd.f32 %v3483, %v3941
      %3979 = vst.msk [vmem:[#allocation2] sm:$0xff] %vm172, %v3943
      %3980 = vst.msk [vmem:[#allocation2 + $0x8] sm:$0xff] %vm172, %v3944
      %3981 = vst.msk [vmem:[#allocation2 + $0x10] sm:$0xff] %vm172, %v3945
      %3982 = vst.msk [vmem:[#allocation2 + $0x18] sm:$0xff] %vm172, %v3946
      %3983 = vst.msk [vmem:[#allocation2 + $0x20] sm:$0xff] %vm172, %v3947
      %3984 = vst.msk [vmem:[#allocation2 + $0x28] sm:$0xff] %vm172, %v3948
      %3985 = vst.msk [vmem:[#allocation2 + $0x30] sm:$0xff] %vm172, %v3949
      %3986 = vst.msk [vmem:[#allocation2 + $0x38] sm:$0xff] %vm172, %v3950
      %3987 = vst.msk [vmem:[#allocation2 + $0x40] sm:$0xff] %vm172, %v3951
      %3988 = vst.msk [vmem:[#allocation2 + $0x48] sm:$0xff] %vm172, %v3952
      %3989 = vst.msk [vmem:[#allocation2 + $0x50] sm:$0xff] %vm172, %v3953
      %3990 = vst.msk [vmem:[#allocation2 + $0x58] sm:$0xff] %vm172, %v3954
      %3991 = vst.msk [vmem:[#allocation2 + $0x60] sm:$0xff] %vm172, %v3955
      %3992 = vst.msk [vmem:[#allocation2 + $0x68] sm:$0xff] %vm172, %v3956
      %3993 = vst.msk [vmem:[#allocation2 + $0x70] sm:$0xff] %vm172, %v3957
      %3994 = vst.msk [vmem:[#allocation2 + $0x78] sm:$0xff] %vm172, %v3958
      %3995 = vst.msk [vmem:[#allocation2 + $0x80] sm:$0xff] %vm172, %v3959
      %3996 = vst.msk [vmem:[#allocation2 + $0x88] sm:$0xff] %vm172, %v3960
      %3997 = vst.msk [vmem:[#allocation2 + $0x90] sm:$0xff] %vm172, %v3961
      %3998 = vst.msk [vmem:[#allocation2 + $0x98] sm:$0xff] %vm172, %v3962
      %3999 = vst.msk [vmem:[#allocation2 + $0xa0] sm:$0xff] %vm172, %v3963
      %4000 = vst.msk [vmem:[#allocation2 + $0xa8] sm:$0xff] %vm172, %v3964
      %4001 = vst.msk [vmem:[#allocation2 + $0xb0] sm:$0xff] %vm172, %v3965
      %4002 = vst.msk [vmem:[#allocation2 + $0xb8] sm:$0xff] %vm172, %v3966
      %4003 = vst.msk [vmem:[#allocation2 + $0xc0] sm:$0xff] %vm172, %v3967
      %4004 = vst.msk [vmem:[#allocation2 + $0xc8] sm:$0xff] %vm172, %v3968
      %4005 = vst.msk [vmem:[#allocation2 + $0xd0] sm:$0xff] %vm172, %v3969
      %4006 = vst.msk [vmem:[#allocation2 + $0xd8] sm:$0xff] %vm172, %v3970
      %4007 = vst.msk [vmem:[#allocation2 + $0xe0] sm:$0xff] %vm172, %v3971
      %4008 = vst.msk [vmem:[#allocation2 + $0xe8] sm:$0xff] %vm172, %v3972
      %4009 = vst.msk [vmem:[#allocation2 + $0xf0] sm:$0xff] %vm172, %v3973
      %4010 = vst.msk [vmem:[#allocation2 + $0xf8] sm:$0xff] %vm172, %v3974
      %4011 = vst.msk [vmem:[#allocation2 + $0x100] sm:$0xff] %vm172, %v3975
      %4012 = vst.msk [vmem:[#allocation2 + $0x108] sm:$0xff] %vm172, %v3976
      %4013 = vst.msk [vmem:[#allocation2 + $0x110] sm:$0xff] %vm172, %v3977
      %4014 = vst.msk [vmem:[#allocation2 + $0x118] sm:$0xff] %vm172, %v3978
      %v4015 = vld [vmem:[#allocation2] sm:$0xff]
      %v4016 = vld [vmem:[#allocation2 + $0x8] sm:$0xff]
      %v4017 = vld [vmem:[#allocation2 + $0x10] sm:$0xff]
      %v4018 = vld [vmem:[#allocation2 + $0x18] sm:$0xff]
      %v4019 = vld [vmem:[#allocation2 + $0x20] sm:$0xff]
      %v4020 = vld [vmem:[#allocation2 + $0x28] sm:$0xff]
      %v4021 = vld [vmem:[#allocation2 + $0x30] sm:$0xff]
      %v4022 = vld [vmem:[#allocation2 + $0x38] sm:$0xff]
      %v4023 = vld [vmem:[#allocation2 + $0x40] sm:$0xff]
      %v4024 = vld [vmem:[#allocation2 + $0x48] sm:$0xff]
      %v4025 = vld [vmem:[#allocation2 + $0x50] sm:$0xff]
      %v4026 = vld [vmem:[#allocation2 + $0x58] sm:$0xff]
      %v4027 = vld [vmem:[#allocation2 + $0x60] sm:$0xff]
      %v4028 = vld [vmem:[#allocation2 + $0x68] sm:$0xff]
      %v4029 = vld [vmem:[#allocation2 + $0x70] sm:$0xff]
      %v4030 = vld [vmem:[#allocation2 + $0x78] sm:$0xff]
      %v4031 = vld [vmem:[#allocation2 + $0x80] sm:$0xff]
      %v4032 = vld [vmem:[#allocation2 + $0x88] sm:$0xff]
      %v4033 = vld [vmem:[#allocation2 + $0x90] sm:$0xff]
      %v4034 = vld [vmem:[#allocation2 + $0x98] sm:$0xff]
      %v4035 = vld [vmem:[#allocation2 + $0xa0] sm:$0xff]
      %v4036 = vld [vmem:[#allocation2 + $0xa8] sm:$0xff]
      %v4037 = vld [vmem:[#allocation2 + $0xb0] sm:$0xff]
      %v4038 = vld [vmem:[#allocation2 + $0xb8] sm:$0xff]
      %v4039 = vld [vmem:[#allocation2 + $0xc0] sm:$0xff]
      %v4040 = vld [vmem:[#allocation2 + $0xc8] sm:$0xff]
      %v4041 = vld [vmem:[#allocation2 + $0xd0] sm:$0xff]
      %v4042 = vld [vmem:[#allocation2 + $0xd8] sm:$0xff]
      %v4043 = vld [vmem:[#allocation2 + $0xe0] sm:$0xff]
      %v4044 = vld [vmem:[#allocation2 + $0xe8] sm:$0xff]
      %v4045 = vld [vmem:[#allocation2 + $0xf0] sm:$0xff]
      %v4046 = vld [vmem:[#allocation2 + $0xf8] sm:$0xff]
      %v4047 = vld [vmem:[#allocation2 + $0x100] sm:$0xff]
      %v4048 = vld [vmem:[#allocation2 + $0x108] sm:$0xff]
      %v4049 = vld [vmem:[#allocation2 + $0x110] sm:$0xff]
      %v4050 = vld [vmem:[#allocation2 + $0x118] sm:$0xff]
      %v4051 = vld [vmem:[%s165 + $0x10] sm:$0x8]
      %v4052 = vld [vmem:[%s165 + $0x14] sm:$0xf]
      %v4053 = vld [vmem:[%s165 + $0x18] sm:$0xf]
      %v4054 = vld [vmem:[%s165 + $0x1c] sm:$0xf]
      %v4055 = vld [vmem:[%s165 + $0x20] sm:$0xf]
      %v4056 = vld [vmem:[%s165 + $0x24] sm:$0xf]
      %v4057 = vld [vmem:[%s165 + $0x28] sm:$0xf]
      %v4058 = vld [vmem:[%s165 + $0x2c] sm:$0xf]
      %v4059 = vld [vmem:[%s165 + $0x30] sm:$0xf]
      %v4060 = vld [vmem:[%s165 + $0x34] sm:$0xf]
      %v4061 = vld [vmem:[%s165 + $0x38] sm:$0xf]
      %v4062 = vld [vmem:[%s165 + $0x3c] sm:$0xf]
      %v4063 = vld [vmem:[%s165 + $0x40] sm:$0xf]
      %v4064 = vld [vmem:[%s165 + $0x44] sm:$0xf]
      %v4065 = vld [vmem:[%s165 + $0x48] sm:$0xf]
      %v4066 = vld [vmem:[%s165 + $0x4c] sm:$0xf]
      %v4067 = vld [vmem:[%s165 + $0x50] sm:$0xf]
      %v4068 = vld [vmem:[%s165 + $0x54] sm:$0xf]
      %v4069 = vld [vmem:[%s165 + $0x58] sm:$0xf]
      %v4070 = vld [vmem:[%s165 + $0x5c] sm:$0xf]
      %v4071 = vld [vmem:[%s165 + $0x60] sm:$0xf]
      %v4072 = vld [vmem:[%s165 + $0x64] sm:$0xf]
      %v4073 = vld [vmem:[%s165 + $0x68] sm:$0xf]
      %v4074 = vld [vmem:[%s165 + $0x6c] sm:$0xf]
      %v4075 = vld [vmem:[%s165 + $0x70] sm:$0xf]
      %v4076 = vld [vmem:[%s165 + $0x74] sm:$0xf]
      %v4077 = vld [vmem:[%s165 + $0x78] sm:$0xf]
      %v4078 = vld [vmem:[%s165 + $0x7c] sm:$0xf]
      %v4079 = vld [vmem:[%s165 + $0x80] sm:$0xf]
      %v4080 = vld [vmem:[%s165 + $0x84] sm:$0xf]
      %v4081 = vld [vmem:[%s165 + $0x88] sm:$0xf]
      %v4082 = vld [vmem:[%s165 + $0x8c] sm:$0xf]
      %v4083 = vld [vmem:[%s165 + $0x90] sm:$0xf]
      %v4084 = vld [vmem:[%s165 + $0x94] sm:$0xf]
      %v4085 = vld [vmem:[%s165 + $0x98] sm:$0xf]
      %v4086 = vld [vmem:[%s165 + $0x9c] sm:$0xf]
      %v4087 = vld [vmem:[%s165 + $0xa0] sm:$0x7]
      %s4088 = scalar_lea.vmem %s1, 16
      %v4089 = vld [vmem:[%s4088] sm:$0x3]
      %v4127 = vunpack.c.l.b16 %v4051
      %v4128 = vunpack.c.l.b16 %v4052
      %v4129 = vunpack.c.l.b16 %v4053
      %v4130 = vunpack.c.l.b16 %v4054
      %v4131 = vunpack.c.l.b16 %v4055
      %v4132 = vunpack.c.l.b16 %v4056
      %v4133 = vunpack.c.l.b16 %v4057
      %v4134 = vunpack.c.l.b16 %v4058
      %v4135 = vunpack.c.l.b16 %v4059
      %v4136 = vunpack.c.l.b16 %v4060
      %v4137 = vunpack.c.l.b16 %v4061
      %v4138 = vunpack.c.l.b16 %v4062
      %v4139 = vunpack.c.l.b16 %v4063
      %v4140 = vunpack.c.l.b16 %v4064
      %v4141 = vunpack.c.l.b16 %v4065
      %v4142 = vunpack.c.l.b16 %v4066
      %v4143 = vunpack.c.l.b16 %v4067
      %v4144 = vunpack.c.l.b16 %v4068
      %v4145 = vunpack.c.l.b16 %v4069
      %v4146 = vunpack.c.l.b16 %v4070
      %v4147 = vunpack.c.l.b16 %v4071
      %v4148 = vunpack.c.l.b16 %v4072
      %v4149 = vunpack.c.l.b16 %v4073
      %v4150 = vunpack.c.l.b16 %v4074
      %v4151 = vunpack.c.l.b16 %v4075
      %v4152 = vunpack.c.l.b16 %v4076
      %v4153 = vunpack.c.l.b16 %v4077
      %v4154 = vunpack.c.l.b16 %v4078
      %v4155 = vunpack.c.l.b16 %v4079
      %v4156 = vunpack.c.l.b16 %v4080
      %v4157 = vunpack.c.l.b16 %v4081
      %v4158 = vunpack.c.l.b16 %v4082
      %v4159 = vunpack.c.l.b16 %v4083
      %v4160 = vunpack.c.l.b16 %v4084
      %v4161 = vunpack.c.l.b16 %v4085
      %v4162 = vunpack.c.l.b16 %v4086
      %v4163 = vunpack.c.l.b16 %v4087
      %v4164 = vpack.c.b16 %v4128, %v4127
      %v4165 = vpack.c.b16 %v4130, %v4129
      %v4166 = vpack.c.b16 %v4132, %v4131
      %v4167 = vpack.c.b16 %v4134, %v4133
      %v4168 = vpack.c.b16 %v4136, %v4135
      %v4169 = vpack.c.b16 %v4138, %v4137
      %v4170 = vpack.c.b16 %v4140, %v4139
      %v4171 = vpack.c.b16 %v4142, %v4141
      %v4172 = vpack.c.b16 %v4144, %v4143
      %v4173 = vpack.c.b16 %v4146, %v4145
      %v4174 = vpack.c.b16 %v4148, %v4147
      %v4175 = vpack.c.b16 %v4150, %v4149
      %v4176 = vpack.c.b16 %v4152, %v4151
      %v4177 = vpack.c.b16 %v4154, %v4153
      %v4178 = vpack.c.b16 %v4156, %v4155
      %v4179 = vpack.c.b16 %v4158, %v4157
      %v4180 = vpack.c.b16 %v4160, %v4159
      %v4181 = vpack.c.b16 %v4162, %v4161
      %v4182 = vpack.c.b16 %v4163, %v4163
      %vm4183 = vcmask 1044480
      %v4184 = vrot.slane %v4164, 3
      %v4185 = vrot.slane %v4165, 3
      %v4186 = vsel %vm4183, %v4184, %v4185
      %v4187 = vrot.slane %v4166, 3
      %v4188 = vsel %vm4183, %v4185, %v4187
      %v4189 = vrot.slane %v4167, 3
      %v4190 = vsel %vm4183, %v4187, %v4189
      %v4191 = vrot.slane %v4168, 3
      %v4192 = vsel %vm4183, %v4189, %v4191
      %v4193 = vrot.slane %v4169, 3
      %v4194 = vsel %vm4183, %v4191, %v4193
      %v4195 = vrot.slane %v4170, 3
      %v4196 = vsel %vm4183, %v4193, %v4195
      %v4197 = vrot.slane %v4171, 3
      %v4198 = vsel %vm4183, %v4195, %v4197
      %v4199 = vrot.slane %v4172, 3
      %v4200 = vsel %vm4183, %v4197, %v4199
      %v4201 = vrot.slane %v4173, 3
      %v4202 = vsel %vm4183, %v4199, %v4201
      %v4203 = vrot.slane %v4174, 3
      %v4204 = vsel %vm4183, %v4201, %v4203
      %v4205 = vrot.slane %v4175, 3
      %v4206 = vsel %vm4183, %v4203, %v4205
      %v4207 = vrot.slane %v4176, 3
      %v4208 = vsel %vm4183, %v4205, %v4207
      %v4209 = vrot.slane %v4177, 3
      %v4210 = vsel %vm4183, %v4207, %v4209
      %v4211 = vrot.slane %v4178, 3
      %v4212 = vsel %vm4183, %v4209, %v4211
      %v4213 = vrot.slane %v4179, 3
      %v4214 = vsel %vm4183, %v4211, %v4213
      %v4215 = vrot.slane %v4180, 3
      %v4216 = vsel %vm4183, %v4213, %v4215
      %v4217 = vrot.slane %v4181, 3
      %v4218 = vsel %vm4183, %v4215, %v4217
      %v4219 = vrot.slane %v4182, 3
      %v4220 = vsel %vm4183, %v4217, %v4219
      %v4222 = vsel %vm372, %v4186, 0
      %v4225 = vsel %vm372, %v4188, 0
      %v4228 = vsel %vm372, %v4190, 0
      %v4231 = vsel %vm372, %v4192, 0
      %v4234 = vsel %vm372, %v4194, 0
      %v4237 = vsel %vm372, %v4196, 0
      %v4240 = vsel %vm372, %v4198, 0
      %v4243 = vsel %vm372, %v4200, 0
      %v4246 = vsel %vm372, %v4202, 0
      %v4249 = vsel %vm372, %v4204, 0
      %v4252 = vsel %vm372, %v4206, 0
      %v4255 = vsel %vm372, %v4208, 0
      %v4258 = vsel %vm372, %v4210, 0
      %v4261 = vsel %vm372, %v4212, 0
      %v4264 = vsel %vm372, %v4214, 0
      %v4267 = vsel %vm372, %v4216, 0
      %v4270 = vsel %vm372, %v4218, 0
      %v4273 = vsel %vm372, %v4220, 0
      %v4276 = vsel %vm427, %v4089, 0
      %4278 = vmatpush.bf16.msra.mxu0 0
      %4279 = vmatpush.bf16.msra.mxu0 0
      %4280 = vmatpush.bf16.msra.mxu0 0
      %4281 = vmatpush.bf16.msra.mxu0 0
      %4282 = vmatpush.bf16.msra.mxu0 0
      %4283 = vmatpush.bf16.msra.mxu0 0
      %4284 = vmatpush.bf16.msra.mxu0 0
      %4285 = vmatpush.bf16.msra.mxu0 %v4276
      %4286 = vmatmul.bf16.gmra.mxu0 %v4222
      %v4287 = vpop.f32.mrf.mxu0
      %v4288 = vadd.f32 0.0, %v4287
      %v4289 = vpop.f32.mrf.mxu0
      %v4290 = vadd.f32 0.0, %v4289
      %4291 = vmatmul.bf16.gmra.mxu0 %v4225
      %v4292 = vpop.f32.mrf.mxu0
      %v4293 = vadd.f32 0.0, %v4292
      %v4294 = vpop.f32.mrf.mxu0
      %v4295 = vadd.f32 0.0, %v4294
      %4296 = vmatmul.bf16.gmra.mxu0 %v4228
      %v4297 = vpop.f32.mrf.mxu0
      %v4298 = vadd.f32 0.0, %v4297
      %v4299 = vpop.f32.mrf.mxu0
      %v4300 = vadd.f32 0.0, %v4299
      %4301 = vmatmul.bf16.gmra.mxu0 %v4231
      %v4302 = vpop.f32.mrf.mxu0
      %v4303 = vadd.f32 0.0, %v4302
      %v4304 = vpop.f32.mrf.mxu0
      %v4305 = vadd.f32 0.0, %v4304
      %4306 = vmatmul.bf16.gmra.mxu0 %v4234
      %v4307 = vpop.f32.mrf.mxu0
      %v4308 = vadd.f32 0.0, %v4307
      %v4309 = vpop.f32.mrf.mxu0
      %v4310 = vadd.f32 0.0, %v4309
      %4311 = vmatmul.bf16.gmra.mxu0 %v4237
      %v4312 = vpop.f32.mrf.mxu0
      %v4313 = vadd.f32 0.0, %v4312
      %v4314 = vpop.f32.mrf.mxu0
      %v4315 = vadd.f32 0.0, %v4314
      %4316 = vmatmul.bf16.gmra.mxu0 %v4240
      %v4317 = vpop.f32.mrf.mxu0
      %v4318 = vadd.f32 0.0, %v4317
      %v4319 = vpop.f32.mrf.mxu0
      %v4320 = vadd.f32 0.0, %v4319
      %4321 = vmatmul.bf16.gmra.mxu0 %v4243
      %v4322 = vpop.f32.mrf.mxu0
      %v4323 = vadd.f32 0.0, %v4322
      %v4324 = vpop.f32.mrf.mxu0
      %v4325 = vadd.f32 0.0, %v4324
      %4326 = vmatmul.bf16.gmra.mxu0 %v4246
      %v4327 = vpop.f32.mrf.mxu0
      %v4328 = vadd.f32 0.0, %v4327
      %v4329 = vpop.f32.mrf.mxu0
      %v4330 = vadd.f32 0.0, %v4329
      %4331 = vmatmul.bf16.gmra.mxu0 %v4249
      %v4332 = vpop.f32.mrf.mxu0
      %v4333 = vadd.f32 0.0, %v4332
      %v4334 = vpop.f32.mrf.mxu0
      %v4335 = vadd.f32 0.0, %v4334
      %4336 = vmatmul.bf16.gmra.mxu0 %v4252
      %v4337 = vpop.f32.mrf.mxu0
      %v4338 = vadd.f32 0.0, %v4337
      %v4339 = vpop.f32.mrf.mxu0
      %v4340 = vadd.f32 0.0, %v4339
      %4341 = vmatmul.bf16.gmra.mxu0 %v4255
      %v4342 = vpop.f32.mrf.mxu0
      %v4343 = vadd.f32 0.0, %v4342
      %v4344 = vpop.f32.mrf.mxu0
      %v4345 = vadd.f32 0.0, %v4344
      %4346 = vmatmul.bf16.gmra.mxu0 %v4258
      %v4347 = vpop.f32.mrf.mxu0
      %v4348 = vadd.f32 0.0, %v4347
      %v4349 = vpop.f32.mrf.mxu0
      %v4350 = vadd.f32 0.0, %v4349
      %4351 = vmatmul.bf16.gmra.mxu0 %v4261
      %v4352 = vpop.f32.mrf.mxu0
      %v4353 = vadd.f32 0.0, %v4352
      %v4354 = vpop.f32.mrf.mxu0
      %v4355 = vadd.f32 0.0, %v4354
      %4356 = vmatmul.bf16.gmra.mxu0 %v4264
      %v4357 = vpop.f32.mrf.mxu0
      %v4358 = vadd.f32 0.0, %v4357
      %v4359 = vpop.f32.mrf.mxu0
      %v4360 = vadd.f32 0.0, %v4359
      %4361 = vmatmul.bf16.gmra.mxu0 %v4267
      %v4362 = vpop.f32.mrf.mxu0
      %v4363 = vadd.f32 0.0, %v4362
      %v4364 = vpop.f32.mrf.mxu0
      %v4365 = vadd.f32 0.0, %v4364
      %4366 = vmatmul.bf16.gmra.mxu0 %v4270
      %v4367 = vpop.f32.mrf.mxu0
      %v4368 = vadd.f32 0.0, %v4367
      %v4369 = vpop.f32.mrf.mxu0
      %v4370 = vadd.f32 0.0, %v4369
      %4371 = vmatmul.bf16.gmra.mxu0 %v4273
      %v4372 = vpop.f32.mrf.mxu0
      %v4373 = vadd.f32 0.0, %v4372
      %v4374 = vpop.f32.mrf.mxu0
      %v4375 = vadd.f32 0.0, %v4374
      %4376 = vdwg.mxu0
      %v4377 = vadd.f32 %v4015, %v4288
      %v4378 = vadd.f32 %v4016, %v4290
      %v4379 = vadd.f32 %v4017, %v4293
      %v4380 = vadd.f32 %v4018, %v4295
      %v4381 = vadd.f32 %v4019, %v4298
      %v4382 = vadd.f32 %v4020, %v4300
      %v4383 = vadd.f32 %v4021, %v4303
      %v4384 = vadd.f32 %v4022, %v4305
      %v4385 = vadd.f32 %v4023, %v4308
      %v4386 = vadd.f32 %v4024, %v4310
      %v4387 = vadd.f32 %v4025, %v4313
      %v4388 = vadd.f32 %v4026, %v4315
      %v4389 = vadd.f32 %v4027, %v4318
      %v4390 = vadd.f32 %v4028, %v4320
      %v4391 = vadd.f32 %v4029, %v4323
      %v4392 = vadd.f32 %v4030, %v4325
      %v4393 = vadd.f32 %v4031, %v4328
      %v4394 = vadd.f32 %v4032, %v4330
      %v4395 = vadd.f32 %v4033, %v4333
      %v4396 = vadd.f32 %v4034, %v4335
      %v4397 = vadd.f32 %v4035, %v4338
      %v4398 = vadd.f32 %v4036, %v4340
      %v4399 = vadd.f32 %v4037, %v4343
      %v4400 = vadd.f32 %v4038, %v4345
      %v4401 = vadd.f32 %v4039, %v4348
      %v4402 = vadd.f32 %v4040, %v4350
      %v4403 = vadd.f32 %v4041, %v4353
      %v4404 = vadd.f32 %v4042, %v4355
      %v4405 = vadd.f32 %v4043, %v4358
      %v4406 = vadd.f32 %v4044, %v4360
      %v4407 = vadd.f32 %v4045, %v4363
      %v4408 = vadd.f32 %v4046, %v4365
      %v4409 = vadd.f32 %v4047, %v4368
      %v4410 = vadd.f32 %v4048, %v4370
      %v4411 = vadd.f32 %v4049, %v4373
      %v4412 = vadd.f32 %v4050, %v4375
      %4413 = vst.msk [vmem:[#allocation2] sm:$0xff] %vm172, %v4377
      %4414 = vst.msk [vmem:[#allocation2 + $0x8] sm:$0xff] %vm172, %v4378
      %4415 = vst.msk [vmem:[#allocation2 + $0x10] sm:$0xff] %vm172, %v4379
      %4416 = vst.msk [vmem:[#allocation2 + $0x18] sm:$0xff] %vm172, %v4380
      %4417 = vst.msk [vmem:[#allocation2 + $0x20] sm:$0xff] %vm172, %v4381
      %4418 = vst.msk [vmem:[#allocation2 + $0x28] sm:$0xff] %vm172, %v4382
      %4419 = vst.msk [vmem:[#allocation2 + $0x30] sm:$0xff] %vm172, %v4383
      %4420 = vst.msk [vmem:[#allocation2 + $0x38] sm:$0xff] %vm172, %v4384
      %4421 = vst.msk [vmem:[#allocation2 + $0x40] sm:$0xff] %vm172, %v4385
      %4422 = vst.msk [vmem:[#allocation2 + $0x48] sm:$0xff] %vm172, %v4386
      %4423 = vst.msk [vmem:[#allocation2 + $0x50] sm:$0xff] %vm172, %v4387
      %4424 = vst.msk [vmem:[#allocation2 + $0x58] sm:$0xff] %vm172, %v4388
      %4425 = vst.msk [vmem:[#allocation2 + $0x60] sm:$0xff] %vm172, %v4389
      %4426 = vst.msk [vmem:[#allocation2 + $0x68] sm:$0xff] %vm172, %v4390
      %4427 = vst.msk [vmem:[#allocation2 + $0x70] sm:$0xff] %vm172, %v4391
      %4428 = vst.msk [vmem:[#allocation2 + $0x78] sm:$0xff] %vm172, %v4392
      %4429 = vst.msk [vmem:[#allocation2 + $0x80] sm:$0xff] %vm172, %v4393
      %4430 = vst.msk [vmem:[#allocation2 + $0x88] sm:$0xff] %vm172, %v4394
      %4431 = vst.msk [vmem:[#allocation2 + $0x90] sm:$0xff] %vm172, %v4395
      %4432 = vst.msk [vmem:[#allocation2 + $0x98] sm:$0xff] %vm172, %v4396
      %4433 = vst.msk [vmem:[#allocation2 + $0xa0] sm:$0xff] %vm172, %v4397
      %4434 = vst.msk [vmem:[#allocation2 + $0xa8] sm:$0xff] %vm172, %v4398
      %4435 = vst.msk [vmem:[#allocation2 + $0xb0] sm:$0xff] %vm172, %v4399
      %4436 = vst.msk [vmem:[#allocation2 + $0xb8] sm:$0xff] %vm172, %v4400
      %4437 = vst.msk [vmem:[#allocation2 + $0xc0] sm:$0xff] %vm172, %v4401
      %4438 = vst.msk [vmem:[#allocation2 + $0xc8] sm:$0xff] %vm172, %v4402
      %4439 = vst.msk [vmem:[#allocation2 + $0xd0] sm:$0xff] %vm172, %v4403
      %4440 = vst.msk [vmem:[#allocation2 + $0xd8] sm:$0xff] %vm172, %v4404
      %4441 = vst.msk [vmem:[#allocation2 + $0xe0] sm:$0xff] %vm172, %v4405
      %4442 = vst.msk [vmem:[#allocation2 + $0xe8] sm:$0xff] %vm172, %v4406
      %4443 = vst.msk [vmem:[#allocation2 + $0xf0] sm:$0xff] %vm172, %v4407
      %4444 = vst.msk [vmem:[#allocation2 + $0xf8] sm:$0xff] %vm172, %v4408
      %4445 = vst.msk [vmem:[#allocation2 + $0x100] sm:$0xff] %vm172, %v4409
      %4446 = vst.msk [vmem:[#allocation2 + $0x108] sm:$0xff] %vm172, %v4410
      %4447 = vst.msk [vmem:[#allocation2 + $0x110] sm:$0xff] %vm172, %v4411
      %4448 = vst.msk [vmem:[#allocation2 + $0x118] sm:$0xff] %vm172, %v4412
      %v4449 = vld [vmem:[#allocation2] sm:$0xff]
      %v4450 = vld [vmem:[#allocation2 + $0x8] sm:$0xff]
      %v4451 = vld [vmem:[#allocation2 + $0x10] sm:$0xff]
      %v4452 = vld [vmem:[#allocation2 + $0x18] sm:$0xff]
      %v4453 = vld [vmem:[#allocation2 + $0x20] sm:$0xff]
      %v4454 = vld [vmem:[#allocation2 + $0x28] sm:$0xff]
      %v4455 = vld [vmem:[#allocation2 + $0x30] sm:$0xff]
      %v4456 = vld [vmem:[#allocation2 + $0x38] sm:$0xff]
      %v4457 = vld [vmem:[#allocation2 + $0x40] sm:$0xff]
      %v4458 = vld [vmem:[#allocation2 + $0x48] sm:$0xff]
      %v4459 = vld [vmem:[#allocation2 + $0x50] sm:$0xff]
      %v4460 = vld [vmem:[#allocation2 + $0x58] sm:$0xff]
      %v4461 = vld [vmem:[#allocation2 + $0x60] sm:$0xff]
      %v4462 = vld [vmem:[#allocation2 + $0x68] sm:$0xff]
      %v4463 = vld [vmem:[#allocation2 + $0x70] sm:$0xff]
      %v4464 = vld [vmem:[#allocation2 + $0x78] sm:$0xff]
      %v4465 = vld [vmem:[#allocation2 + $0x80] sm:$0xff]
      %v4466 = vld [vmem:[#allocation2 + $0x88] sm:$0xff]
      %v4467 = vld [vmem:[#allocation2 + $0x90] sm:$0xff]
      %v4468 = vld [vmem:[#allocation2 + $0x98] sm:$0xff]
      %v4469 = vld [vmem:[#allocation2 + $0xa0] sm:$0xff]
      %v4470 = vld [vmem:[#allocation2 + $0xa8] sm:$0xff]
      %v4471 = vld [vmem:[#allocation2 + $0xb0] sm:$0xff]
      %v4472 = vld [vmem:[#allocation2 + $0xb8] sm:$0xff]
      %v4473 = vld [vmem:[#allocation2 + $0xc0] sm:$0xff]
      %v4474 = vld [vmem:[#allocation2 + $0xc8] sm:$0xff]
      %v4475 = vld [vmem:[#allocation2 + $0xd0] sm:$0xff]
      %v4476 = vld [vmem:[#allocation2 + $0xd8] sm:$0xff]
      %v4477 = vld [vmem:[#allocation2 + $0xe0] sm:$0xff]
      %v4478 = vld [vmem:[#allocation2 + $0xe8] sm:$0xff]
      %v4479 = vld [vmem:[#allocation2 + $0xf0] sm:$0xff]
      %v4480 = vld [vmem:[#allocation2 + $0xf8] sm:$0xff]
      %v4481 = vld [vmem:[#allocation2 + $0x100] sm:$0xff]
      %v4482 = vld [vmem:[#allocation2 + $0x108] sm:$0xff]
      %v4483 = vld [vmem:[#allocation2 + $0x110] sm:$0xff]
      %v4484 = vld [vmem:[#allocation2 + $0x118] sm:$0xff]
      %v4485 = vld [vmem:[%s2] sm:$0xff]
      %v4486 = vld [vmem:[%s2 + $0x8] sm:$0xff]
      %v4487 = vld [vmem:[%s2 + $0x10] sm:$0xff]
      %v4488 = vld [vmem:[%s2 + $0x18] sm:$0xff]
      %v4489 = vld [vmem:[%s2 + $0x20] sm:$0xff]
      %v4490 = vld [vmem:[%s2 + $0x28] sm:$0xff]
      %v4491 = vld [vmem:[%s2 + $0x30] sm:$0xff]
      %v4492 = vld [vmem:[%s2 + $0x38] sm:$0xff]
      %v4493 = vld [vmem:[%s2 + $0x40] sm:$0xff]
      %v4494 = vld [vmem:[%s2 + $0x48] sm:$0xff]
      %v4495 = vld [vmem:[%s2 + $0x50] sm:$0xff]
      %v4496 = vld [vmem:[%s2 + $0x58] sm:$0xff]
      %v4497 = vld [vmem:[%s2 + $0x60] sm:$0xff]
      %v4498 = vld [vmem:[%s2 + $0x68] sm:$0xff]
      %v4499 = vld [vmem:[%s2 + $0x70] sm:$0xff]
      %v4500 = vld [vmem:[%s2 + $0x78] sm:$0xff]
      %v4501 = vld [vmem:[%s2 + $0x80] sm:$0xff]
      %v4502 = vld [vmem:[%s2 + $0x88] sm:$0xff]
      %v4503 = vld [vmem:[%s2 + $0x90] sm:$0xff]
      %v4504 = vld [vmem:[%s2 + $0x98] sm:$0xff]
      %v4505 = vld [vmem:[%s2 + $0xa0] sm:$0xff]
      %v4506 = vld [vmem:[%s2 + $0xa8] sm:$0xff]
      %v4507 = vld [vmem:[%s2 + $0xb0] sm:$0xff]
      %v4508 = vld [vmem:[%s2 + $0xb8] sm:$0xff]
      %v4509 = vld [vmem:[%s2 + $0xc0] sm:$0xff]
      %v4510 = vld [vmem:[%s2 + $0xc8] sm:$0xff]
      %v4511 = vld [vmem:[%s2 + $0xd0] sm:$0xff]
      %v4512 = vld [vmem:[%s2 + $0xd8] sm:$0xff]
      %v4513 = vld [vmem:[%s2 + $0xe0] sm:$0xff]
      %v4514 = vld [vmem:[%s2 + $0xe8] sm:$0xff]
      %v4515 = vld [vmem:[%s2 + $0xf0] sm:$0xff]
      %v4516 = vld [vmem:[%s2 + $0xf8] sm:$0xff]
      %v4517 = vld [vmem:[%s2 + $0x100] sm:$0xff]
      %v4518 = vld [vmem:[%s2 + $0x108] sm:$0xff]
      %v4519 = vld [vmem:[%s2 + $0x110] sm:$0xff]
      %v4520 = vld [vmem:[%s2 + $0x118] sm:$0xff]
      %4522 = vset.pattern.permute.xlu0 0
      %4523 = vperm.xlu0 %4522, %v4485
      %v4524 = vpop.permute.xlu0 %4523
      %4527 = vset.pattern.permute.xlu0 0
      %4528 = vperm.xlu0 %4527, %v4486
      %v4529 = vpop.permute.xlu0 %4528
      %4532 = vset.pattern.permute.xlu0 0
      %4533 = vperm.xlu0 %4532, %v4487
      %v4534 = vpop.permute.xlu0 %4533
      %4537 = vset.pattern.permute.xlu0 0
      %4538 = vperm.xlu0 %4537, %v4488
      %v4539 = vpop.permute.xlu0 %4538
      %4542 = vset.pattern.permute.xlu0 0
      %4543 = vperm.xlu0 %4542, %v4489
      %v4544 = vpop.permute.xlu0 %4543
      %4547 = vset.pattern.permute.xlu0 0
      %4548 = vperm.xlu0 %4547, %v4490
      %v4549 = vpop.permute.xlu0 %4548
      %4552 = vset.pattern.permute.xlu0 0
      %4553 = vperm.xlu0 %4552, %v4491
      %v4554 = vpop.permute.xlu0 %4553
      %4557 = vset.pattern.permute.xlu0 0
      %4558 = vperm.xlu0 %4557, %v4492
      %v4559 = vpop.permute.xlu0 %4558
      %4562 = vset.pattern.permute.xlu0 0
      %4563 = vperm.xlu0 %4562, %v4493
      %v4564 = vpop.permute.xlu0 %4563
      %4567 = vset.pattern.permute.xlu0 0
      %4568 = vperm.xlu0 %4567, %v4494
      %v4569 = vpop.permute.xlu0 %4568
      %4572 = vset.pattern.permute.xlu0 0
      %4573 = vperm.xlu0 %4572, %v4495
      %v4574 = vpop.permute.xlu0 %4573
      %4577 = vset.pattern.permute.xlu0 0
      %4578 = vperm.xlu0 %4577, %v4496
      %v4579 = vpop.permute.xlu0 %4578
      %4582 = vset.pattern.permute.xlu0 0
      %4583 = vperm.xlu0 %4582, %v4497
      %v4584 = vpop.permute.xlu0 %4583
      %4587 = vset.pattern.permute.xlu0 0
      %4588 = vperm.xlu0 %4587, %v4498
      %v4589 = vpop.permute.xlu0 %4588
      %4592 = vset.pattern.permute.xlu0 0
      %4593 = vperm.xlu0 %4592, %v4499
      %v4594 = vpop.permute.xlu0 %4593
      %4597 = vset.pattern.permute.xlu0 0
      %4598 = vperm.xlu0 %4597, %v4500
      %v4599 = vpop.permute.xlu0 %4598
      %4602 = vset.pattern.permute.xlu0 0
      %4603 = vperm.xlu0 %4602, %v4501
      %v4604 = vpop.permute.xlu0 %4603
      %4607 = vset.pattern.permute.xlu0 0
      %4608 = vperm.xlu0 %4607, %v4502
      %v4609 = vpop.permute.xlu0 %4608
      %4612 = vset.pattern.permute.xlu0 0
      %4613 = vperm.xlu0 %4612, %v4503
      %v4614 = vpop.permute.xlu0 %4613
      %4617 = vset.pattern.permute.xlu0 0
      %4618 = vperm.xlu0 %4617, %v4504
      %v4619 = vpop.permute.xlu0 %4618
      %4622 = vset.pattern.permute.xlu0 0
      %4623 = vperm.xlu0 %4622, %v4505
      %v4624 = vpop.permute.xlu0 %4623
      %4627 = vset.pattern.permute.xlu0 0
      %4628 = vperm.xlu0 %4627, %v4506
      %v4629 = vpop.permute.xlu0 %4628
      %4632 = vset.pattern.permute.xlu0 0
      %4633 = vperm.xlu0 %4632, %v4507
      %v4634 = vpop.permute.xlu0 %4633
      %4637 = vset.pattern.permute.xlu0 0
      %4638 = vperm.xlu0 %4637, %v4508
      %v4639 = vpop.permute.xlu0 %4638
      %4642 = vset.pattern.permute.xlu0 0
      %4643 = vperm.xlu0 %4642, %v4509
      %v4644 = vpop.permute.xlu0 %4643
      %4647 = vset.pattern.permute.xlu0 0
      %4648 = vperm.xlu0 %4647, %v4510
      %v4649 = vpop.permute.xlu0 %4648
      %4652 = vset.pattern.permute.xlu0 0
      %4653 = vperm.xlu0 %4652, %v4511
      %v4654 = vpop.permute.xlu0 %4653
      %4657 = vset.pattern.permute.xlu0 0
      %4658 = vperm.xlu0 %4657, %v4512
      %v4659 = vpop.permute.xlu0 %4658
      %4662 = vset.pattern.permute.xlu0 0
      %4663 = vperm.xlu0 %4662, %v4513
      %v4664 = vpop.permute.xlu0 %4663
      %4667 = vset.pattern.permute.xlu0 0
      %4668 = vperm.xlu0 %4667, %v4514
      %v4669 = vpop.permute.xlu0 %4668
      %4672 = vset.pattern.permute.xlu0 0
      %4673 = vperm.xlu0 %4672, %v4515
      %v4674 = vpop.permute.xlu0 %4673
      %4677 = vset.pattern.permute.xlu0 0
      %4678 = vperm.xlu0 %4677, %v4516
      %v4679 = vpop.permute.xlu0 %4678
      %4682 = vset.pattern.permute.xlu0 0
      %4683 = vperm.xlu0 %4682, %v4517
      %v4684 = vpop.permute.xlu0 %4683
      %4687 = vset.pattern.permute.xlu0 0
      %4688 = vperm.xlu0 %4687, %v4518
      %v4689 = vpop.permute.xlu0 %4688
      %4692 = vset.pattern.permute.xlu0 0
      %4693 = vperm.xlu0 %4692, %v4519
      %v4694 = vpop.permute.xlu0 %4693
      %4697 = vset.pattern.permute.xlu0 0
      %4698 = vperm.xlu0 %4697, %v4520
      %v4699 = vpop.permute.xlu0 %4698
      %v4701 = vmul.f32 %v4449, %v4524
      %v4702 = vmul.f32 %v4450, %v4529
      %v4703 = vmul.f32 %v4451, %v4534
      %v4704 = vmul.f32 %v4452, %v4539
      %v4705 = vmul.f32 %v4453, %v4544
      %v4706 = vmul.f32 %v4454, %v4549
      %v4707 = vmul.f32 %v4455, %v4554
      %v4708 = vmul.f32 %v4456, %v4559
      %v4709 = vmul.f32 %v4457, %v4564
      %v4710 = vmul.f32 %v4458, %v4569
      %v4711 = vmul.f32 %v4459, %v4574
      %v4712 = vmul.f32 %v4460, %v4579
      %v4713 = vmul.f32 %v4461, %v4584
      %v4714 = vmul.f32 %v4462, %v4589
      %v4715 = vmul.f32 %v4463, %v4594
      %v4716 = vmul.f32 %v4464, %v4599
      %v4717 = vmul.f32 %v4465, %v4604
      %v4718 = vmul.f32 %v4466, %v4609
      %v4719 = vmul.f32 %v4467, %v4614
      %v4720 = vmul.f32 %v4468, %v4619
      %v4721 = vmul.f32 %v4469, %v4624
      %v4722 = vmul.f32 %v4470, %v4629
      %v4723 = vmul.f32 %v4471, %v4634
      %v4724 = vmul.f32 %v4472, %v4639
      %v4725 = vmul.f32 %v4473, %v4644
      %v4726 = vmul.f32 %v4474, %v4649
      %v4727 = vmul.f32 %v4475, %v4654
      %v4728 = vmul.f32 %v4476, %v4659
      %v4729 = vmul.f32 %v4477, %v4664
      %v4730 = vmul.f32 %v4478, %v4669
      %v4731 = vmul.f32 %v4479, %v4674
      %v4732 = vmul.f32 %v4480, %v4679
      %v4733 = vmul.f32 %v4481, %v4684
      %v4734 = vmul.f32 %v4482, %v4689
      %v4735 = vmul.f32 %v4483, %v4694
      %v4736 = vmul.f32 %v4484, %v4699
      %v4737 = vsel %vm172, %v4701, 0.0
      %v4738 = vsel %vm172, %v4702, 0.0
      %v4739 = vadd.f32 %v4737, %v4738
      %v4740 = vsel %vm172, %v4703, 0.0
      %v4741 = vadd.f32 %v4739, %v4740
      %v4742 = vsel %vm172, %v4704, 0.0
      %v4743 = vadd.f32 %v4741, %v4742
      %v4744 = vsel %vm172, %v4705, 0.0
      %v4745 = vadd.f32 %v4743, %v4744
      %v4746 = vsel %vm172, %v4706, 0.0
      %v4747 = vadd.f32 %v4745, %v4746
      %v4748 = vsel %vm172, %v4707, 0.0
      %v4749 = vadd.f32 %v4747, %v4748
      %v4750 = vsel %vm172, %v4708, 0.0
      %v4751 = vadd.f32 %v4749, %v4750
      %v4752 = vsel %vm172, %v4709, 0.0
      %v4753 = vadd.f32 %v4751, %v4752
      %v4754 = vsel %vm172, %v4710, 0.0
      %v4755 = vadd.f32 %v4753, %v4754
      %v4756 = vsel %vm172, %v4711, 0.0
      %v4757 = vadd.f32 %v4755, %v4756
      %v4758 = vsel %vm172, %v4712, 0.0
      %v4759 = vadd.f32 %v4757, %v4758
      %v4760 = vsel %vm172, %v4713, 0.0
      %v4761 = vadd.f32 %v4759, %v4760
      %v4762 = vsel %vm172, %v4714, 0.0
      %v4763 = vadd.f32 %v4761, %v4762
      %v4764 = vsel %vm172, %v4715, 0.0
      %v4765 = vadd.f32 %v4763, %v4764
      %v4766 = vsel %vm172, %v4716, 0.0
      %v4767 = vadd.f32 %v4765, %v4766
      %v4768 = vsel %vm172, %v4717, 0.0
      %v4769 = vadd.f32 %v4767, %v4768
      %v4770 = vsel %vm172, %v4718, 0.0
      %v4771 = vadd.f32 %v4769, %v4770
      %v4772 = vsel %vm172, %v4719, 0.0
      %v4773 = vadd.f32 %v4771, %v4772
      %v4774 = vsel %vm172, %v4720, 0.0
      %v4775 = vadd.f32 %v4773, %v4774
      %v4776 = vsel %vm172, %v4721, 0.0
      %v4777 = vadd.f32 %v4775, %v4776
      %v4778 = vsel %vm172, %v4722, 0.0
      %v4779 = vadd.f32 %v4777, %v4778
      %v4780 = vsel %vm172, %v4723, 0.0
      %v4781 = vadd.f32 %v4779, %v4780
      %v4782 = vsel %vm172, %v4724, 0.0
      %v4783 = vadd.f32 %v4781, %v4782
      %v4784 = vsel %vm172, %v4725, 0.0
      %v4785 = vadd.f32 %v4783, %v4784
      %v4786 = vsel %vm172, %v4726, 0.0
      %v4787 = vadd.f32 %v4785, %v4786
      %v4788 = vsel %vm172, %v4727, 0.0
      %v4789 = vadd.f32 %v4787, %v4788
      %v4790 = vsel %vm172, %v4728, 0.0
      %v4791 = vadd.f32 %v4789, %v4790
      %v4792 = vsel %vm172, %v4729, 0.0
      %v4793 = vadd.f32 %v4791, %v4792
      %v4794 = vsel %vm172, %v4730, 0.0
      %v4795 = vadd.f32 %v4793, %v4794
      %v4796 = vsel %vm172, %v4731, 0.0
      %v4797 = vadd.f32 %v4795, %v4796
      %v4798 = vsel %vm172, %v4732, 0.0
      %v4799 = vadd.f32 %v4797, %v4798
      %v4800 = vsel %vm172, %v4733, 0.0
      %v4801 = vadd.f32 %v4799, %v4800
      %v4802 = vsel %vm172, %v4734, 0.0
      %v4803 = vadd.f32 %v4801, %v4802
      %v4804 = vsel %vm172, %v4735, 0.0
      %v4805 = vadd.f32 %v4803, %v4804
      %v4806 = vsel %vm172, %v4736, 0.0
      %v4807 = vadd.f32 %v4805, %v4806
      %v4808 = vrot.slane %v4807, 4
      %v4809 = vadd.f32 %v4807, %v4808
      %v4810 = vrot.slane %v4809, 2
      %v4811 = vadd.f32 %v4809, %v4810
      %v4812 = vrot.slane %v4811, 1
      %v4813 = vadd.f32 %v4811, %v4812
      %v4814 = vmul.f32 %v4813, 0.00390625
      %v4815 = vsub.f32 %v4449, %v4814
      %v4816 = vsub.f32 %v4450, %v4814
      %v4817 = vsub.f32 %v4451, %v4814
      %v4818 = vsub.f32 %v4452, %v4814
      %v4819 = vsub.f32 %v4453, %v4814
      %v4820 = vsub.f32 %v4454, %v4814
      %v4821 = vsub.f32 %v4455, %v4814
      %v4822 = vsub.f32 %v4456, %v4814
      %v4823 = vsub.f32 %v4457, %v4814
      %v4824 = vsub.f32 %v4458, %v4814
      %v4825 = vsub.f32 %v4459, %v4814
      %v4826 = vsub.f32 %v4460, %v4814
      %v4827 = vsub.f32 %v4461, %v4814
      %v4828 = vsub.f32 %v4462, %v4814
      %v4829 = vsub.f32 %v4463, %v4814
      %v4830 = vsub.f32 %v4464, %v4814
      %v4831 = vsub.f32 %v4465, %v4814
      %v4832 = vsub.f32 %v4466, %v4814
      %v4833 = vsub.f32 %v4467, %v4814
      %v4834 = vsub.f32 %v4468, %v4814
      %v4835 = vsub.f32 %v4469, %v4814
      %v4836 = vsub.f32 %v4470, %v4814
      %v4837 = vsub.f32 %v4471, %v4814
      %v4838 = vsub.f32 %v4472, %v4814
      %v4839 = vsub.f32 %v4473, %v4814
      %v4840 = vsub.f32 %v4474, %v4814
      %v4841 = vsub.f32 %v4475, %v4814
      %v4842 = vsub.f32 %v4476, %v4814
      %v4843 = vsub.f32 %v4477, %v4814
      %v4844 = vsub.f32 %v4478, %v4814
      %v4845 = vsub.f32 %v4479, %v4814
      %v4846 = vsub.f32 %v4480, %v4814
      %v4847 = vsub.f32 %v4481, %v4814
      %v4848 = vsub.f32 %v4482, %v4814
      %v4849 = vsub.f32 %v4483, %v4814
      %v4850 = vsub.f32 %v4484, %v4814
      %v4851 = vmul.f32 %v4815, %v4815
      %v4852 = vmul.f32 %v4816, %v4816
      %v4853 = vmul.f32 %v4817, %v4817
      %v4854 = vmul.f32 %v4818, %v4818
      %v4855 = vmul.f32 %v4819, %v4819
      %v4856 = vmul.f32 %v4820, %v4820
      %v4857 = vmul.f32 %v4821, %v4821
      %v4858 = vmul.f32 %v4822, %v4822
      %v4859 = vmul.f32 %v4823, %v4823
      %v4860 = vmul.f32 %v4824, %v4824
      %v4861 = vmul.f32 %v4825, %v4825
      %v4862 = vmul.f32 %v4826, %v4826
      %v4863 = vmul.f32 %v4827, %v4827
      %v4864 = vmul.f32 %v4828, %v4828
      %v4865 = vmul.f32 %v4829, %v4829
      %v4866 = vmul.f32 %v4830, %v4830
      %v4867 = vmul.f32 %v4831, %v4831
      %v4868 = vmul.f32 %v4832, %v4832
      %v4869 = vmul.f32 %v4833, %v4833
      %v4870 = vmul.f32 %v4834, %v4834
      %v4871 = vmul.f32 %v4835, %v4835
      %v4872 = vmul.f32 %v4836, %v4836
      %v4873 = vmul.f32 %v4837, %v4837
      %v4874 = vmul.f32 %v4838, %v4838
      %v4875 = vmul.f32 %v4839, %v4839
      %v4876 = vmul.f32 %v4840, %v4840
      %v4877 = vmul.f32 %v4841, %v4841
      %v4878 = vmul.f32 %v4842, %v4842
      %v4879 = vmul.f32 %v4843, %v4843
      %v4880 = vmul.f32 %v4844, %v4844
      %v4881 = vmul.f32 %v4845, %v4845
      %v4882 = vmul.f32 %v4846, %v4846
      %v4883 = vmul.f32 %v4847, %v4847
      %v4884 = vmul.f32 %v4848, %v4848
      %v4885 = vmul.f32 %v4849, %v4849
      %v4886 = vmul.f32 %v4850, %v4850
      %v4887 = vmul.f32 %v4851, %v4524
      %v4888 = vmul.f32 %v4852, %v4529
      %v4889 = vmul.f32 %v4853, %v4534
      %v4890 = vmul.f32 %v4854, %v4539
      %v4891 = vmul.f32 %v4855, %v4544
      %v4892 = vmul.f32 %v4856, %v4549
      %v4893 = vmul.f32 %v4857, %v4554
      %v4894 = vmul.f32 %v4858, %v4559
      %v4895 = vmul.f32 %v4859, %v4564
      %v4896 = vmul.f32 %v4860, %v4569
      %v4897 = vmul.f32 %v4861, %v4574
      %v4898 = vmul.f32 %v4862, %v4579
      %v4899 = vmul.f32 %v4863, %v4584
      %v4900 = vmul.f32 %v4864, %v4589
      %v4901 = vmul.f32 %v4865, %v4594
      %v4902 = vmul.f32 %v4866, %v4599
      %v4903 = vmul.f32 %v4867, %v4604
      %v4904 = vmul.f32 %v4868, %v4609
      %v4905 = vmul.f32 %v4869, %v4614
      %v4906 = vmul.f32 %v4870, %v4619
      %v4907 = vmul.f32 %v4871, %v4624
      %v4908 = vmul.f32 %v4872, %v4629
      %v4909 = vmul.f32 %v4873, %v4634
      %v4910 = vmul.f32 %v4874, %v4639
      %v4911 = vmul.f32 %v4875, %v4644
      %v4912 = vmul.f32 %v4876, %v4649
      %v4913 = vmul.f32 %v4877, %v4654
      %v4914 = vmul.f32 %v4878, %v4659
      %v4915 = vmul.f32 %v4879, %v4664
      %v4916 = vmul.f32 %v4880, %v4669
      %v4917 = vmul.f32 %v4881, %v4674
      %v4918 = vmul.f32 %v4882, %v4679
      %v4919 = vmul.f32 %v4883, %v4684
      %v4920 = vmul.f32 %v4884, %v4689
      %v4921 = vmul.f32 %v4885, %v4694
      %v4922 = vmul.f32 %v4886, %v4699
      %v4923 = vsel %vm172, %v4887, 0.0
      %v4924 = vsel %vm172, %v4888, 0.0
      %v4925 = vadd.f32 %v4923, %v4924
      %v4926 = vsel %vm172, %v4889, 0.0
      %v4927 = vadd.f32 %v4925, %v4926
      %v4928 = vsel %vm172, %v4890, 0.0
      %v4929 = vadd.f32 %v4927, %v4928
      %v4930 = vsel %vm172, %v4891, 0.0
      %v4931 = vadd.f32 %v4929, %v4930
      %v4932 = vsel %vm172, %v4892, 0.0
      %v4933 = vadd.f32 %v4931, %v4932
      %v4934 = vsel %vm172, %v4893, 0.0
      %v4935 = vadd.f32 %v4933, %v4934
      %v4936 = vsel %vm172, %v4894, 0.0
      %v4937 = vadd.f32 %v4935, %v4936
      %v4938 = vsel %vm172, %v4895, 0.0
      %v4939 = vadd.f32 %v4937, %v4938
      %v4940 = vsel %vm172, %v4896, 0.0
      %v4941 = vadd.f32 %v4939, %v4940
      %v4942 = vsel %vm172, %v4897, 0.0
      %v4943 = vadd.f32 %v4941, %v4942
      %v4944 = vsel %vm172, %v4898, 0.0
      %v4945 = vadd.f32 %v4943, %v4944
      %v4946 = vsel %vm172, %v4899, 0.0
      %v4947 = vadd.f32 %v4945, %v4946
      %v4948 = vsel %vm172, %v4900, 0.0
      %v4949 = vadd.f32 %v4947, %v4948
      %v4950 = vsel %vm172, %v4901, 0.0
      %v4951 = vadd.f32 %v4949, %v4950
      %v4952 = vsel %vm172, %v4902, 0.0
      %v4953 = vadd.f32 %v4951, %v4952
      %v4954 = vsel %vm172, %v4903, 0.0
      %v4955 = vadd.f32 %v4953, %v4954
      %v4956 = vsel %vm172, %v4904, 0.0
      %v4957 = vadd.f32 %v4955, %v4956
      %v4958 = vsel %vm172, %v4905, 0.0
      %v4959 = vadd.f32 %v4957, %v4958
      %v4960 = vsel %vm172, %v4906, 0.0
      %v4961 = vadd.f32 %v4959, %v4960
      %v4962 = vsel %vm172, %v4907, 0.0
      %v4963 = vadd.f32 %v4961, %v4962
      %v4964 = vsel %vm172, %v4908, 0.0
      %v4965 = vadd.f32 %v4963, %v4964
      %v4966 = vsel %vm172, %v4909, 0.0
      %v4967 = vadd.f32 %v4965, %v4966
      %v4968 = vsel %vm172, %v4910, 0.0
      %v4969 = vadd.f32 %v4967, %v4968
      %v4970 = vsel %vm172, %v4911, 0.0
      %v4971 = vadd.f32 %v4969, %v4970
      %v4972 = vsel %vm172, %v4912, 0.0
      %v4973 = vadd.f32 %v4971, %v4972
      %v4974 = vsel %vm172, %v4913, 0.0
      %v4975 = vadd.f32 %v4973, %v4974
      %v4976 = vsel %vm172, %v4914, 0.0
      %v4977 = vadd.f32 %v4975, %v4976
      %v4978 = vsel %vm172, %v4915, 0.0
      %v4979 = vadd.f32 %v4977, %v4978
      %v4980 = vsel %vm172, %v4916, 0.0
      %v4981 = vadd.f32 %v4979, %v4980
      %v4982 = vsel %vm172, %v4917, 0.0
      %v4983 = vadd.f32 %v4981, %v4982
      %v4984 = vsel %vm172, %v4918, 0.0
      %v4985 = vadd.f32 %v4983, %v4984
      %v4986 = vsel %vm172, %v4919, 0.0
      %v4987 = vadd.f32 %v4985, %v4986
      %v4988 = vsel %vm172, %v4920, 0.0
      %v4989 = vadd.f32 %v4987, %v4988
      %v4990 = vsel %vm172, %v4921, 0.0
      %v4991 = vadd.f32 %v4989, %v4990
      %v4992 = vsel %vm172, %v4922, 0.0
      %v4993 = vadd.f32 %v4991, %v4992
      %v4994 = vrot.slane %v4993, 4
      %v4995 = vadd.f32 %v4993, %v4994
      %v4996 = vrot.slane %v4995, 2
      %v4997 = vadd.f32 %v4995, %v4996
      %v4998 = vrot.slane %v4997, 1
      %v4999 = vadd.f32 %v4997, %v4998
      %v5000 = vmul.f32 %v4999, 0.00390625
      %v5001 = vadd.f32 %v5000, 1e-05
      %v5002 = vrsqrt.pop %v5001
      %v5003 = vmul.f32 %v5002, %v5001
      %v5004 = vmul.f32 %v5003, %v5002
      %v5005 = vmul.f32 0.5, %v5004
      %v5006 = vsub.f32 1.5, %v5005
      %v5007 = vmul.f32 %v5002, %v5006
      %vm5008 = vweird.f32 %v5001
      %vm5009 = vweird.f32 %v5002
      %vm5010 = vmor %vm5008, %vm5009
      %v5011 = vsel %vm5010, %v5002, %v5007
      %v5012 = vmul.f32 %v4815, %v5011
      %v5013 = vmul.f32 %v4816, %v5011
      %v5014 = vmul.f32 %v4817, %v5011
      %v5015 = vmul.f32 %v4818, %v5011
      %v5016 = vmul.f32 %v4819, %v5011
      %v5017 = vmul.f32 %v4820, %v5011
      %v5018 = vmul.f32 %v4821, %v5011
      %v5019 = vmul.f32 %v4822, %v5011
      %v5020 = vmul.f32 %v4823, %v5011
      %v5021 = vmul.f32 %v4824, %v5011
      %v5022 = vmul.f32 %v4825, %v5011
      %v5023 = vmul.f32 %v4826, %v5011
      %v5024 = vmul.f32 %v4827, %v5011
      %v5025 = vmul.f32 %v4828, %v5011
      %v5026 = vmul.f32 %v4829, %v5011
      %v5027 = vmul.f32 %v4830, %v5011
      %v5028 = vmul.f32 %v4831, %v5011
      %v5029 = vmul.f32 %v4832, %v5011
      %v5030 = vmul.f32 %v4833, %v5011
      %v5031 = vmul.f32 %v4834, %v5011
      %v5032 = vmul.f32 %v4835, %v5011
      %v5033 = vmul.f32 %v4836, %v5011
      %v5034 = vmul.f32 %v4837, %v5011
      %v5035 = vmul.f32 %v4838, %v5011
      %v5036 = vmul.f32 %v4839, %v5011
      %v5037 = vmul.f32 %v4840, %v5011
      %v5038 = vmul.f32 %v4841, %v5011
      %v5039 = vmul.f32 %v4842, %v5011
      %v5040 = vmul.f32 %v4843, %v5011
      %v5041 = vmul.f32 %v4844, %v5011
      %v5042 = vmul.f32 %v4845, %v5011
      %v5043 = vmul.f32 %v4846, %v5011
      %v5044 = vmul.f32 %v4847, %v5011
      %v5045 = vmul.f32 %v4848, %v5011
      %v5046 = vmul.f32 %v4849, %v5011
      %v5047 = vmul.f32 %v4850, %v5011
      %v5048 = vmax.f32 %v5012, 0.0
      %v5049 = vmax.f32 %v5013, 0.0
      %v5050 = vmax.f32 %v5014, 0.0
      %v5051 = vmax.f32 %v5015, 0.0
      %v5052 = vmax.f32 %v5016, 0.0
      %v5053 = vmax.f32 %v5017, 0.0
      %v5054 = vmax.f32 %v5018, 0.0
      %v5055 = vmax.f32 %v5019, 0.0
      %v5056 = vmax.f32 %v5020, 0.0
      %v5057 = vmax.f32 %v5021, 0.0
      %v5058 = vmax.f32 %v5022, 0.0
      %v5059 = vmax.f32 %v5023, 0.0
      %v5060 = vmax.f32 %v5024, 0.0
      %v5061 = vmax.f32 %v5025, 0.0
      %v5062 = vmax.f32 %v5026, 0.0
      %v5063 = vmax.f32 %v5027, 0.0
      %v5064 = vmax.f32 %v5028, 0.0
      %v5065 = vmax.f32 %v5029, 0.0
      %v5066 = vmax.f32 %v5030, 0.0
      %v5067 = vmax.f32 %v5031, 0.0
      %v5068 = vmax.f32 %v5032, 0.0
      %v5069 = vmax.f32 %v5033, 0.0
      %v5070 = vmax.f32 %v5034, 0.0
      %v5071 = vmax.f32 %v5035, 0.0
      %v5072 = vmax.f32 %v5036, 0.0
      %v5073 = vmax.f32 %v5037, 0.0
      %v5074 = vmax.f32 %v5038, 0.0
      %v5075 = vmax.f32 %v5039, 0.0
      %v5076 = vmax.f32 %v5040, 0.0
      %v5077 = vmax.f32 %v5041, 0.0
      %v5078 = vmax.f32 %v5042, 0.0
      %v5079 = vmax.f32 %v5043, 0.0
      %v5080 = vmax.f32 %v5044, 0.0
      %v5081 = vmax.f32 %v5045, 0.0
      %v5082 = vmax.f32 %v5046, 0.0
      %v5083 = vmax.f32 %v5047, 0.0
      %5084 = vst.msk [vmem:[%s170] sm:$0xff] %vm172, %v5048
      %5085 = vst.msk [vmem:[%s170 + $0x8] sm:$0xff] %vm172, %v5049
      %5086 = vst.msk [vmem:[%s170 + $0x10] sm:$0xff] %vm172, %v5050
      %5087 = vst.msk [vmem:[%s170 + $0x18] sm:$0xff] %vm172, %v5051
      %5088 = vst.msk [vmem:[%s170 + $0x20] sm:$0xff] %vm172, %v5052
      %5089 = vst.msk [vmem:[%s170 + $0x28] sm:$0xff] %vm172, %v5053
      %5090 = vst.msk [vmem:[%s170 + $0x30] sm:$0xff] %vm172, %v5054
      %5091 = vst.msk [vmem:[%s170 + $0x38] sm:$0xff] %vm172, %v5055
      %5092 = vst.msk [vmem:[%s170 + $0x40] sm:$0xff] %vm172, %v5056
      %5093 = vst.msk [vmem:[%s170 + $0x48] sm:$0xff] %vm172, %v5057
      %5094 = vst.msk [vmem:[%s170 + $0x50] sm:$0xff] %vm172, %v5058
      %5095 = vst.msk [vmem:[%s170 + $0x58] sm:$0xff] %vm172, %v5059
      %5096 = vst.msk [vmem:[%s170 + $0x60] sm:$0xff] %vm172, %v5060
      %5097 = vst.msk [vmem:[%s170 + $0x68] sm:$0xff] %vm172, %v5061
      %5098 = vst.msk [vmem:[%s170 + $0x70] sm:$0xff] %vm172, %v5062
      %5099 = vst.msk [vmem:[%s170 + $0x78] sm:$0xff] %vm172, %v5063
      %5100 = vst.msk [vmem:[%s170 + $0x80] sm:$0xff] %vm172, %v5064
      %5101 = vst.msk [vmem:[%s170 + $0x88] sm:$0xff] %vm172, %v5065
      %5102 = vst.msk [vmem:[%s170 + $0x90] sm:$0xff] %vm172, %v5066
      %5103 = vst.msk [vmem:[%s170 + $0x98] sm:$0xff] %vm172, %v5067
      %5104 = vst.msk [vmem:[%s170 + $0xa0] sm:$0xff] %vm172, %v5068
      %5105 = vst.msk [vmem:[%s170 + $0xa8] sm:$0xff] %vm172, %v5069
      %5106 = vst.msk [vmem:[%s170 + $0xb0] sm:$0xff] %vm172, %v5070
      %5107 = vst.msk [vmem:[%s170 + $0xb8] sm:$0xff] %vm172, %v5071
      %5108 = vst.msk [vmem:[%s170 + $0xc0] sm:$0xff] %vm172, %v5072
      %5109 = vst.msk [vmem:[%s170 + $0xc8] sm:$0xff] %vm172, %v5073
      %5110 = vst.msk [vmem:[%s170 + $0xd0] sm:$0xff] %vm172, %v5074
      %5111 = vst.msk [vmem:[%s170 + $0xd8] sm:$0xff] %vm172, %v5075
      %5112 = vst.msk [vmem:[%s170 + $0xe0] sm:$0xff] %vm172, %v5076
      %5113 = vst.msk [vmem:[%s170 + $0xe8] sm:$0xff] %vm172, %v5077
      %5114 = vst.msk [vmem:[%s170 + $0xf0] sm:$0xff] %vm172, %v5078
      %5115 = vst.msk [vmem:[%s170 + $0xf8] sm:$0xff] %vm172, %v5079
      %5116 = vst.msk [vmem:[%s170 + $0x100] sm:$0xff] %vm172, %v5080
      %5117 = vst.msk [vmem:[%s170 + $0x108] sm:$0xff] %vm172, %v5081
      %5118 = vst.msk [vmem:[%s170 + $0x110] sm:$0xff] %vm172, %v5082
      %5119 = vst.msk [vmem:[%s170 + $0x118] sm:$0xff] %vm172, %v5083
      %p5120 = scmp.lt.s32.totalorder %s14, 1
      %s5121 = scalar_select %p5120, %s14, 1
      %s5122 = smul.addr %s5121, 36
      %s5123 = smul.addr %s5122, 8
      %s5124 = scalar_lea.vmem %s3, %s5123
      // Predicated region
      $region33: #{conv_block_forward.1} parent=31 // pred_check
        %p5125 = pneg %p100
      $region34: #{conv_block_forward.1} parent=31 // pred_check_branch
        %5127 = sbr.rel (%p5125) target = $region36
      $region35: #{conv_block_forward.1} parent=31 // pred_region
        _
      $region36: #{conv_block_forward.1} parent=31 // pred_fallthru
        _
    $region32: #{conv_block_forward.1} parent=5 // pred_fallthru
      _
    %p5128 = scmp.le.s32.totalorder 2, %s9
    // Predicated region
    $region37: #{conv_block_forward.1} parent=5 // pred_check
      %p5129 = pneg %p5128
    $region38: #{conv_block_forward.1} parent=5 // pred_check_branch
      %5131 = sbr.rel (%p5129) target = $region40
    $region39: #{conv_block_forward.1} parent=5 // pred_region
      %s5132 = ssub.s32 %s9, 2
      // Predicated region
      $region41: #{conv_block_forward.1} parent=39 // pred_check
        %p5133 = pneg %p106
      $region42: #{conv_block_forward.1} parent=39 // pred_check_branch
        %5135 = sbr.rel (%p5133) target = $region44
      $region43: #{conv_block_forward.1} parent=39 // pred_region
        %p5136 = scmp.lt.s32.totalorder %s15, 1
        %s5137 = scalar_select %p5136, %s15, 1
        %s5138 = smul.addr %s5137, 36
        %s5139 = smul.addr %s5138, 8
        %s5140 = scalar_lea.vmem %s3, %s5139
      $region44: #{conv_block_forward.1} parent=39 // pred_fallthru
        _
    $region40: #{conv_block_forward.1} parent=5 // pred_fallthru
      _
  $region6: #{conv_block_forward.1} parent=0 // loop_footer
    %s13 = sadd.s32 1, %s9
  $region7: #{conv_block_forward.1} parent=0 // loop_footer_branch
    %8 = sbr.rel target = $region3
  $region8: #{conv_block_forward.1} parent=0 // loop_exit
    _

</llo_original>
